<compile_context>
chip_gen: v7x
topology: tpu7x:2x2x1
jax: 0.10.0
libtpu: 0.0.40
codegen_flags: <defaults>
</compile_context>

<pallas_src>
import math
import jax
import jax.numpy as jnp
from jax.experimental import pallas as pl
from jax.experimental.pallas import tpu as pltpu

# ---- model config (small, consistent with the module's forward) ----
D_MODEL = 128
N_HEADS = 4
D_HEAD = D_MODEL // N_HEADS          # 32
FF_MULT = 2
FF_DIM = D_MODEL * FF_MULT           # 256
N_LAYERS = 2
VOCAB = 128                          # lane-dense LM head
BATCH = 2
SEQ = 16
LN_EPS = 1e-5                        # nn.LayerNorm default
NEG_INF = -1e30


def _layer_norm(x, g, b):
    # x: (S, D) f32, g/b: (1, D) f32
    mu = jnp.mean(x, axis=-1, keepdims=True)
    var = jnp.mean((x - mu) ** 2, axis=-1, keepdims=True)
    return (x - mu) * jax.lax.rsqrt(var + LN_EPS) * g + b


def fused_transformer_kernel(
        x_ref,       # (S, D)        f32   activations for this batch element
        bias_ref,    # (S, S)        f32   additive causal mask
        rope_ref,    # (2, S, D)     f32   [cos dup, sign-folded sin], tiled over heads
        lnp_ref,     # (L, 4, D)     f32   ln1_w, ln1_b, ln2_w, ln2_b
        oln_ref,     # (2, D)        f32   final LN w, b
        wqkv_ref,    # (L, D, 5D)    bf16  [Wq*s | Wq_swap*s | Wk | Wk_swap | Wv]
        wo_ref,      # (L, D, D)     bf16
        wgu_ref,     # (L, D, 2F)    bf16  [Wg | Wu]
        wd_ref,      # (L, F, D)     bf16
        wlm_ref,     # (D, VOCAB)    bf16
        out_ref,     # (S, VOCAB)    f32
        att_scratch):  # VMEM (S, D) bf16
    D = D_MODEL
    x = x_ref[...]                       # (S, D) f32 residual stream
    bias = bias_ref[...]                 # (S, S)
    cosw = rope_ref[0]                   # (S, D)
    sinw = rope_ref[1]                   # (S, D)

    for l in range(N_LAYERS):            # static unroll over layers
        lnp = lnp_ref[l]                 # (4, D)

        # ---------------- attention sub-block ----------------
        xn = _layer_norm(x, lnp[0:1], lnp[1:2])
        xn_bf = xn.astype(jnp.bfloat16)

        # one lane-dense (S,128)x(128,640) matmul for q/q_swapped/k/k_swapped/v
        qkv = jnp.dot(xn_bf, wqkv_ref[l], preferred_element_type=jnp.float32)
        # RoPE (half-rotation) applied full-width; 1/sqrt(Dh) already folded in.
        q = qkv[:, 0 * D:1 * D] * cosw + qkv[:, 1 * D:2 * D] * sinw
        k = qkv[:, 2 * D:3 * D] * cosw + qkv[:, 3 * D:4 * D] * sinw
        v = qkv[:, 4 * D:5 * D]

        for h in range(N_HEADS):         # per-head softmax attention (tiny matmuls)
            sl = slice(h * D_HEAD, (h + 1) * D_HEAD)
            qh, kh, vh = q[:, sl], k[:, sl], v[:, sl]
            # contract both on the last dim: no explicit k.T / XLU transpose
            s = jax.lax.dot_general(qh, kh, (((1,), (1,)), ((), ())),
                                    preferred_element_type=jnp.float32) + bias
            m = jnp.max(s, axis=-1, keepdims=True)
            p = jnp.exp(s - m)
            p = p * pl.reciprocal(jnp.sum(p, axis=-1, keepdims=True), approx=True)
            pv = jnp.dot(p, vh, preferred_element_type=jnp.float32)     # (S, Dh)
            att_scratch[:, sl] = pv.astype(jnp.bfloat16)

        # single full-width output projection against un-split Wo
        att = jnp.dot(att_scratch[...], wo_ref[l],
                      preferred_element_type=jnp.float32)               # (S, D)
        x = x + att                                  # dropout = identity (eval)

        # ---------------- SwiGLU feed-forward sub-block ----------------
        xn2 = _layer_norm(x, lnp[2:3], lnp[3:4])
        xn2_bf = xn2.astype(jnp.bfloat16)
        gu = jnp.dot(xn2_bf, wgu_ref[l], preferred_element_type=jnp.float32)  # (S, 2F)
        gate, up = gu[:, :FF_DIM], gu[:, FF_DIM:]
        hidden = (gate * jax.nn.sigmoid(gate)) * up                     # silu(gate)*up
        ff = jnp.dot(hidden.astype(jnp.bfloat16), wd_ref[l],
                     preferred_element_type=jnp.float32)
        x = x + ff

    # ---------------- final LayerNorm + LM head ----------------
    oln = oln_ref[...]
    xf = _layer_norm(x, oln[0:1], oln[1:2])
    out_ref[...] = jnp.dot(xf.astype(jnp.bfloat16), wlm_ref[...],
                           preferred_element_type=jnp.float32)          # (S, VOCAB)


def _full_spec(a):
    nd = a.ndim
    return pl.BlockSpec(a.shape, lambda b, _nd=nd: (0,) * _nd)


def fused_forward(x2d, kp, batch, seq_len):
    inputs = [x2d, kp["bias"], kp["rope"], kp["lnp"], kp["oln"],
              kp["wqkv"], kp["wo"], kp["wgu"], kp["wd"], kp["wlm"]]
    in_specs = ([pl.BlockSpec((seq_len, D_MODEL), lambda b: (b, 0))]
                + [_full_spec(a) for a in inputs[1:]])
    return pl.pallas_call(
        fused_transformer_kernel,
        out_shape=jax.ShapeDtypeStruct((batch * seq_len, VOCAB), jnp.float32),
        grid=(batch,),
        in_specs=in_specs,
        out_specs=pl.BlockSpec((seq_len, VOCAB), lambda b: (b, 0)),
        scratch_shapes=[pltpu.VMEM((seq_len, D_MODEL), jnp.bfloat16)],
        compiler_params=pltpu.CompilerParams(
            dimension_semantics=("parallel",)),       # v7x: one batch per TC
    )(*inputs)


# ---------------- wrapper-side (plain JAX) preprocessing, done ONCE ----------------

def prepare_kernel_params(params, seq_len):
    scale = 1.0 / math.sqrt(D_HEAD)
    half = D_HEAD // 2

    # RoPE tables: matches torch precompute_freqs_cis / apply_rotary_emb
    # (half-split rotation).  cos duplicated over halves, sin sign-folded,
    # tiled across the 4 heads to full D_MODEL lane width.
    freqs = 1.0 / (500000.0 ** (jnp.arange(0, D_HEAD, 2)[:half]
                                .astype(jnp.float32) / D_HEAD))
    ang = jnp.outer(jnp.arange(seq_len, dtype=jnp.float32), freqs)      # (S, Dh/2)
    cos = jnp.concatenate([jnp.cos(ang), jnp.cos(ang)], axis=-1)        # (S, Dh)
    sin = jnp.concatenate([-jnp.sin(ang), jnp.sin(ang)], axis=-1)       # (S, Dh)
    rope = jnp.stack([jnp.tile(cos, (1, N_HEADS)),
                      jnp.tile(sin, (1, N_HEADS))]).astype(jnp.float32)  # (2, S, D)

    # per-batch additive causal mask (S, S)
    r = jnp.arange(seq_len)
    bias = jnp.where(r[:, None] >= r[None, :], 0.0, NEG_INF).astype(jnp.float32)

    def swap_head_halves(w):
        # (D, D): within each head's 32-column block, swap the two 16-col halves
        w4 = w.reshape(D_MODEL, N_HEADS, 2, half)
        return w4[:, :, ::-1, :].reshape(D_MODEL, D_MODEL)

    wqkv, wo, wgu, wd, lnp = [], [], [], [], []
    for lp in params["layers"]:
        wq = lp["wq"] * scale                         # fold 1/sqrt(Dh) into Wq
        wk = lp["wk"]
        wqkv.append(jnp.concatenate(
            [wq, swap_head_halves(wq), wk, swap_head_halves(wk), lp["wv"]], axis=1))
        wo.append(lp["wo"])
        wgu.append(jnp.concatenate([lp["wg"], lp["wu"]], axis=1))
        wd.append(lp["wd"])
        lnp.append(jnp.stack([lp["ln1_w"], lp["ln1_b"], lp["ln2_w"], lp["ln2_b"]]))

    st = lambda xs, dt: jnp.stack(xs).astype(dt)
    return {
        "rope": rope, "bias": bias,
        "lnp": st(lnp, jnp.float32),                                      # (L, 4, D)
        "oln": jnp.stack([params["out_ln_w"],
                          params["out_ln_b"]]).astype(jnp.float32),       # (2, D)
        "wqkv": st(wqkv, jnp.bfloat16),                                   # (L, D, 5D)
        "wo": st(wo, jnp.bfloat16),                                       # (L, D, D)
        "wgu": st(wgu, jnp.bfloat16),                                     # (L, D, 2F)
        "wd": st(wd, jnp.bfloat16),                                       # (L, F, D)
        "wlm": params["lm_head"].astype(jnp.bfloat16),                    # (D, VOCAB)
    }


def build_forward(params, batch, seq_len):
    """Precompute kernel params once, return a jitted forward(src, emb=None)."""
    kp = prepare_kernel_params(params, seq_len)
    tok_emb = params["tok_emb"]

    def _forward(src, emb=None):
        hidden = tok_emb[src]                                  # (B, S, D) plain-JAX gather
        if emb is not None:
            hidden = jnp.concatenate([emb[:, None, :], hidden[:, :-1, :]], axis=1)
        x2d = hidden.reshape(batch * seq_len, D_MODEL).astype(jnp.float32)
        logits = fused_forward(x2d, kp, batch, seq_len)        # (B*S, VOCAB)
        return logits.reshape(batch, seq_len, VOCAB)

    return jax.jit(_forward)


def init_params(key):
    keys = jax.random.split(key, 2 + N_LAYERS)
    scale = 0.02
    params = {
        "tok_emb": jax.random.normal(keys[0], (VOCAB, D_MODEL), jnp.float32),
        "lm_head": scale * jax.random.normal(keys[1], (D_MODEL, VOCAB), jnp.float32),
        "out_ln_w": jnp.ones((D_MODEL,), jnp.float32),
        "out_ln_b": jnp.zeros((D_MODEL,), jnp.float32),
        "layers": [],
    }
    for li in range(N_LAYERS):
        k = jax.random.split(keys[2 + li], 7)
        params["layers"].append({
            "ln1_w": jnp.ones((D_MODEL,), jnp.float32),
            "ln1_b": jnp.zeros((D_MODEL,), jnp.float32),
            "ln2_w": jnp.ones((D_MODEL,), jnp.float32),
            "ln2_b": jnp.zeros((D_MODEL,), jnp.float32),
            # (in, out) layout, equivalent to torch's x @ W.T
            "wq": scale * jax.random.normal(k[0], (D_MODEL, D_MODEL), jnp.float32),
            "wk": scale * jax.random.normal(k[1], (D_MODEL, D_MODEL), jnp.float32),
            "wv": scale * jax.random.normal(k[2], (D_MODEL, D_MODEL), jnp.float32),
            "wo": scale * jax.random.normal(k[3], (D_MODEL, D_MODEL), jnp.float32),
            "wg": scale * jax.random.normal(k[4], (D_MODEL, FF_DIM), jnp.float32),
            "wu": scale * jax.random.normal(k[5], (D_MODEL, FF_DIM), jnp.float32),
            "wd": scale * jax.random.normal(k[6], (FF_DIM, D_MODEL), jnp.float32),
        })
    return params


if __name__ == "__main__":
    key = jax.random.PRNGKey(0)
    kparam, kseq = jax.random.split(key)
    params = init_params(kparam)
    forward = build_forward(params, BATCH, SEQ)
    src = jax.random.randint(kseq, (BATCH, SEQ), 0, VOCAB, dtype=jnp.int32)
    out = forward(src)
    out = jax.block_until_ready(out)
    assert out.shape == (BATCH, SEQ, VOCAB) and out.dtype == jnp.float32
    assert bool(jnp.all(jnp.isfinite(out)))
    print("KERNEL_OK")
</pallas_src>

<mosaic_0001>
module attributes {stable_mosaic.version = 11 : i64} {
  func.func @fused_transformer_kernel(%arg0: i32, %arg1: memref<16x128xf32, #tpu.memory_space<vmem>>, %arg2: memref<16x16xf32, #tpu.memory_space<vmem>>, %arg3: memref<2x16x128xf32, #tpu.memory_space<vmem>>, %arg4: memref<2x4x128xf32, #tpu.memory_space<vmem>>, %arg5: memref<2x128xf32, #tpu.memory_space<vmem>>, %arg6: memref<2x128x640xbf16, #tpu.memory_space<vmem>>, %arg7: memref<2x128x128xbf16, #tpu.memory_space<vmem>>, %arg8: memref<2x128x512xbf16, #tpu.memory_space<vmem>>, %arg9: memref<2x256x128xbf16, #tpu.memory_space<vmem>>, %arg10: memref<128x128xbf16, #tpu.memory_space<vmem>>, %arg11: memref<16x128xf32, #tpu.memory_space<vmem>>, %arg12: memref<16x128xbf16, #tpu.memory_space<vmem>>) attributes {dimension_semantics = [#tpu.dimension_semantics<parallel>], iteration_bounds = array<i64: 2>, scalar_prefetch = 0 : i64, scratch_operands = 1 : i64, tpu.core_type = #tpu.core_type<tc>, window_params = [{transform_indices = @transform_0, window_bounds = array<i64: 16, 128>}, {pipeline_mode = #tpu.pipeline_mode<synchronous>, transform_indices = @transform_1, window_bounds = array<i64: 16, 16>}, {pipeline_mode = #tpu.pipeline_mode<synchronous>, transform_indices = @transform_2, window_bounds = array<i64: 2, 16, 128>}, {pipeline_mode = #tpu.pipeline_mode<synchronous>, transform_indices = @transform_3, window_bounds = array<i64: 2, 4, 128>}, {pipeline_mode = #tpu.pipeline_mode<synchronous>, transform_indices = @transform_4, window_bounds = array<i64: 2, 128>}, {pipeline_mode = #tpu.pipeline_mode<synchronous>, transform_indices = @transform_5, window_bounds = array<i64: 2, 128, 640>}, {pipeline_mode = #tpu.pipeline_mode<synchronous>, transform_indices = @transform_6, window_bounds = array<i64: 2, 128, 128>}, {pipeline_mode = #tpu.pipeline_mode<synchronous>, transform_indices = @transform_7, window_bounds = array<i64: 2, 128, 512>}, {pipeline_mode = #tpu.pipeline_mode<synchronous>, transform_indices = @transform_8, window_bounds = array<i64: 2, 256, 128>}, {pipeline_mode = #tpu.pipeline_mode<synchronous>, transform_indices = @transform_9, window_bounds = array<i64: 128, 128>}, {transform_indices = @transform_10, window_bounds = array<i64: 16, 128>}]} {
    %c0 = arith.constant 0 : index
    %c0_0 = arith.constant 0 : index
    %0 = vector.load %arg1[%c0, %c0_0] : memref<16x128xf32, #tpu.memory_space<vmem>>, vector<16x128xf32>
    %c0_1 = arith.constant 0 : index
    %c0_2 = arith.constant 0 : index
    %1 = vector.load %arg2[%c0_1, %c0_2] : memref<16x16xf32, #tpu.memory_space<vmem>>, vector<16x16xf32>
    %c0_3 = arith.constant 0 : index
    %c0_4 = arith.constant 0 : index
    %c0_5 = arith.constant 0 : index
    %2 = vector.load %arg3[%c0_3, %c0_4, %c0_5] : memref<2x16x128xf32, #tpu.memory_space<vmem>>, vector<1x16x128xf32>
    %3 = vector.shape_cast %2 : vector<1x16x128xf32> to vector<16x128xf32>
    %c1 = arith.constant 1 : index
    %c0_6 = arith.constant 0 : index
    %c0_7 = arith.constant 0 : index
    %4 = vector.load %arg3[%c1, %c0_6, %c0_7] : memref<2x16x128xf32, #tpu.memory_space<vmem>>, vector<1x16x128xf32>
    %5 = vector.shape_cast %4 : vector<1x16x128xf32> to vector<16x128xf32>
    %c0_8 = arith.constant 0 : index
    %c0_9 = arith.constant 0 : index
    %c0_10 = arith.constant 0 : index
    %6 = vector.load %arg4[%c0_8, %c0_9, %c0_10] : memref<2x4x128xf32, #tpu.memory_space<vmem>>, vector<1x4x128xf32>
    %7 = vector.shape_cast %6 : vector<1x4x128xf32> to vector<4x128xf32>
    %8 = vector.extract_strided_slice %7 {offsets = [0, 0], sizes = [1, 128], strides = [1, 1]} : vector<4x128xf32> to vector<1x128xf32>
    %9 = vector.extract_strided_slice %7 {offsets = [1, 0], sizes = [1, 128], strides = [1, 1]} : vector<4x128xf32> to vector<1x128xf32>
    %cst = arith.constant dense<0.000000e+00> : vector<16xf32>
    %10 = vector.multi_reduction <add>, %0, %cst [1] : vector<16x128xf32> to vector<16xf32>
    %11 = vector.shape_cast %10 : vector<16xf32> to vector<16x1xf32>
    %cst_11 = arith.constant 1.280000e+02 : f32
    %12 = vector.broadcast %cst_11 : f32 to vector<16x1xf32>
    %13 = arith.divf %11, %12 : vector<16x1xf32>
    %14 = vector.broadcast %13 : vector<16x1xf32> to vector<16x128xf32>
    %15 = arith.subf %0, %14 : vector<16x128xf32>
    %16 = arith.mulf %15, %15 : vector<16x128xf32>
    %cst_12 = arith.constant dense<0.000000e+00> : vector<16xf32>
    %17 = vector.multi_reduction <add>, %16, %cst_12 [1] : vector<16x128xf32> to vector<16xf32>
    %18 = vector.shape_cast %17 : vector<16xf32> to vector<16x1xf32>
    %cst_13 = arith.constant 1.280000e+02 : f32
    %19 = vector.broadcast %cst_13 : f32 to vector<16x1xf32>
    %20 = arith.divf %18, %19 : vector<16x1xf32>
    %21 = vector.broadcast %13 : vector<16x1xf32> to vector<16x128xf32>
    %22 = arith.subf %0, %21 : vector<16x128xf32>
    %cst_14 = arith.constant 9.99999974E-6 : f32
    %23 = vector.broadcast %cst_14 : f32 to vector<16x1xf32>
    %24 = arith.addf %20, %23 : vector<16x1xf32>
    %25 = math.rsqrt %24 : vector<16x1xf32>
    %26 = vector.broadcast %25 : vector<16x1xf32> to vector<16x128xf32>
    %27 = arith.mulf %22, %26 : vector<16x128xf32>
    %28 = vector.broadcast %8 : vector<1x128xf32> to vector<16x128xf32>
    %29 = arith.mulf %27, %28 : vector<16x128xf32>
    %30 = vector.broadcast %9 : vector<1x128xf32> to vector<16x128xf32>
    %31 = arith.addf %29, %30 : vector<16x128xf32>
    %32 = arith.truncf %31 : vector<16x128xf32> to vector<16x128xbf16>
    %c0_15 = arith.constant 0 : index
    %c0_16 = arith.constant 0 : index
    %c0_17 = arith.constant 0 : index
    %33 = vector.load %arg6[%c0_15, %c0_16, %c0_17] : memref<2x128x640xbf16, #tpu.memory_space<vmem>>, vector<1x128x640xbf16>
    %34 = vector.shape_cast %33 : vector<1x128x640xbf16> to vector<128x640xbf16>
    %cst_18 = arith.constant dense<0.000000e+00> : vector<16x640xf32>
    %35 = tpu.matmul %32, %34, %cst_18 {dimension_numbers = #tpu.dot_dimension_numbers<[1], [0], [0], [1], [0, 0, 1, 1], [], []>} : vector<16x128xbf16>, vector<128x640xbf16>, vector<16x640xf32> -> vector<16x640xf32>
    %36 = vector.extract_strided_slice %35 {offsets = [0, 0], sizes = [16, 128], strides = [1, 1]} : vector<16x640xf32> to vector<16x128xf32>
    %37 = arith.mulf %36, %3 : vector<16x128xf32>
    %38 = vector.extract_strided_slice %35 {offsets = [0, 128], sizes = [16, 128], strides = [1, 1]} : vector<16x640xf32> to vector<16x128xf32>
    %39 = arith.mulf %38, %5 : vector<16x128xf32>
    %40 = arith.addf %37, %39 : vector<16x128xf32>
    %41 = vector.extract_strided_slice %35 {offsets = [0, 256], sizes = [16, 128], strides = [1, 1]} : vector<16x640xf32> to vector<16x128xf32>
    %42 = arith.mulf %41, %3 : vector<16x128xf32>
    %43 = vector.extract_strided_slice %35 {offsets = [0, 384], sizes = [16, 128], strides = [1, 1]} : vector<16x640xf32> to vector<16x128xf32>
    %44 = arith.mulf %43, %5 : vector<16x128xf32>
    %45 = arith.addf %42, %44 : vector<16x128xf32>
    %46 = vector.extract_strided_slice %35 {offsets = [0, 512], sizes = [16, 128], strides = [1, 1]} : vector<16x640xf32> to vector<16x128xf32>
    %47 = vector.extract_strided_slice %40 {offsets = [0, 0], sizes = [16, 32], strides = [1, 1]} : vector<16x128xf32> to vector<16x32xf32>
    %48 = vector.extract_strided_slice %45 {offsets = [0, 0], sizes = [16, 32], strides = [1, 1]} : vector<16x128xf32> to vector<16x32xf32>
    %49 = vector.extract_strided_slice %46 {offsets = [0, 0], sizes = [16, 32], strides = [1, 1]} : vector<16x128xf32> to vector<16x32xf32>
    %cst_19 = arith.constant dense<0.000000e+00> : vector<16x16xf32>
    %50 = tpu.matmul %47, %48, %cst_19 {dimension_numbers = #tpu.dot_dimension_numbers<[1], [1], [0], [0], [0, 0, 1, 0], [], []>} : vector<16x32xf32>, vector<16x32xf32>, vector<16x16xf32> -> vector<16x16xf32>
    %51 = arith.addf %50, %1 : vector<16x16xf32>
    %cst_20 = arith.constant dense<0xFF800000> : vector<16xf32>
    %52 = vector.multi_reduction <maximumf>, %51, %cst_20 [1] : vector<16x16xf32> to vector<16xf32>
    %53 = vector.shape_cast %52 : vector<16xf32> to vector<16x1xf32>
    %54 = vector.broadcast %53 : vector<16x1xf32> to vector<16x16xf32>
    %55 = arith.subf %51, %54 : vector<16x16xf32>
    %56 = math.exp %55 : vector<16x16xf32>
    %cst_21 = arith.constant dense<0.000000e+00> : vector<16xf32>
    %57 = vector.multi_reduction <add>, %56, %cst_21 [1] : vector<16x16xf32> to vector<16xf32>
    %58 = vector.shape_cast %57 : vector<16xf32> to vector<16x1xf32>
    %59 = tpu.reciprocal %58 {approx = true} : vector<16x1xf32> -> vector<16x1xf32>
    %60 = vector.broadcast %59 : vector<16x1xf32> to vector<16x16xf32>
    %61 = arith.mulf %56, %60 : vector<16x16xf32>
    %cst_22 = arith.constant dense<0.000000e+00> : vector<16x32xf32>
    %62 = tpu.matmul %61, %49, %cst_22 {dimension_numbers = #tpu.dot_dimension_numbers<[1], [0], [0], [1], [0, 0, 1, 1], [], []>} : vector<16x16xf32>, vector<16x32xf32>, vector<16x32xf32> -> vector<16x32xf32>
    %63 = arith.truncf %62 : vector<16x32xf32> to vector<16x32xbf16>
    %c0_23 = arith.constant 0 : index
    %c0_24 = arith.constant 0 : index
    %64 = vector.load %arg12[%c0_23, %c0_24] : memref<16x128xbf16, #tpu.memory_space<vmem>>, vector<16x32xbf16>
    tpu.vector_store %arg12[%c0_23, %c0_24], %63 {strides = array<i32>} : memref<16x128xbf16, #tpu.memory_space<vmem>>, vector<16x32xbf16>,
    %65 = vector.extract_strided_slice %40 {offsets = [0, 32], sizes = [16, 32], strides = [1, 1]} : vector<16x128xf32> to vector<16x32xf32>
    %66 = vector.extract_strided_slice %45 {offsets = [0, 32], sizes = [16, 32], strides = [1, 1]} : vector<16x128xf32> to vector<16x32xf32>
    %67 = vector.extract_strided_slice %46 {offsets = [0, 32], sizes = [16, 32], strides = [1, 1]} : vector<16x128xf32> to vector<16x32xf32>
    %cst_25 = arith.constant dense<0.000000e+00> : vector<16x16xf32>
    %68 = tpu.matmul %65, %66, %cst_25 {dimension_numbers = #tpu.dot_dimension_numbers<[1], [1], [0], [0], [0, 0, 1, 0], [], []>} : vector<16x32xf32>, vector<16x32xf32>, vector<16x16xf32> -> vector<16x16xf32>
    %69 = arith.addf %68, %1 : vector<16x16xf32>
    %cst_26 = arith.constant dense<0xFF800000> : vector<16xf32>
    %70 = vector.multi_reduction <maximumf>, %69, %cst_26 [1] : vector<16x16xf32> to vector<16xf32>
    %71 = vector.shape_cast %70 : vector<16xf32> to vector<16x1xf32>
    %72 = vector.broadcast %71 : vector<16x1xf32> to vector<16x16xf32>
    %73 = arith.subf %69, %72 : vector<16x16xf32>
    %74 = math.exp %73 : vector<16x16xf32>
    %cst_27 = arith.constant dense<0.000000e+00> : vector<16xf32>
    %75 = vector.multi_reduction <add>, %74, %cst_27 [1] : vector<16x16xf32> to vector<16xf32>
    %76 = vector.shape_cast %75 : vector<16xf32> to vector<16x1xf32>
    %77 = tpu.reciprocal %76 {approx = true} : vector<16x1xf32> -> vector<16x1xf32>
    %78 = vector.broadcast %77 : vector<16x1xf32> to vector<16x16xf32>
    %79 = arith.mulf %74, %78 : vector<16x16xf32>
    %cst_28 = arith.constant dense<0.000000e+00> : vector<16x32xf32>
    %80 = tpu.matmul %79, %67, %cst_28 {dimension_numbers = #tpu.dot_dimension_numbers<[1], [0], [0], [1], [0, 0, 1, 1], [], []>} : vector<16x16xf32>, vector<16x32xf32>, vector<16x32xf32> -> vector<16x32xf32>
    %81 = arith.truncf %80 : vector<16x32xf32> to vector<16x32xbf16>
    %c0_29 = arith.constant 0 : index
    %c32 = arith.constant 32 : index
    %82 = vector.load %arg12[%c0_29, %c32] : memref<16x128xbf16, #tpu.memory_space<vmem>>, vector<16x32xbf16>
    tpu.vector_store %arg12[%c0_29, %c32], %81 {strides = array<i32>} : memref<16x128xbf16, #tpu.memory_space<vmem>>, vector<16x32xbf16>,
    %83 = vector.extract_strided_slice %40 {offsets = [0, 64], sizes = [16, 32], strides = [1, 1]} : vector<16x128xf32> to vector<16x32xf32>
    %84 = vector.extract_strided_slice %45 {offsets = [0, 64], sizes = [16, 32], strides = [1, 1]} : vector<16x128xf32> to vector<16x32xf32>
    %85 = vector.extract_strided_slice %46 {offsets = [0, 64], sizes = [16, 32], strides = [1, 1]} : vector<16x128xf32> to vector<16x32xf32>
    %cst_30 = arith.constant dense<0.000000e+00> : vector<16x16xf32>
    %86 = tpu.matmul %83, %84, %cst_30 {dimension_numbers = #tpu.dot_dimension_numbers<[1], [1], [0], [0], [0, 0, 1, 0], [], []>} : vector<16x32xf32>, vector<16x32xf32>, vector<16x16xf32> -> vector<16x16xf32>
    %87 = arith.addf %86, %1 : vector<16x16xf32>
    %cst_31 = arith.constant dense<0xFF800000> : vector<16xf32>
    %88 = vector.multi_reduction <maximumf>, %87, %cst_31 [1] : vector<16x16xf32> to vector<16xf32>
    %89 = vector.shape_cast %88 : vector<16xf32> to vector<16x1xf32>
    %90 = vector.broadcast %89 : vector<16x1xf32> to vector<16x16xf32>
    %91 = arith.subf %87, %90 : vector<16x16xf32>
    %92 = math.exp %91 : vector<16x16xf32>
    %cst_32 = arith.constant dense<0.000000e+00> : vector<16xf32>
    %93 = vector.multi_reduction <add>, %92, %cst_32 [1] : vector<16x16xf32> to vector<16xf32>
    %94 = vector.shape_cast %93 : vector<16xf32> to vector<16x1xf32>
    %95 = tpu.reciprocal %94 {approx = true} : vector<16x1xf32> -> vector<16x1xf32>
    %96 = vector.broadcast %95 : vector<16x1xf32> to vector<16x16xf32>
    %97 = arith.mulf %92, %96 : vector<16x16xf32>
    %cst_33 = arith.constant dense<0.000000e+00> : vector<16x32xf32>
    %98 = tpu.matmul %97, %85, %cst_33 {dimension_numbers = #tpu.dot_dimension_numbers<[1], [0], [0], [1], [0, 0, 1, 1], [], []>} : vector<16x16xf32>, vector<16x32xf32>, vector<16x32xf32> -> vector<16x32xf32>
    %99 = arith.truncf %98 : vector<16x32xf32> to vector<16x32xbf16>
    %c0_34 = arith.constant 0 : index
    %c64 = arith.constant 64 : index
    %100 = vector.load %arg12[%c0_34, %c64] : memref<16x128xbf16, #tpu.memory_space<vmem>>, vector<16x32xbf16>
    tpu.vector_store %arg12[%c0_34, %c64], %99 {strides = array<i32>} : memref<16x128xbf16, #tpu.memory_space<vmem>>, vector<16x32xbf16>,
    %101 = vector.extract_strided_slice %40 {offsets = [0, 96], sizes = [16, 32], strides = [1, 1]} : vector<16x128xf32> to vector<16x32xf32>
    %102 = vector.extract_strided_slice %45 {offsets = [0, 96], sizes = [16, 32], strides = [1, 1]} : vector<16x128xf32> to vector<16x32xf32>
    %103 = vector.extract_strided_slice %46 {offsets = [0, 96], sizes = [16, 32], strides = [1, 1]} : vector<16x128xf32> to vector<16x32xf32>
    %cst_35 = arith.constant dense<0.000000e+00> : vector<16x16xf32>
    %104 = tpu.matmul %101, %102, %cst_35 {dimension_numbers = #tpu.dot_dimension_numbers<[1], [1], [0], [0], [0, 0, 1, 0], [], []>} : vector<16x32xf32>, vector<16x32xf32>, vector<16x16xf32> -> vector<16x16xf32>
    %105 = arith.addf %104, %1 : vector<16x16xf32>
    %cst_36 = arith.constant dense<0xFF800000> : vector<16xf32>
    %106 = vector.multi_reduction <maximumf>, %105, %cst_36 [1] : vector<16x16xf32> to vector<16xf32>
    %107 = vector.shape_cast %106 : vector<16xf32> to vector<16x1xf32>
    %108 = vector.broadcast %107 : vector<16x1xf32> to vector<16x16xf32>
    %109 = arith.subf %105, %108 : vector<16x16xf32>
    %110 = math.exp %109 : vector<16x16xf32>
    %cst_37 = arith.constant dense<0.000000e+00> : vector<16xf32>
    %111 = vector.multi_reduction <add>, %110, %cst_37 [1] : vector<16x16xf32> to vector<16xf32>
    %112 = vector.shape_cast %111 : vector<16xf32> to vector<16x1xf32>
    %113 = tpu.reciprocal %112 {approx = true} : vector<16x1xf32> -> vector<16x1xf32>
    %114 = vector.broadcast %113 : vector<16x1xf32> to vector<16x16xf32>
    %115 = arith.mulf %110, %114 : vector<16x16xf32>
    %cst_38 = arith.constant dense<0.000000e+00> : vector<16x32xf32>
    %116 = tpu.matmul %115, %103, %cst_38 {dimension_numbers = #tpu.dot_dimension_numbers<[1], [0], [0], [1], [0, 0, 1, 1], [], []>} : vector<16x16xf32>, vector<16x32xf32>, vector<16x32xf32> -> vector<16x32xf32>
    %117 = arith.truncf %116 : vector<16x32xf32> to vector<16x32xbf16>
    %c0_39 = arith.constant 0 : index
    %c96 = arith.constant 96 : index
    %118 = vector.load %arg12[%c0_39, %c96] : memref<16x128xbf16, #tpu.memory_space<vmem>>, vector<16x32xbf16>
    tpu.vector_store %arg12[%c0_39, %c96], %117 {strides = array<i32>} : memref<16x128xbf16, #tpu.memory_space<vmem>>, vector<16x32xbf16>,
    %c0_40 = arith.constant 0 : index
    %c0_41 = arith.constant 0 : index
    %119 = vector.load %arg12[%c0_40, %c0_41] : memref<16x128xbf16, #tpu.memory_space<vmem>>, vector<16x128xbf16>
    %c0_42 = arith.constant 0 : index
    %c0_43 = arith.constant 0 : index
    %c0_44 = arith.constant 0 : index
    %120 = vector.load %arg7[%c0_42, %c0_43, %c0_44] : memref<2x128x128xbf16, #tpu.memory_space<vmem>>, vector<1x128x128xbf16>
    %121 = vector.shape_cast %120 : vector<1x128x128xbf16> to vector<128x128xbf16>
    %cst_45 = arith.constant dense<0.000000e+00> : vector<16x128xf32>
    %122 = tpu.matmul %119, %121, %cst_45 {dimension_numbers = #tpu.dot_dimension_numbers<[1], [0], [0], [1], [0, 0, 1, 1], [], []>} : vector<16x128xbf16>, vector<128x128xbf16>, vector<16x128xf32> -> vector<16x128xf32>
    %123 = arith.addf %0, %122 : vector<16x128xf32>
    %124 = vector.extract_strided_slice %7 {offsets = [2, 0], sizes = [1, 128], strides = [1, 1]} : vector<4x128xf32> to vector<1x128xf32>
    %125 = vector.extract_strided_slice %7 {offsets = [3, 0], sizes = [1, 128], strides = [1, 1]} : vector<4x128xf32> to vector<1x128xf32>
    %cst_46 = arith.constant dense<0.000000e+00> : vector<16xf32>
    %126 = vector.multi_reduction <add>, %123, %cst_46 [1] : vector<16x128xf32> to vector<16xf32>
    %127 = vector.shape_cast %126 : vector<16xf32> to vector<16x1xf32>
    %cst_47 = arith.constant 1.280000e+02 : f32
    %128 = vector.broadcast %cst_47 : f32 to vector<16x1xf32>
    %129 = arith.divf %127, %128 : vector<16x1xf32>
    %130 = vector.broadcast %129 : vector<16x1xf32> to vector<16x128xf32>
    %131 = arith.subf %123, %130 : vector<16x128xf32>
    %132 = arith.mulf %131, %131 : vector<16x128xf32>
    %cst_48 = arith.constant dense<0.000000e+00> : vector<16xf32>
    %133 = vector.multi_reduction <add>, %132, %cst_48 [1] : vector<16x128xf32> to vector<16xf32>
    %134 = vector.shape_cast %133 : vector<16xf32> to vector<16x1xf32>
    %cst_49 = arith.constant 1.280000e+02 : f32
    %135 = vector.broadcast %cst_49 : f32 to vector<16x1xf32>
    %136 = arith.divf %134, %135 : vector<16x1xf32>
    %137 = vector.broadcast %129 : vector<16x1xf32> to vector<16x128xf32>
    %138 = arith.subf %123, %137 : vector<16x128xf32>
    %cst_50 = arith.constant 9.99999974E-6 : f32
    %139 = vector.broadcast %cst_50 : f32 to vector<16x1xf32>
    %140 = arith.addf %136, %139 : vector<16x1xf32>
    %141 = math.rsqrt %140 : vector<16x1xf32>
    %142 = vector.broadcast %141 : vector<16x1xf32> to vector<16x128xf32>
    %143 = arith.mulf %138, %142 : vector<16x128xf32>
    %144 = vector.broadcast %124 : vector<1x128xf32> to vector<16x128xf32>
    %145 = arith.mulf %143, %144 : vector<16x128xf32>
    %146 = vector.broadcast %125 : vector<1x128xf32> to vector<16x128xf32>
    %147 = arith.addf %145, %146 : vector<16x128xf32>
    %148 = arith.truncf %147 : vector<16x128xf32> to vector<16x128xbf16>
    %c0_51 = arith.constant 0 : index
    %c0_52 = arith.constant 0 : index
    %c0_53 = arith.constant 0 : index
    %149 = vector.load %arg8[%c0_51, %c0_52, %c0_53] : memref<2x128x512xbf16, #tpu.memory_space<vmem>>, vector<1x128x512xbf16>
    %150 = vector.shape_cast %149 : vector<1x128x512xbf16> to vector<128x512xbf16>
    %cst_54 = arith.constant dense<0.000000e+00> : vector<16x512xf32>
    %151 = tpu.matmul %148, %150, %cst_54 {dimension_numbers = #tpu.dot_dimension_numbers<[1], [0], [0], [1], [0, 0, 1, 1], [], []>} : vector<16x128xbf16>, vector<128x512xbf16>, vector<16x512xf32> -> vector<16x512xf32>
    %152 = vector.extract_strided_slice %151 {offsets = [0, 0], sizes = [16, 256], strides = [1, 1]} : vector<16x512xf32> to vector<16x256xf32>
    %153 = vector.extract_strided_slice %151 {offsets = [0, 256], sizes = [16, 256], strides = [1, 1]} : vector<16x512xf32> to vector<16x256xf32>
    %154 = arith.negf %152 : vector<16x256xf32>
    %155 = math.exp %154 : vector<16x256xf32>
    %cst_55 = arith.constant 1.000000e+00 : f32
    %156 = vector.broadcast %cst_55 : f32 to vector<16x256xf32>
    %157 = arith.addf %156, %155 : vector<16x256xf32>
    %158 = arith.divf %156, %157 : vector<16x256xf32>
    %159 = arith.mulf %152, %158 : vector<16x256xf32>
    %160 = arith.mulf %159, %153 : vector<16x256xf32>
    %161 = arith.truncf %160 : vector<16x256xf32> to vector<16x256xbf16>
    %c0_56 = arith.constant 0 : index
    %c0_57 = arith.constant 0 : index
    %c0_58 = arith.constant 0 : index
    %162 = vector.load %arg9[%c0_56, %c0_57, %c0_58] : memref<2x256x128xbf16, #tpu.memory_space<vmem>>, vector<1x256x128xbf16>
    %163 = vector.shape_cast %162 : vector<1x256x128xbf16> to vector<256x128xbf16>
    %cst_59 = arith.constant dense<0.000000e+00> : vector<16x128xf32>
    %164 = tpu.matmul %161, %163, %cst_59 {dimension_numbers = #tpu.dot_dimension_numbers<[1], [0], [0], [1], [0, 0, 1, 1], [], []>} : vector<16x256xbf16>, vector<256x128xbf16>, vector<16x128xf32> -> vector<16x128xf32>
    %165 = arith.addf %123, %164 : vector<16x128xf32>
    %c1_60 = arith.constant 1 : index
    %c0_61 = arith.constant 0 : index
    %c0_62 = arith.constant 0 : index
    %166 = vector.load %arg4[%c1_60, %c0_61, %c0_62] : memref<2x4x128xf32, #tpu.memory_space<vmem>>, vector<1x4x128xf32>
    %167 = vector.shape_cast %166 : vector<1x4x128xf32> to vector<4x128xf32>
    %168 = vector.extract_strided_slice %167 {offsets = [0, 0], sizes = [1, 128], strides = [1, 1]} : vector<4x128xf32> to vector<1x128xf32>
    %169 = vector.extract_strided_slice %167 {offsets = [1, 0], sizes = [1, 128], strides = [1, 1]} : vector<4x128xf32> to vector<1x128xf32>
    %cst_63 = arith.constant dense<0.000000e+00> : vector<16xf32>
    %170 = vector.multi_reduction <add>, %165, %cst_63 [1] : vector<16x128xf32> to vector<16xf32>
    %171 = vector.shape_cast %170 : vector<16xf32> to vector<16x1xf32>
    %cst_64 = arith.constant 1.280000e+02 : f32
    %172 = vector.broadcast %cst_64 : f32 to vector<16x1xf32>
    %173 = arith.divf %171, %172 : vector<16x1xf32>
    %174 = vector.broadcast %173 : vector<16x1xf32> to vector<16x128xf32>
    %175 = arith.subf %165, %174 : vector<16x128xf32>
    %176 = arith.mulf %175, %175 : vector<16x128xf32>
    %cst_65 = arith.constant dense<0.000000e+00> : vector<16xf32>
    %177 = vector.multi_reduction <add>, %176, %cst_65 [1] : vector<16x128xf32> to vector<16xf32>
    %178 = vector.shape_cast %177 : vector<16xf32> to vector<16x1xf32>
    %cst_66 = arith.constant 1.280000e+02 : f32
    %179 = vector.broadcast %cst_66 : f32 to vector<16x1xf32>
    %180 = arith.divf %178, %179 : vector<16x1xf32>
    %181 = vector.broadcast %173 : vector<16x1xf32> to vector<16x128xf32>
    %182 = arith.subf %165, %181 : vector<16x128xf32>
    %cst_67 = arith.constant 9.99999974E-6 : f32
    %183 = vector.broadcast %cst_67 : f32 to vector<16x1xf32>
    %184 = arith.addf %180, %183 : vector<16x1xf32>
    %185 = math.rsqrt %184 : vector<16x1xf32>
    %186 = vector.broadcast %185 : vector<16x1xf32> to vector<16x128xf32>
    %187 = arith.mulf %182, %186 : vector<16x128xf32>
    %188 = vector.broadcast %168 : vector<1x128xf32> to vector<16x128xf32>
    %189 = arith.mulf %187, %188 : vector<16x128xf32>
    %190 = vector.broadcast %169 : vector<1x128xf32> to vector<16x128xf32>
    %191 = arith.addf %189, %190 : vector<16x128xf32>
    %192 = arith.truncf %191 : vector<16x128xf32> to vector<16x128xbf16>
    %c1_68 = arith.constant 1 : index
    %c0_69 = arith.constant 0 : index
    %c0_70 = arith.constant 0 : index
    %193 = vector.load %arg6[%c1_68, %c0_69, %c0_70] : memref<2x128x640xbf16, #tpu.memory_space<vmem>>, vector<1x128x640xbf16>
    %194 = vector.shape_cast %193 : vector<1x128x640xbf16> to vector<128x640xbf16>
    %cst_71 = arith.constant dense<0.000000e+00> : vector<16x640xf32>
    %195 = tpu.matmul %192, %194, %cst_71 {dimension_numbers = #tpu.dot_dimension_numbers<[1], [0], [0], [1], [0, 0, 1, 1], [], []>} : vector<16x128xbf16>, vector<128x640xbf16>, vector<16x640xf32> -> vector<16x640xf32>
    %196 = vector.extract_strided_slice %195 {offsets = [0, 0], sizes = [16, 128], strides = [1, 1]} : vector<16x640xf32> to vector<16x128xf32>
    %197 = arith.mulf %196, %3 : vector<16x128xf32>
    %198 = vector.extract_strided_slice %195 {offsets = [0, 128], sizes = [16, 128], strides = [1, 1]} : vector<16x640xf32> to vector<16x128xf32>
    %199 = arith.mulf %198, %5 : vector<16x128xf32>
    %200 = arith.addf %197, %199 : vector<16x128xf32>
    %201 = vector.extract_strided_slice %195 {offsets = [0, 256], sizes = [16, 128], strides = [1, 1]} : vector<16x640xf32> to vector<16x128xf32>
    %202 = arith.mulf %201, %3 : vector<16x128xf32>
    %203 = vector.extract_strided_slice %195 {offsets = [0, 384], sizes = [16, 128], strides = [1, 1]} : vector<16x640xf32> to vector<16x128xf32>
    %204 = arith.mulf %203, %5 : vector<16x128xf32>
    %205 = arith.addf %202, %204 : vector<16x128xf32>
    %206 = vector.extract_strided_slice %195 {offsets = [0, 512], sizes = [16, 128], strides = [1, 1]} : vector<16x640xf32> to vector<16x128xf32>
    %207 = vector.extract_strided_slice %200 {offsets = [0, 0], sizes = [16, 32], strides = [1, 1]} : vector<16x128xf32> to vector<16x32xf32>
    %208 = vector.extract_strided_slice %205 {offsets = [0, 0], sizes = [16, 32], strides = [1, 1]} : vector<16x128xf32> to vector<16x32xf32>
    %209 = vector.extract_strided_slice %206 {offsets = [0, 0], sizes = [16, 32], strides = [1, 1]} : vector<16x128xf32> to vector<16x32xf32>
    %cst_72 = arith.constant dense<0.000000e+00> : vector<16x16xf32>
    %210 = tpu.matmul %207, %208, %cst_72 {dimension_numbers = #tpu.dot_dimension_numbers<[1], [1], [0], [0], [0, 0, 1, 0], [], []>} : vector<16x32xf32>, vector<16x32xf32>, vector<16x16xf32> -> vector<16x16xf32>
    %211 = arith.addf %210, %1 : vector<16x16xf32>
    %cst_73 = arith.constant dense<0xFF800000> : vector<16xf32>
    %212 = vector.multi_reduction <maximumf>, %211, %cst_73 [1] : vector<16x16xf32> to vector<16xf32>
    %213 = vector.shape_cast %212 : vector<16xf32> to vector<16x1xf32>
    %214 = vector.broadcast %213 : vector<16x1xf32> to vector<16x16xf32>
    %215 = arith.subf %211, %214 : vector<16x16xf32>
    %216 = math.exp %215 : vector<16x16xf32>
    %cst_74 = arith.constant dense<0.000000e+00> : vector<16xf32>
    %217 = vector.multi_reduction <add>, %216, %cst_74 [1] : vector<16x16xf32> to vector<16xf32>
    %218 = vector.shape_cast %217 : vector<16xf32> to vector<16x1xf32>
    %219 = tpu.reciprocal %218 {approx = true} : vector<16x1xf32> -> vector<16x1xf32>
    %220 = vector.broadcast %219 : vector<16x1xf32> to vector<16x16xf32>
    %221 = arith.mulf %216, %220 : vector<16x16xf32>
    %cst_75 = arith.constant dense<0.000000e+00> : vector<16x32xf32>
    %222 = tpu.matmul %221, %209, %cst_75 {dimension_numbers = #tpu.dot_dimension_numbers<[1], [0], [0], [1], [0, 0, 1, 1], [], []>} : vector<16x16xf32>, vector<16x32xf32>, vector<16x32xf32> -> vector<16x32xf32>
    %223 = arith.truncf %222 : vector<16x32xf32> to vector<16x32xbf16>
    %c0_76 = arith.constant 0 : index
    %c0_77 = arith.constant 0 : index
    %224 = vector.load %arg12[%c0_76, %c0_77] : memref<16x128xbf16, #tpu.memory_space<vmem>>, vector<16x32xbf16>
    tpu.vector_store %arg12[%c0_76, %c0_77], %223 {strides = array<i32>} : memref<16x128xbf16, #tpu.memory_space<vmem>>, vector<16x32xbf16>,
    %225 = vector.extract_strided_slice %200 {offsets = [0, 32], sizes = [16, 32], strides = [1, 1]} : vector<16x128xf32> to vector<16x32xf32>
    %226 = vector.extract_strided_slice %205 {offsets = [0, 32], sizes = [16, 32], strides = [1, 1]} : vector<16x128xf32> to vector<16x32xf32>
    %227 = vector.extract_strided_slice %206 {offsets = [0, 32], sizes = [16, 32], strides = [1, 1]} : vector<16x128xf32> to vector<16x32xf32>
    %cst_78 = arith.constant dense<0.000000e+00> : vector<16x16xf32>
    %228 = tpu.matmul %225, %226, %cst_78 {dimension_numbers = #tpu.dot_dimension_numbers<[1], [1], [0], [0], [0, 0, 1, 0], [], []>} : vector<16x32xf32>, vector<16x32xf32>, vector<16x16xf32> -> vector<16x16xf32>
    %229 = arith.addf %228, %1 : vector<16x16xf32>
    %cst_79 = arith.constant dense<0xFF800000> : vector<16xf32>
    %230 = vector.multi_reduction <maximumf>, %229, %cst_79 [1] : vector<16x16xf32> to vector<16xf32>
    %231 = vector.shape_cast %230 : vector<16xf32> to vector<16x1xf32>
    %232 = vector.broadcast %231 : vector<16x1xf32> to vector<16x16xf32>
    %233 = arith.subf %229, %232 : vector<16x16xf32>
    %234 = math.exp %233 : vector<16x16xf32>
    %cst_80 = arith.constant dense<0.000000e+00> : vector<16xf32>
    %235 = vector.multi_reduction <add>, %234, %cst_80 [1] : vector<16x16xf32> to vector<16xf32>
    %236 = vector.shape_cast %235 : vector<16xf32> to vector<16x1xf32>
    %237 = tpu.reciprocal %236 {approx = true} : vector<16x1xf32> -> vector<16x1xf32>
    %238 = vector.broadcast %237 : vector<16x1xf32> to vector<16x16xf32>
    %239 = arith.mulf %234, %238 : vector<16x16xf32>
    %cst_81 = arith.constant dense<0.000000e+00> : vector<16x32xf32>
    %240 = tpu.matmul %239, %227, %cst_81 {dimension_numbers = #tpu.dot_dimension_numbers<[1], [0], [0], [1], [0, 0, 1, 1], [], []>} : vector<16x16xf32>, vector<16x32xf32>, vector<16x32xf32> -> vector<16x32xf32>
    %241 = arith.truncf %240 : vector<16x32xf32> to vector<16x32xbf16>
    %c0_82 = arith.constant 0 : index
    %c32_83 = arith.constant 32 : index
    %242 = vector.load %arg12[%c0_82, %c32_83] : memref<16x128xbf16, #tpu.memory_space<vmem>>, vector<16x32xbf16>
    tpu.vector_store %arg12[%c0_82, %c32_83], %241 {strides = array<i32>} : memref<16x128xbf16, #tpu.memory_space<vmem>>, vector<16x32xbf16>,
    %243 = vector.extract_strided_slice %200 {offsets = [0, 64], sizes = [16, 32], strides = [1, 1]} : vector<16x128xf32> to vector<16x32xf32>
    %244 = vector.extract_strided_slice %205 {offsets = [0, 64], sizes = [16, 32], strides = [1, 1]} : vector<16x128xf32> to vector<16x32xf32>
    %245 = vector.extract_strided_slice %206 {offsets = [0, 64], sizes = [16, 32], strides = [1, 1]} : vector<16x128xf32> to vector<16x32xf32>
    %cst_84 = arith.constant dense<0.000000e+00> : vector<16x16xf32>
    %246 = tpu.matmul %243, %244, %cst_84 {dimension_numbers = #tpu.dot_dimension_numbers<[1], [1], [0], [0], [0, 0, 1, 0], [], []>} : vector<16x32xf32>, vector<16x32xf32>, vector<16x16xf32> -> vector<16x16xf32>
    %247 = arith.addf %246, %1 : vector<16x16xf32>
    %cst_85 = arith.constant dense<0xFF800000> : vector<16xf32>
    %248 = vector.multi_reduction <maximumf>, %247, %cst_85 [1] : vector<16x16xf32> to vector<16xf32>
    %249 = vector.shape_cast %248 : vector<16xf32> to vector<16x1xf32>
    %250 = vector.broadcast %249 : vector<16x1xf32> to vector<16x16xf32>
    %251 = arith.subf %247, %250 : vector<16x16xf32>
    %252 = math.exp %251 : vector<16x16xf32>
    %cst_86 = arith.constant dense<0.000000e+00> : vector<16xf32>
    %253 = vector.multi_reduction <add>, %252, %cst_86 [1] : vector<16x16xf32> to vector<16xf32>
    %254 = vector.shape_cast %253 : vector<16xf32> to vector<16x1xf32>
    %255 = tpu.reciprocal %254 {approx = true} : vector<16x1xf32> -> vector<16x1xf32>
    %256 = vector.broadcast %255 : vector<16x1xf32> to vector<16x16xf32>
    %257 = arith.mulf %252, %256 : vector<16x16xf32>
    %cst_87 = arith.constant dense<0.000000e+00> : vector<16x32xf32>
    %258 = tpu.matmul %257, %245, %cst_87 {dimension_numbers = #tpu.dot_dimension_numbers<[1], [0], [0], [1], [0, 0, 1, 1], [], []>} : vector<16x16xf32>, vector<16x32xf32>, vector<16x32xf32> -> vector<16x32xf32>
    %259 = arith.truncf %258 : vector<16x32xf32> to vector<16x32xbf16>
    %c0_88 = arith.constant 0 : index
    %c64_89 = arith.constant 64 : index
    %260 = vector.load %arg12[%c0_88, %c64_89] : memref<16x128xbf16, #tpu.memory_space<vmem>>, vector<16x32xbf16>
    tpu.vector_store %arg12[%c0_88, %c64_89], %259 {strides = array<i32>} : memref<16x128xbf16, #tpu.memory_space<vmem>>, vector<16x32xbf16>,
    %261 = vector.extract_strided_slice %200 {offsets = [0, 96], sizes = [16, 32], strides = [1, 1]} : vector<16x128xf32> to vector<16x32xf32>
    %262 = vector.extract_strided_slice %205 {offsets = [0, 96], sizes = [16, 32], strides = [1, 1]} : vector<16x128xf32> to vector<16x32xf32>
    %263 = vector.extract_strided_slice %206 {offsets = [0, 96], sizes = [16, 32], strides = [1, 1]} : vector<16x128xf32> to vector<16x32xf32>
    %cst_90 = arith.constant dense<0.000000e+00> : vector<16x16xf32>
    %264 = tpu.matmul %261, %262, %cst_90 {dimension_numbers = #tpu.dot_dimension_numbers<[1], [1], [0], [0], [0, 0, 1, 0], [], []>} : vector<16x32xf32>, vector<16x32xf32>, vector<16x16xf32> -> vector<16x16xf32>
    %265 = arith.addf %264, %1 : vector<16x16xf32>
    %cst_91 = arith.constant dense<0xFF800000> : vector<16xf32>
    %266 = vector.multi_reduction <maximumf>, %265, %cst_91 [1] : vector<16x16xf32> to vector<16xf32>
    %267 = vector.shape_cast %266 : vector<16xf32> to vector<16x1xf32>
    %268 = vector.broadcast %267 : vector<16x1xf32> to vector<16x16xf32>
    %269 = arith.subf %265, %268 : vector<16x16xf32>
    %270 = math.exp %269 : vector<16x16xf32>
    %cst_92 = arith.constant dense<0.000000e+00> : vector<16xf32>
    %271 = vector.multi_reduction <add>, %270, %cst_92 [1] : vector<16x16xf32> to vector<16xf32>
    %272 = vector.shape_cast %271 : vector<16xf32> to vector<16x1xf32>
    %273 = tpu.reciprocal %272 {approx = true} : vector<16x1xf32> -> vector<16x1xf32>
    %274 = vector.broadcast %273 : vector<16x1xf32> to vector<16x16xf32>
    %275 = arith.mulf %270, %274 : vector<16x16xf32>
    %cst_93 = arith.constant dense<0.000000e+00> : vector<16x32xf32>
    %276 = tpu.matmul %275, %263, %cst_93 {dimension_numbers = #tpu.dot_dimension_numbers<[1], [0], [0], [1], [0, 0, 1, 1], [], []>} : vector<16x16xf32>, vector<16x32xf32>, vector<16x32xf32> -> vector<16x32xf32>
    %277 = arith.truncf %276 : vector<16x32xf32> to vector<16x32xbf16>
    %c0_94 = arith.constant 0 : index
    %c96_95 = arith.constant 96 : index
    %278 = vector.load %arg12[%c0_94, %c96_95] : memref<16x128xbf16, #tpu.memory_space<vmem>>, vector<16x32xbf16>
    tpu.vector_store %arg12[%c0_94, %c96_95], %277 {strides = array<i32>} : memref<16x128xbf16, #tpu.memory_space<vmem>>, vector<16x32xbf16>,
    %c0_96 = arith.constant 0 : index
    %c0_97 = arith.constant 0 : index
    %279 = vector.load %arg12[%c0_96, %c0_97] : memref<16x128xbf16, #tpu.memory_space<vmem>>, vector<16x128xbf16>
    %c1_98 = arith.constant 1 : index
    %c0_99 = arith.constant 0 : index
    %c0_100 = arith.constant 0 : index
    %280 = vector.load %arg7[%c1_98, %c0_99, %c0_100] : memref<2x128x128xbf16, #tpu.memory_space<vmem>>, vector<1x128x128xbf16>
    %281 = vector.shape_cast %280 : vector<1x128x128xbf16> to vector<128x128xbf16>
    %cst_101 = arith.constant dense<0.000000e+00> : vector<16x128xf32>
    %282 = tpu.matmul %279, %281, %cst_101 {dimension_numbers = #tpu.dot_dimension_numbers<[1], [0], [0], [1], [0, 0, 1, 1], [], []>} : vector<16x128xbf16>, vector<128x128xbf16>, vector<16x128xf32> -> vector<16x128xf32>
    %283 = arith.addf %165, %282 : vector<16x128xf32>
    %284 = vector.extract_strided_slice %167 {offsets = [2, 0], sizes = [1, 128], strides = [1, 1]} : vector<4x128xf32> to vector<1x128xf32>
    %285 = vector.extract_strided_slice %167 {offsets = [3, 0], sizes = [1, 128], strides = [1, 1]} : vector<4x128xf32> to vector<1x128xf32>
    %cst_102 = arith.constant dense<0.000000e+00> : vector<16xf32>
    %286 = vector.multi_reduction <add>, %283, %cst_102 [1] : vector<16x128xf32> to vector<16xf32>
    %287 = vector.shape_cast %286 : vector<16xf32> to vector<16x1xf32>
    %cst_103 = arith.constant 1.280000e+02 : f32
    %288 = vector.broadcast %cst_103 : f32 to vector<16x1xf32>
    %289 = arith.divf %287, %288 : vector<16x1xf32>
    %290 = vector.broadcast %289 : vector<16x1xf32> to vector<16x128xf32>
    %291 = arith.subf %283, %290 : vector<16x128xf32>
    %292 = arith.mulf %291, %291 : vector<16x128xf32>
    %cst_104 = arith.constant dense<0.000000e+00> : vector<16xf32>
    %293 = vector.multi_reduction <add>, %292, %cst_104 [1] : vector<16x128xf32> to vector<16xf32>
    %294 = vector.shape_cast %293 : vector<16xf32> to vector<16x1xf32>
    %cst_105 = arith.constant 1.280000e+02 : f32
    %295 = vector.broadcast %cst_105 : f32 to vector<16x1xf32>
    %296 = arith.divf %294, %295 : vector<16x1xf32>
    %297 = vector.broadcast %289 : vector<16x1xf32> to vector<16x128xf32>
    %298 = arith.subf %283, %297 : vector<16x128xf32>
    %cst_106 = arith.constant 9.99999974E-6 : f32
    %299 = vector.broadcast %cst_106 : f32 to vector<16x1xf32>
    %300 = arith.addf %296, %299 : vector<16x1xf32>
    %301 = math.rsqrt %300 : vector<16x1xf32>
    %302 = vector.broadcast %301 : vector<16x1xf32> to vector<16x128xf32>
    %303 = arith.mulf %298, %302 : vector<16x128xf32>
    %304 = vector.broadcast %284 : vector<1x128xf32> to vector<16x128xf32>
    %305 = arith.mulf %303, %304 : vector<16x128xf32>
    %306 = vector.broadcast %285 : vector<1x128xf32> to vector<16x128xf32>
    %307 = arith.addf %305, %306 : vector<16x128xf32>
    %308 = arith.truncf %307 : vector<16x128xf32> to vector<16x128xbf16>
    %c1_107 = arith.constant 1 : index
    %c0_108 = arith.constant 0 : index
    %c0_109 = arith.constant 0 : index
    %309 = vector.load %arg8[%c1_107, %c0_108, %c0_109] : memref<2x128x512xbf16, #tpu.memory_space<vmem>>, vector<1x128x512xbf16>
    %310 = vector.shape_cast %309 : vector<1x128x512xbf16> to vector<128x512xbf16>
    %cst_110 = arith.constant dense<0.000000e+00> : vector<16x512xf32>
    %311 = tpu.matmul %308, %310, %cst_110 {dimension_numbers = #tpu.dot_dimension_numbers<[1], [0], [0], [1], [0, 0, 1, 1], [], []>} : vector<16x128xbf16>, vector<128x512xbf16>, vector<16x512xf32> -> vector<16x512xf32>
    %312 = vector.extract_strided_slice %311 {offsets = [0, 0], sizes = [16, 256], strides = [1, 1]} : vector<16x512xf32> to vector<16x256xf32>
    %313 = vector.extract_strided_slice %311 {offsets = [0, 256], sizes = [16, 256], strides = [1, 1]} : vector<16x512xf32> to vector<16x256xf32>
    %314 = arith.negf %312 : vector<16x256xf32>
    %315 = math.exp %314 : vector<16x256xf32>
    %cst_111 = arith.constant 1.000000e+00 : f32
    %316 = vector.broadcast %cst_111 : f32 to vector<16x256xf32>
    %317 = arith.addf %316, %315 : vector<16x256xf32>
    %318 = arith.divf %316, %317 : vector<16x256xf32>
    %319 = arith.mulf %312, %318 : vector<16x256xf32>
    %320 = arith.mulf %319, %313 : vector<16x256xf32>
    %321 = arith.truncf %320 : vector<16x256xf32> to vector<16x256xbf16>
    %c1_112 = arith.constant 1 : index
    %c0_113 = arith.constant 0 : index
    %c0_114 = arith.constant 0 : index
    %322 = vector.load %arg9[%c1_112, %c0_113, %c0_114] : memref<2x256x128xbf16, #tpu.memory_space<vmem>>, vector<1x256x128xbf16>
    %323 = vector.shape_cast %322 : vector<1x256x128xbf16> to vector<256x128xbf16>
    %cst_115 = arith.constant dense<0.000000e+00> : vector<16x128xf32>
    %324 = tpu.matmul %321, %323, %cst_115 {dimension_numbers = #tpu.dot_dimension_numbers<[1], [0], [0], [1], [0, 0, 1, 1], [], []>} : vector<16x256xbf16>, vector<256x128xbf16>, vector<16x128xf32> -> vector<16x128xf32>
    %325 = arith.addf %283, %324 : vector<16x128xf32>
    %c0_116 = arith.constant 0 : index
    %c0_117 = arith.constant 0 : index
    %326 = vector.load %arg5[%c0_116, %c0_117] : memref<2x128xf32, #tpu.memory_space<vmem>>, vector<2x128xf32>
    %327 = vector.extract_strided_slice %326 {offsets = [0, 0], sizes = [1, 128], strides = [1, 1]} : vector<2x128xf32> to vector<1x128xf32>
    %328 = vector.extract_strided_slice %326 {offsets = [1, 0], sizes = [1, 128], strides = [1, 1]} : vector<2x128xf32> to vector<1x128xf32>
    %cst_118 = arith.constant dense<0.000000e+00> : vector<16xf32>
    %329 = vector.multi_reduction <add>, %325, %cst_118 [1] : vector<16x128xf32> to vector<16xf32>
    %330 = vector.shape_cast %329 : vector<16xf32> to vector<16x1xf32>
    %cst_119 = arith.constant 1.280000e+02 : f32
    %331 = vector.broadcast %cst_119 : f32 to vector<16x1xf32>
    %332 = arith.divf %330, %331 : vector<16x1xf32>
    %333 = vector.broadcast %332 : vector<16x1xf32> to vector<16x128xf32>
    %334 = arith.subf %325, %333 : vector<16x128xf32>
    %335 = arith.mulf %334, %334 : vector<16x128xf32>
    %cst_120 = arith.constant dense<0.000000e+00> : vector<16xf32>
    %336 = vector.multi_reduction <add>, %335, %cst_120 [1] : vector<16x128xf32> to vector<16xf32>
    %337 = vector.shape_cast %336 : vector<16xf32> to vector<16x1xf32>
    %cst_121 = arith.constant 1.280000e+02 : f32
    %338 = vector.broadcast %cst_121 : f32 to vector<16x1xf32>
    %339 = arith.divf %337, %338 : vector<16x1xf32>
    %340 = vector.broadcast %332 : vector<16x1xf32> to vector<16x128xf32>
    %341 = arith.subf %325, %340 : vector<16x128xf32>
    %cst_122 = arith.constant 9.99999974E-6 : f32
    %342 = vector.broadcast %cst_122 : f32 to vector<16x1xf32>
    %343 = arith.addf %339, %342 : vector<16x1xf32>
    %344 = math.rsqrt %343 : vector<16x1xf32>
    %345 = vector.broadcast %344 : vector<16x1xf32> to vector<16x128xf32>
    %346 = arith.mulf %341, %345 : vector<16x128xf32>
    %347 = vector.broadcast %327 : vector<1x128xf32> to vector<16x128xf32>
    %348 = arith.mulf %346, %347 : vector<16x128xf32>
    %349 = vector.broadcast %328 : vector<1x128xf32> to vector<16x128xf32>
    %350 = arith.addf %348, %349 : vector<16x128xf32>
    %351 = arith.truncf %350 : vector<16x128xf32> to vector<16x128xbf16>
    %c0_123 = arith.constant 0 : index
    %c0_124 = arith.constant 0 : index
    %352 = vector.load %arg10[%c0_123, %c0_124] : memref<128x128xbf16, #tpu.memory_space<vmem>>, vector<128x128xbf16>
    %cst_125 = arith.constant dense<0.000000e+00> : vector<16x128xf32>
    %353 = tpu.matmul %351, %352, %cst_125 {dimension_numbers = #tpu.dot_dimension_numbers<[1], [0], [0], [1], [0, 0, 1, 1], [], []>} : vector<16x128xbf16>, vector<128x128xbf16>, vector<16x128xf32> -> vector<16x128xf32>
    %c0_126 = arith.constant 0 : index
    %c0_127 = arith.constant 0 : index
    %354 = vector.load %arg11[%c0_126, %c0_127] : memref<16x128xf32, #tpu.memory_space<vmem>>, vector<16x128xf32>
    tpu.vector_store %arg11[%c0_126, %c0_127], %353 {strides = array<i32>} : memref<16x128xf32, #tpu.memory_space<vmem>>, vector<16x128xf32>,
    return
  }
  func.func @transform_0(%arg0: i32) -> (i32, i32) {
    %c0_i32 = arith.constant 0 : i32
    %c0_i32_0 = arith.constant 0 : i32
    return %arg0, %c0_i32 : i32, i32
  }
  func.func @transform_1(%arg0: i32) -> (i32, i32) {
    %c0_i32 = arith.constant 0 : i32
    %c0_i32_0 = arith.constant 0 : i32
    %c0_i32_1 = arith.constant 0 : i32
    return %c0_i32, %c0_i32_0 : i32, i32
  }
  func.func @transform_2(%arg0: i32) -> (i32, i32, i32) {
    %c0_i32 = arith.constant 0 : i32
    %c0_i32_0 = arith.constant 0 : i32
    %c0_i32_1 = arith.constant 0 : i32
    %c0_i32_2 = arith.constant 0 : i32
    return %c0_i32, %c0_i32_0, %c0_i32_1 : i32, i32, i32
  }
  func.func @transform_3(%arg0: i32) -> (i32, i32, i32) {
    %c0_i32 = arith.constant 0 : i32
    %c0_i32_0 = arith.constant 0 : i32
    %c0_i32_1 = arith.constant 0 : i32
    %c0_i32_2 = arith.constant 0 : i32
    return %c0_i32, %c0_i32_0, %c0_i32_1 : i32, i32, i32
  }
  func.func @transform_4(%arg0: i32) -> (i32, i32) {
    %c0_i32 = arith.constant 0 : i32
    %c0_i32_0 = arith.constant 0 : i32
    %c0_i32_1 = arith.constant 0 : i32
    return %c0_i32, %c0_i32_0 : i32, i32
  }
  func.func @transform_5(%arg0: i32) -> (i32, i32, i32) {
    %c0_i32 = arith.constant 0 : i32
    %c0_i32_0 = arith.constant 0 : i32
    %c0_i32_1 = arith.constant 0 : i32
    %c0_i32_2 = arith.constant 0 : i32
    return %c0_i32, %c0_i32_0, %c0_i32_1 : i32, i32, i32
  }
  func.func @transform_6(%arg0: i32) -> (i32, i32, i32) {
    %c0_i32 = arith.constant 0 : i32
    %c0_i32_0 = arith.constant 0 : i32
    %c0_i32_1 = arith.constant 0 : i32
    %c0_i32_2 = arith.constant 0 : i32
    return %c0_i32, %c0_i32_0, %c0_i32_1 : i32, i32, i32
  }
  func.func @transform_7(%arg0: i32) -> (i32, i32, i32) {
    %c0_i32 = arith.constant 0 : i32
    %c0_i32_0 = arith.constant 0 : i32
    %c0_i32_1 = arith.constant 0 : i32
    %c0_i32_2 = arith.constant 0 : i32
    return %c0_i32, %c0_i32_0, %c0_i32_1 : i32, i32, i32
  }
  func.func @transform_8(%arg0: i32) -> (i32, i32, i32) {
    %c0_i32 = arith.constant 0 : i32
    %c0_i32_0 = arith.constant 0 : i32
    %c0_i32_1 = arith.constant 0 : i32
    %c0_i32_2 = arith.constant 0 : i32
    return %c0_i32, %c0_i32_0, %c0_i32_1 : i32, i32, i32
  }
  func.func @transform_9(%arg0: i32) -> (i32, i32) {
    %c0_i32 = arith.constant 0 : i32
    %c0_i32_0 = arith.constant 0 : i32
    %c0_i32_1 = arith.constant 0 : i32
    return %c0_i32, %c0_i32_0 : i32, i32
  }
  func.func @transform_10(%arg0: i32) -> (i32, i32) {
    %c0_i32 = arith.constant 0 : i32
    %c0_i32_0 = arith.constant 0 : i32
    return %arg0, %c0_i32 : i32, i32
  }
}

</mosaic_0001>

<llo_original>
// kernel: _forward.1
$region0: #{_forward.1}
  #allocation0 [shape = 'u32[]', space=smem, size = 0x4, offset = 0x4, fixed_abs, tag = 'smem constant byte address 0x4 - core index']
  #allocation1 [shape = 'u32[144,128]{1,0:T(1,128)}', space=vmem, size = 0x12000, scoped, tag = 'internal scratch']
  #allocation2 [shape = 'bf16[16,128]{1,0:T(16,128)(2,1)}', space=vmem, size = 0x1000, scoped, tag = 'scratch operand']
  %s0 = inlined_call_operand.vmem [shape: f32[32,128], index: 0, kind: input, shape index: {}]
  %s1 = inlined_call_operand.vmem [shape: f32[16,16], index: 1, kind: input, shape index: {}]
  %s2 = inlined_call_operand.vmem [shape: f32[2,16,128], index: 2, kind: input, shape index: {}]
  %s3 = inlined_call_operand.vmem [shape: f32[2,4,128], index: 3, kind: input, shape index: {}]
  %s4 = inlined_call_operand.vmem [shape: f32[2,128], index: 4, kind: input, shape index: {}]
  %s5 = inlined_call_operand.vmem [shape: bf16[2,128,640], index: 5, kind: input, shape index: {}]
  %s6 = inlined_call_operand.vmem [shape: bf16[2,128,128], index: 6, kind: input, shape index: {}]
  %s7 = inlined_call_operand.vmem [shape: bf16[2,128,512], index: 7, kind: input, shape index: {}]
  %s8 = inlined_call_operand.vmem [shape: bf16[2,256,128], index: 8, kind: input, shape index: {}]
  %s9 = inlined_call_operand.vmem [shape: bf16[128,128], index: 9, kind: input, shape index: {}]
  %s10 = inlined_call_operand.hbm [shape: f32[32,128], index: 10, kind: output, shape index: {}]
  %s11 = sld [smem:[#allocation0]]
  $region73: #{_forward.1} parent=0
    _
  %s13 = ssub.s32 1, %s11
  %s14 = scalar_select 0, %s13, %s11
  $region1: #{_forward.1} parent=0
    #allocation3 [shape = 'u8[16384]{0}', space=vmem, size = 0x4000, scoped, tag = 'output window, operand 0']
    #allocation4 [shape = 's32[2]{0}', space=sflag, size = 0x8, scoped, tag = 'scoped memory for _forward.1']
    %15 = vsyncpa [#allocation4], 0
    %s16 = scalar_lea.sflag [#allocation4], 1
    %17 = vsyncpa %s16, 0
    loop: start=0, step=1, limit=4
    $region2: #{_forward.1} parent=1 // loop_pre_header
      _
    $region3: #{_forward.1} parent=1 // loop_header
      %s19 = sphi 0, %s23
      %p20 = scmp.ge.s32.totalorder %s19, 4
      %s29 = sphi 0, %s31
      %s32 = sphi 0, %s29
      %s33 = sphi 0, %s32
      %s49 = sphi 0, %s33
      %s53 = sphi 0, %s53
      %s55 = sphi 0, %s53
      %s56 = sphi 0, %s55
      %s70 = sphi 0, %s56
      %s74 = sphi 0, %s74
      %s76 = sphi 0, %s74
      %s77 = sphi 0, %s76
      %s91 = sphi 0, %s77
      %s95 = sphi 0, %s95
      %s97 = sphi 0, %s95
      %s98 = sphi 0, %s97
      %s112 = sphi 0, %s98
      %s116 = sphi 0, %s116
      %s118 = sphi 0, %s116
      %s119 = sphi 0, %s118
      %s133 = sphi 0, %s119
      %s137 = sphi 0, %s137
      %s139 = sphi 0, %s137
      %s140 = sphi 0, %s139
      %s154 = sphi 0, %s140
      %s158 = sphi 0, %s158
      %s160 = sphi 0, %s158
      %s161 = sphi 0, %s160
      %s175 = sphi 0, %s161
      %s179 = sphi 0, %s179
      %s181 = sphi 0, %s179
      %s182 = sphi 0, %s181
      %s196 = sphi 0, %s182
      %s200 = sphi 0, %s200
      %s202 = sphi 0, %s200
      %s203 = sphi 0, %s202
      %s217 = sphi 0, %s203
      %s221 = sphi 0, %s221
      %s223 = sphi 0, %s221
      %s224 = sphi 0, %s223
      %s238 = sphi 0, %s224
      %s244 = sphi 0, %s246
      %s247 = sphi 0, %s244
      %s248 = sphi 0, %s247
      %s264 = sphi 0, %s248
    $region4: #{_forward.1} parent=1 // loop_header_branch
      %22 = sbr.rel (%p20) target = $region8
    $region5: #{_forward.1} parent=1 // loop_body
      %s24 = ssub.s32 %s19, 1
      %s25 = ssub.s32 %s19, 2
      %s26 = sadd.s32 %s19, 1
      %s27 = ssub.s32 %s19, %s26
      %p28 = scmp.eq.s32.totalorder %s27, 0
      %s30 = sadd.s32 %s29, 1
      %s31 = scalar_select %p28, %s29, %s30
      %p34 = pneg %p28
      %p35 = scmp.eq.s32.totalorder %s19, 1
      %p36 = por %p34, %p35
      %p37 = scmp.ne.s32.totalorder %s29, %s32
      %p38 = scmp.eq.s32.totalorder %s19, 0
      %p39 = por %p37, %p38
      %p40 = scmp.ne.s32.totalorder %s29, %s32
      %p41 = scmp.eq.s32.totalorder %s24, 1
      %p42 = por %p40, %p41
      %p43 = scmp.ne.s32.totalorder %s32, %s33
      %p44 = scmp.eq.s32.totalorder %s24, 0
      %p45 = por %p43, %p44
      %p46 = scmp.ne.s32.totalorder %s32, %s33
      %p47 = scmp.eq.s32.totalorder %s25, 1
      %p48 = por %p46, %p47
      %p50 = scmp.ne.s32.totalorder %s33, %s49
      %p51 = scmp.eq.s32.totalorder %s25, 0
      %p52 = por %p50, %p51
      %s54 = sadd.s32 %s53, 1
      %p57 = scmp.eq.s32.totalorder %s19, 1
      %p58 = scmp.ne.s32.totalorder %s53, %s55
      %p59 = scmp.eq.s32.totalorder %s19, 0
      %p60 = por %p58, %p59
      %p61 = scmp.ne.s32.totalorder %s53, %s55
      %p62 = scmp.eq.s32.totalorder %s24, 1
      %p63 = por %p61, %p62
      %p64 = scmp.ne.s32.totalorder %s55, %s56
      %p65 = scmp.eq.s32.totalorder %s24, 0
      %p66 = por %p64, %p65
      %p67 = scmp.ne.s32.totalorder %s55, %s56
      %p68 = scmp.eq.s32.totalorder %s25, 1
      %p69 = por %p67, %p68
      %p71 = scmp.ne.s32.totalorder %s56, %s70
      %p72 = scmp.eq.s32.totalorder %s25, 0
      %p73 = por %p71, %p72
      %s75 = sadd.s32 %s74, 1
      %p78 = scmp.eq.s32.totalorder %s19, 1
      %p79 = scmp.ne.s32.totalorder %s74, %s76
      %p80 = scmp.eq.s32.totalorder %s19, 0
      %p81 = por %p79, %p80
      %p82 = scmp.ne.s32.totalorder %s74, %s76
      %p83 = scmp.eq.s32.totalorder %s24, 1
      %p84 = por %p82, %p83
      %p85 = scmp.ne.s32.totalorder %s76, %s77
      %p86 = scmp.eq.s32.totalorder %s24, 0
      %p87 = por %p85, %p86
      %p88 = scmp.ne.s32.totalorder %s76, %s77
      %p89 = scmp.eq.s32.totalorder %s25, 1
      %p90 = por %p88, %p89
      %p92 = scmp.ne.s32.totalorder %s77, %s91
      %p93 = scmp.eq.s32.totalorder %s25, 0
      %p94 = por %p92, %p93
      %s96 = sadd.s32 %s95, 1
      %p99 = scmp.eq.s32.totalorder %s19, 1
      %p100 = scmp.ne.s32.totalorder %s95, %s97
      %p101 = scmp.eq.s32.totalorder %s19, 0
      %p102 = por %p100, %p101
      %p103 = scmp.ne.s32.totalorder %s95, %s97
      %p104 = scmp.eq.s32.totalorder %s24, 1
      %p105 = por %p103, %p104
      %p106 = scmp.ne.s32.totalorder %s97, %s98
      %p107 = scmp.eq.s32.totalorder %s24, 0
      %p108 = por %p106, %p107
      %p109 = scmp.ne.s32.totalorder %s97, %s98
      %p110 = scmp.eq.s32.totalorder %s25, 1
      %p111 = por %p109, %p110
      %p113 = scmp.ne.s32.totalorder %s98, %s112
      %p114 = scmp.eq.s32.totalorder %s25, 0
      %p115 = por %p113, %p114
      %s117 = sadd.s32 %s116, 1
      %p120 = scmp.eq.s32.totalorder %s19, 1
      %p121 = scmp.ne.s32.totalorder %s116, %s118
      %p122 = scmp.eq.s32.totalorder %s19, 0
      %p123 = por %p121, %p122
      %p124 = scmp.ne.s32.totalorder %s116, %s118
      %p125 = scmp.eq.s32.totalorder %s24, 1
      %p126 = por %p124, %p125
      %p127 = scmp.ne.s32.totalorder %s118, %s119
      %p128 = scmp.eq.s32.totalorder %s24, 0
      %p129 = por %p127, %p128
      %p130 = scmp.ne.s32.totalorder %s118, %s119
      %p131 = scmp.eq.s32.totalorder %s25, 1
      %p132 = por %p130, %p131
      %p134 = scmp.ne.s32.totalorder %s119, %s133
      %p135 = scmp.eq.s32.totalorder %s25, 0
      %p136 = por %p134, %p135
      %s138 = sadd.s32 %s137, 1
      %p141 = scmp.eq.s32.totalorder %s19, 1
      %p142 = scmp.ne.s32.totalorder %s137, %s139
      %p143 = scmp.eq.s32.totalorder %s19, 0
      %p144 = por %p142, %p143
      %p145 = scmp.ne.s32.totalorder %s137, %s139
      %p146 = scmp.eq.s32.totalorder %s24, 1
      %p147 = por %p145, %p146
      %p148 = scmp.ne.s32.totalorder %s139, %s140
      %p149 = scmp.eq.s32.totalorder %s24, 0
      %p150 = por %p148, %p149
      %p151 = scmp.ne.s32.totalorder %s139, %s140
      %p152 = scmp.eq.s32.totalorder %s25, 1
      %p153 = por %p151, %p152
      %p155 = scmp.ne.s32.totalorder %s140, %s154
      %p156 = scmp.eq.s32.totalorder %s25, 0
      %p157 = por %p155, %p156
      %s159 = sadd.s32 %s158, 1
      %p162 = scmp.eq.s32.totalorder %s19, 1
      %p163 = scmp.ne.s32.totalorder %s158, %s160
      %p164 = scmp.eq.s32.totalorder %s19, 0
      %p165 = por %p163, %p164
      %p166 = scmp.ne.s32.totalorder %s158, %s160
      %p167 = scmp.eq.s32.totalorder %s24, 1
      %p168 = por %p166, %p167
      %p169 = scmp.ne.s32.totalorder %s160, %s161
      %p170 = scmp.eq.s32.totalorder %s24, 0
      %p171 = por %p169, %p170
      %p172 = scmp.ne.s32.totalorder %s160, %s161
      %p173 = scmp.eq.s32.totalorder %s25, 1
      %p174 = por %p172, %p173
      %p176 = scmp.ne.s32.totalorder %s161, %s175
      %p177 = scmp.eq.s32.totalorder %s25, 0
      %p178 = por %p176, %p177
      %s180 = sadd.s32 %s179, 1
      %p183 = scmp.eq.s32.totalorder %s19, 1
      %p184 = scmp.ne.s32.totalorder %s179, %s181
      %p185 = scmp.eq.s32.totalorder %s19, 0
      %p186 = por %p184, %p185
      %p187 = scmp.ne.s32.totalorder %s179, %s181
      %p188 = scmp.eq.s32.totalorder %s24, 1
      %p189 = por %p187, %p188
      %p190 = scmp.ne.s32.totalorder %s181, %s182
      %p191 = scmp.eq.s32.totalorder %s24, 0
      %p192 = por %p190, %p191
      %p193 = scmp.ne.s32.totalorder %s181, %s182
      %p194 = scmp.eq.s32.totalorder %s25, 1
      %p195 = por %p193, %p194
      %p197 = scmp.ne.s32.totalorder %s182, %s196
      %p198 = scmp.eq.s32.totalorder %s25, 0
      %p199 = por %p197, %p198
      %s201 = sadd.s32 %s200, 1
      %p204 = scmp.eq.s32.totalorder %s19, 1
      %p205 = scmp.ne.s32.totalorder %s200, %s202
      %p206 = scmp.eq.s32.totalorder %s19, 0
      %p207 = por %p205, %p206
      %p208 = scmp.ne.s32.totalorder %s200, %s202
      %p209 = scmp.eq.s32.totalorder %s24, 1
      %p210 = por %p208, %p209
      %p211 = scmp.ne.s32.totalorder %s202, %s203
      %p212 = scmp.eq.s32.totalorder %s24, 0
      %p213 = por %p211, %p212
      %p214 = scmp.ne.s32.totalorder %s202, %s203
      %p215 = scmp.eq.s32.totalorder %s25, 1
      %p216 = por %p214, %p215
      %p218 = scmp.ne.s32.totalorder %s203, %s217
      %p219 = scmp.eq.s32.totalorder %s25, 0
      %p220 = por %p218, %p219
      %s222 = sadd.s32 %s221, 1
      %p225 = scmp.eq.s32.totalorder %s19, 1
      %p226 = scmp.ne.s32.totalorder %s221, %s223
      %p227 = scmp.eq.s32.totalorder %s19, 0
      %p228 = por %p226, %p227
      %p229 = scmp.ne.s32.totalorder %s221, %s223
      %p230 = scmp.eq.s32.totalorder %s24, 1
      %p231 = por %p229, %p230
      %p232 = scmp.ne.s32.totalorder %s223, %s224
      %p233 = scmp.eq.s32.totalorder %s24, 0
      %p234 = por %p232, %p233
      %p235 = scmp.ne.s32.totalorder %s223, %s224
      %p236 = scmp.eq.s32.totalorder %s25, 1
      %p237 = por %p235, %p236
      %p239 = scmp.ne.s32.totalorder %s224, %s238
      %p240 = scmp.eq.s32.totalorder %s25, 0
      %p241 = por %p239, %p240
      %s242 = ssub.s32 %s19, %s26
      %p243 = scmp.eq.s32.totalorder %s242, 0
      %s245 = sadd.s32 %s244, 1
      %s246 = scalar_select %p243, %s244, %s245
      %p249 = pneg %p243
      %p250 = scmp.eq.s32.totalorder %s19, 1
      %p251 = por %p249, %p250
      %p252 = scmp.ne.s32.totalorder %s244, %s247
      %p253 = scmp.eq.s32.totalorder %s19, 0
      %p254 = por %p252, %p253
      %p255 = scmp.ne.s32.totalorder %s244, %s247
      %p256 = scmp.eq.s32.totalorder %s24, 1
      %p257 = por %p255, %p256
      %p258 = scmp.ne.s32.totalorder %s247, %s248
      %p259 = scmp.eq.s32.totalorder %s24, 0
      %p260 = por %p258, %p259
      %p261 = scmp.ne.s32.totalorder %s247, %s248
      %p262 = scmp.eq.s32.totalorder %s25, 1
      %p263 = por %p261, %p262
      %p265 = scmp.ne.s32.totalorder %s248, %s264
      %p266 = scmp.eq.s32.totalorder %s25, 0
      %p267 = por %p265, %p266
      %p268 = scmp.le.s32.totalorder 1, %s19
      %p269 = scmp.lt.s32.totalorder %s19, 3
      %p270 = pnand %p268, %p269
      %p271 = pneg %p270
      // Predicated region
      $region9: #{_forward.1} parent=5 // pred_check
        _
      $region10: #{_forward.1} parent=5 // pred_check_branch
        %273 = sbr.rel (%p270) target = $region12
      $region11: #{_forward.1} parent=5 // pred_region
        %s274 = ssub.s32 %s19, 1
        // Predicated region
        $region13: #{_forward.1} parent=11 // pred_check
          %p275 = pneg %p66
        $region14: #{_forward.1} parent=11 // pred_check_branch
          %277 = sbr.rel (%p275) target = $region16
        $region15: #{_forward.1} parent=11 // pred_region
          _
        $region16: #{_forward.1} parent=11 // pred_fallthru
          _
        // Predicated region
        $region17: #{_forward.1} parent=11 // pred_check
          %p278 = pneg %p87
        $region18: #{_forward.1} parent=11 // pred_check_branch
          %280 = sbr.rel (%p278) target = $region20
        $region19: #{_forward.1} parent=11 // pred_region
          _
        $region20: #{_forward.1} parent=11 // pred_fallthru
          _
        // Predicated region
        $region21: #{_forward.1} parent=11 // pred_check
          %p281 = pneg %p108
        $region22: #{_forward.1} parent=11 // pred_check_branch
          %283 = sbr.rel (%p281) target = $region24
        $region23: #{_forward.1} parent=11 // pred_region
          _
        $region24: #{_forward.1} parent=11 // pred_fallthru
          _
        // Predicated region
        $region25: #{_forward.1} parent=11 // pred_check
          %p284 = pneg %p129
        $region26: #{_forward.1} parent=11 // pred_check_branch
          %286 = sbr.rel (%p284) target = $region28
        $region27: #{_forward.1} parent=11 // pred_region
          _
        $region28: #{_forward.1} parent=11 // pred_fallthru
          _
        // Predicated region
        $region29: #{_forward.1} parent=11 // pred_check
          %p287 = pneg %p150
        $region30: #{_forward.1} parent=11 // pred_check_branch
          %289 = sbr.rel (%p287) target = $region32
        $region31: #{_forward.1} parent=11 // pred_region
          _
        $region32: #{_forward.1} parent=11 // pred_fallthru
          _
        // Predicated region
        $region33: #{_forward.1} parent=11 // pred_check
          %p290 = pneg %p171
        $region34: #{_forward.1} parent=11 // pred_check_branch
          %292 = sbr.rel (%p290) target = $region36
        $region35: #{_forward.1} parent=11 // pred_region
          _
        $region36: #{_forward.1} parent=11 // pred_fallthru
          _
        // Predicated region
        $region37: #{_forward.1} parent=11 // pred_check
          %p293 = pneg %p192
        $region38: #{_forward.1} parent=11 // pred_check_branch
          %295 = sbr.rel (%p293) target = $region40
        $region39: #{_forward.1} parent=11 // pred_region
          _
        $region40: #{_forward.1} parent=11 // pred_fallthru
          _
        // Predicated region
        $region41: #{_forward.1} parent=11 // pred_check
          %p296 = pneg %p213
        $region42: #{_forward.1} parent=11 // pred_check_branch
          %298 = sbr.rel (%p296) target = $region44
        $region43: #{_forward.1} parent=11 // pred_region
          _
        $region44: #{_forward.1} parent=11 // pred_fallthru
          _
        // Predicated region
        $region45: #{_forward.1} parent=11 // pred_check
          %p299 = pneg %p234
        $region46: #{_forward.1} parent=11 // pred_check_branch
          %301 = sbr.rel (%p299) target = $region48
        $region47: #{_forward.1} parent=11 // pred_region
          _
        $region48: #{_forward.1} parent=11 // pred_fallthru
          _
      $region12: #{_forward.1} parent=5 // pred_fallthru
        _
      %p302 = scmp.lt.s32.totalorder %s19, 2
      // Predicated region
      $region49: #{_forward.1} parent=5 // pred_check
        %p303 = pneg %p302
      $region50: #{_forward.1} parent=5 // pred_check_branch
        %305 = sbr.rel (%p303) target = $region52
      $region51: #{_forward.1} parent=5 // pred_region
        // Predicated region
        $region53: #{_forward.1} parent=51 // pred_check
          %p306 = pneg %p39
        $region54: #{_forward.1} parent=51 // pred_check_branch
          %308 = sbr.rel (%p306) target = $region56
        $region55: #{_forward.1} parent=51 // pred_region
          %s309 = smul.u32 2, %s19
          %p310 = scmp.lt.s32.totalorder %s309, 3
          %s311 = scalar_select %p310, %s309, 3
          %s312 = smul.addr %s311, 8
          %s313 = scalar_lea.vmem %s0, %s312
          %s314 = smul.u32 2, %s19
        $region56: #{_forward.1} parent=51 // pred_fallthru
          _
      $region52: #{_forward.1} parent=5 // pred_fallthru
        _
      %p315 = scmp.le.s32.totalorder 1, %s19
      %p316 = scmp.lt.s32.totalorder %s19, 3
      %p317 = pnand %p315, %p316
      %p318 = pneg %p317
      // Predicated region
      $region57: #{_forward.1} parent=5 // pred_check
        _
      $region58: #{_forward.1} parent=5 // pred_check_branch
        %320 = sbr.rel (%p317) target = $region60
      $region59: #{_forward.1} parent=5 // pred_region
        %s321 = ssub.s32 %s19, 1
        %s322 = smul.u32 2, %s24
        %p323 = scmp.lt.s32.totalorder %s322, 3
        %s324 = scalar_select %p323, %s322, 3
        %s325 = smul.addr %s324, 8
        %s326 = scalar_lea.vmem %s0, %s325
        %p327 = pneg %p45
        %p328 = pneg %p42
        %p329 = pneg %p66
        %p330 = pneg %p63
        %p331 = pneg %p87
        %p332 = pneg %p84
        %p333 = pneg %p108
        %p334 = pneg %p105
        %p335 = pneg %p129
        %p336 = pneg %p126
        %p337 = pneg %p150
        %p338 = pneg %p147
        %p339 = pneg %p171
        %p340 = pneg %p168
        %p341 = pneg %p192
        %p342 = pneg %p189
        %p343 = pneg %p213
        %p344 = pneg %p210
        %p345 = pneg %p234
        %p346 = pneg %p231
        %p347 = pneg %p260
        %p348 = pneg %p257
        %s349 = sand.u32 %s247, 1
        %s350 = scalar_lea.sflag [#allocation4], %s349
        %s351 = sand.u32 %s247, 1
        %s352 = smul.addr %s351, 16
        %s353 = scalar_lea.vmem [#allocation3], %s352
        %s354 = smul.u32 2, %s24
        %p355 = scmp.lt.s32.totalorder %s354, 3
        %s356 = scalar_select %p355, %s354, 3
        %s357 = smul.addr %s356, 8
        %s358 = scalar_lea.vmem %s0, %s357
        %s359 = smul.u32 2, %s24
        %s360 = smul.u32 2, %s24
        %v362 = vld [vmem:[%s358] sm:$0xff]
        %v363 = vld [vmem:[%s358 + $0x8] sm:$0xff]
        %v364 = vld [vmem:[%s1] sm:$0xff]
        %v365 = vld [vmem:[%s1 + $0x8] sm:$0xff]
        %v366 = vld [vmem:[%s2] sm:$0xff]
        %v367 = vld [vmem:[%s2 + $0x8] sm:$0xff]
        %s368 = scalar_lea.vmem %s2, 16
        %v369 = vld [vmem:[%s368] sm:$0xff]
        %v370 = vld [vmem:[%s368 + $0x8] sm:$0xff]
        %v371 = vld [vmem:[%s3] sm:$0xf]
        %372 = vadd.xlane.f32.xlu0 %v362
        %v373 = vpop.xlane.xlu0 %372
        %374 = vadd.xlane.f32.xlu0 %v363
        %v375 = vpop.xlane.xlu0 %374
        %v376 = vrcp.pop 128.0
        %v377 = vmul.f32 %v373, %v376
        %v378 = vmul.f32 %v375, %v376
        %v379 = vsub.f32 %v362, %v377
        %v380 = vsub.f32 %v363, %v378
        %v381 = vmul.f32 %v379, %v379
        %v382 = vmul.f32 %v380, %v380
        %383 = vadd.xlane.f32.xlu0 %v381
        %v384 = vpop.xlane.xlu0 %383
        %385 = vadd.xlane.f32.xlu0 %v382
        %v386 = vpop.xlane.xlu0 %385
        %v387 = vmul.f32 %v384, %v376
        %v388 = vmul.f32 %v386, %v376
        %v389 = vadd.f32 %v387, 1e-05
        %v390 = vadd.f32 %v388, 1e-05
        %v391 = vrsqrt.pop %v389
        %v392 = vrsqrt.pop %v390
        %v393 = vmul.f32 %v379, %v391
        %v394 = vmul.f32 %v380, %v392
        %v395 = vlaneseq
        %v396 = vshrl.u32 %v395, 7
        %v397 = vsub.s32 0, %v396
        %v398 = vrot.slane %v371, %v397
        %v399 = vmul.f32 %v393, %v398
        %v400 = vmul.f32 %v394, %v398
        %v401 = vlaneseq
        %v402 = vshrl.u32 %v401, 7
        %v403 = vsub.s32 1, %v402
        %v404 = vrot.slane %v371, %v403
        %v405 = vadd.f32 %v399, %v404
        %v406 = vadd.f32 %v400, %v404
        %v407 = vpack.c.bf16 %v406, %v405
        %v408 = vld [vmem:[%s5] sm:$0xff]
        %v409 = vld [vmem:[%s5 + $0x8] sm:$0xff]
        %v410 = vld [vmem:[%s5 + $0x10] sm:$0xf]
        %v411 = vld [vmem:[%s5 + $0x14] sm:$0xff]
        %v412 = vld [vmem:[%s5 + $0x1c] sm:$0xff]
        %v413 = vld [vmem:[%s5 + $0x24] sm:$0xf]
        %v414 = vld [vmem:[%s5 + $0x28] sm:$0xff]
        %v415 = vld [vmem:[%s5 + $0x30] sm:$0xff]
        %v416 = vld [vmem:[%s5 + $0x38] sm:$0xf]
        %v417 = vld [vmem:[%s5 + $0x3c] sm:$0xff]
        %v418 = vld [vmem:[%s5 + $0x44] sm:$0xff]
        %v419 = vld [vmem:[%s5 + $0x4c] sm:$0xf]
        %v420 = vld [vmem:[%s5 + $0x50] sm:$0xff]
        %v421 = vld [vmem:[%s5 + $0x58] sm:$0xff]
        %v422 = vld [vmem:[%s5 + $0x60] sm:$0xf]
        %v423 = vld [vmem:[%s5 + $0x64] sm:$0xff]
        %v424 = vld [vmem:[%s5 + $0x6c] sm:$0xff]
        %v425 = vld [vmem:[%s5 + $0x74] sm:$0xf]
        %v426 = vld [vmem:[%s5 + $0x78] sm:$0xff]
        %v427 = vld [vmem:[%s5 + $0x80] sm:$0xff]
        %v428 = vld [vmem:[%s5 + $0x88] sm:$0xf]
        %v429 = vld [vmem:[%s5 + $0x8c] sm:$0xff]
        %v430 = vld [vmem:[%s5 + $0x94] sm:$0xff]
        %v431 = vld [vmem:[%s5 + $0x9c] sm:$0xf]
        %v432 = vld [vmem:[%s5 + $0xa0] sm:$0xff]
        %v433 = vld [vmem:[%s5 + $0xa8] sm:$0xff]
        %v434 = vld [vmem:[%s5 + $0xb0] sm:$0xf]
        %v435 = vld [vmem:[%s5 + $0xb4] sm:$0xff]
        %v436 = vld [vmem:[%s5 + $0xbc] sm:$0xff]
        %v437 = vld [vmem:[%s5 + $0xc4] sm:$0xf]
        %v438 = vld [vmem:[%s5 + $0xc8] sm:$0xff]
        %v439 = vld [vmem:[%s5 + $0xd0] sm:$0xff]
        %v440 = vld [vmem:[%s5 + $0xd8] sm:$0xf]
        %v441 = vld [vmem:[%s5 + $0xdc] sm:$0xff]
        %v442 = vld [vmem:[%s5 + $0xe4] sm:$0xff]
        %v443 = vld [vmem:[%s5 + $0xec] sm:$0xf]
        %v444 = vld [vmem:[%s5 + $0xf0] sm:$0xff]
        %v445 = vld [vmem:[%s5 + $0xf8] sm:$0xff]
        %v446 = vld [vmem:[%s5 + $0x100] sm:$0xf]
        %v447 = vld [vmem:[%s5 + $0x104] sm:$0xff]
        %v448 = vld [vmem:[%s5 + $0x10c] sm:$0xff]
        %v449 = vld [vmem:[%s5 + $0x114] sm:$0xf]
        %v450 = vld [vmem:[%s5 + $0x118] sm:$0xff]
        %v451 = vld [vmem:[%s5 + $0x120] sm:$0xff]
        %v452 = vld [vmem:[%s5 + $0x128] sm:$0xf]
        %v453 = vld [vmem:[%s5 + $0x12c] sm:$0xff]
        %v454 = vld [vmem:[%s5 + $0x134] sm:$0xff]
        %v455 = vld [vmem:[%s5 + $0x13c] sm:$0xf]
        %v504 = vunpack.c.l.b16 %v408
        %v505 = vunpack.c.h.b16 %v408
        %v506 = vunpack.c.l.b16 %v409
        %v507 = vunpack.c.h.b16 %v409
        %v508 = vunpack.c.l.b16 %v410
        %v509 = vunpack.c.l.b16 %v411
        %v510 = vunpack.c.h.b16 %v411
        %v511 = vunpack.c.l.b16 %v412
        %v512 = vunpack.c.h.b16 %v412
        %v513 = vunpack.c.l.b16 %v413
        %v514 = vunpack.c.l.b16 %v414
        %v515 = vunpack.c.h.b16 %v414
        %v516 = vunpack.c.l.b16 %v415
        %v517 = vunpack.c.h.b16 %v415
        %v518 = vunpack.c.l.b16 %v416
        %v519 = vunpack.c.l.b16 %v417
        %v520 = vunpack.c.h.b16 %v417
        %v521 = vunpack.c.l.b16 %v418
        %v522 = vunpack.c.h.b16 %v418
        %v523 = vunpack.c.l.b16 %v419
        %v524 = vunpack.c.l.b16 %v420
        %v525 = vunpack.c.h.b16 %v420
        %v526 = vunpack.c.l.b16 %v421
        %v527 = vunpack.c.h.b16 %v421
        %v528 = vunpack.c.l.b16 %v422
        %v529 = vunpack.c.l.b16 %v423
        %v530 = vunpack.c.h.b16 %v423
        %v531 = vunpack.c.l.b16 %v424
        %v532 = vunpack.c.h.b16 %v424
        %v533 = vunpack.c.l.b16 %v425
        %v534 = vunpack.c.l.b16 %v426
        %v535 = vunpack.c.h.b16 %v426
        %v536 = vunpack.c.l.b16 %v427
        %v537 = vunpack.c.h.b16 %v427
        %v538 = vunpack.c.l.b16 %v428
        %v539 = vunpack.c.l.b16 %v429
        %v540 = vunpack.c.h.b16 %v429
        %v541 = vunpack.c.l.b16 %v430
        %v542 = vunpack.c.h.b16 %v430
        %v543 = vunpack.c.l.b16 %v431
        %v544 = vunpack.c.l.b16 %v432
        %v545 = vunpack.c.h.b16 %v432
        %v546 = vunpack.c.l.b16 %v433
        %v547 = vunpack.c.h.b16 %v433
        %v548 = vunpack.c.l.b16 %v434
        %v549 = vunpack.c.l.b16 %v435
        %v550 = vunpack.c.h.b16 %v435
        %v551 = vunpack.c.l.b16 %v436
        %v552 = vunpack.c.h.b16 %v436
        %v553 = vunpack.c.l.b16 %v437
        %v554 = vunpack.c.l.b16 %v438
        %v555 = vunpack.c.h.b16 %v438
        %v556 = vunpack.c.l.b16 %v439
        %v557 = vunpack.c.h.b16 %v439
        %v558 = vunpack.c.l.b16 %v440
        %v559 = vunpack.c.l.b16 %v441
        %v560 = vunpack.c.h.b16 %v441
        %v561 = vunpack.c.l.b16 %v442
        %v562 = vunpack.c.h.b16 %v442
        %v563 = vunpack.c.l.b16 %v443
        %v564 = vunpack.c.l.b16 %v444
        %v565 = vunpack.c.h.b16 %v444
        %v566 = vunpack.c.l.b16 %v445
        %v567 = vunpack.c.h.b16 %v445
        %v568 = vunpack.c.l.b16 %v446
        %v569 = vunpack.c.l.b16 %v447
        %v570 = vunpack.c.h.b16 %v447
        %v571 = vunpack.c.l.b16 %v448
        %v572 = vunpack.c.h.b16 %v448
        %v573 = vunpack.c.l.b16 %v449
        %v574 = vunpack.c.l.b16 %v450
        %v575 = vunpack.c.h.b16 %v450
        %v576 = vunpack.c.l.b16 %v451
        %v577 = vunpack.c.h.b16 %v451
        %v578 = vunpack.c.l.b16 %v452
        %v579 = vunpack.c.l.b16 %v453
        %v580 = vunpack.c.h.b16 %v453
        %v581 = vunpack.c.l.b16 %v454
        %v582 = vunpack.c.h.b16 %v454
        %v583 = vunpack.c.l.b16 %v455
        %v584 = vpack.c.b16 %v509, %v504
        %v585 = vpack.c.b16 %v510, %v505
        %v586 = vpack.c.b16 %v511, %v506
        %v587 = vpack.c.b16 %v512, %v507
        %v588 = vpack.c.b16 %v513, %v508
        %v589 = vpack.c.b16 %v519, %v514
        %v590 = vpack.c.b16 %v520, %v515
        %v591 = vpack.c.b16 %v521, %v516
        %v592 = vpack.c.b16 %v522, %v517
        %v593 = vpack.c.b16 %v523, %v518
        %v594 = vpack.c.b16 %v529, %v524
        %v595 = vpack.c.b16 %v530, %v525
        %v596 = vpack.c.b16 %v531, %v526
        %v597 = vpack.c.b16 %v532, %v527
        %v598 = vpack.c.b16 %v533, %v528
        %v599 = vpack.c.b16 %v539, %v534
        %v600 = vpack.c.b16 %v540, %v535
        %v601 = vpack.c.b16 %v541, %v536
        %v602 = vpack.c.b16 %v542, %v537
        %v603 = vpack.c.b16 %v543, %v538
        %v604 = vpack.c.b16 %v549, %v544
        %v605 = vpack.c.b16 %v550, %v545
        %v606 = vpack.c.b16 %v551, %v546
        %v607 = vpack.c.b16 %v552, %v547
        %v608 = vpack.c.b16 %v553, %v548
        %v609 = vpack.c.b16 %v559, %v554
        %v610 = vpack.c.b16 %v560, %v555
        %v611 = vpack.c.b16 %v561, %v556
        %v612 = vpack.c.b16 %v562, %v557
        %v613 = vpack.c.b16 %v563, %v558
        %v614 = vpack.c.b16 %v569, %v564
        %v615 = vpack.c.b16 %v570, %v565
        %v616 = vpack.c.b16 %v571, %v566
        %v617 = vpack.c.b16 %v572, %v567
        %v618 = vpack.c.b16 %v573, %v568
        %v619 = vpack.c.b16 %v579, %v574
        %v620 = vpack.c.b16 %v580, %v575
        %v621 = vpack.c.b16 %v581, %v576
        %v622 = vpack.c.b16 %v582, %v577
        %v623 = vpack.c.b16 %v583, %v578
        %664 = vmatprep.subr.bf16.mxu0 %v585
        %665 = vmatpush1.bf16.msra.mxu0 %v584
        %666 = vmatprep.subr.bf16.mxu0 %v590
        %667 = vmatpush1.bf16.msra.mxu0 %v589
        %668 = vmatprep.subr.bf16.mxu0 %v595
        %669 = vmatpush1.bf16.msra.mxu0 %v594
        %670 = vmatprep.subr.bf16.mxu0 %v600
        %671 = vmatpush1.bf16.msra.mxu0 %v599
        %672 = vmatprep.subr.bf16.mxu0 %v605
        %673 = vmatpush1.bf16.msra.mxu0 %v604
        %674 = vmatprep.subr.bf16.mxu0 %v610
        %675 = vmatpush1.bf16.msra.mxu0 %v609
        %676 = vmatprep.subr.bf16.mxu0 %v615
        %677 = vmatpush1.bf16.msra.mxu0 %v614
        %678 = vmatprep.subr.bf16.mxu0 %v620
        %679 = vmatpush1.bf16.msra.mxu0 %v619
        %680 = vmatprep.subr.bf16.mxu0 0
        %681 = vmatpush1.bf16.msra.mxu0 0
        %682 = vmatprep.subr.bf16.mxu0 0
        %683 = vmatpush1.bf16.msra.mxu0 0
        %684 = vmatprep.subr.bf16.mxu0 0
        %685 = vmatpush1.bf16.msra.mxu0 0
        %686 = vmatprep.subr.bf16.mxu0 0
        %687 = vmatpush1.bf16.msra.mxu0 0
        %688 = vmatprep.subr.bf16.mxu0 0
        %689 = vmatpush1.bf16.msra.mxu0 0
        %690 = vmatprep.subr.bf16.mxu0 0
        %691 = vmatpush1.bf16.msra.mxu0 0
        %692 = vmatprep.subr.bf16.mxu0 0
        %693 = vmatpush1.bf16.msra.mxu0 0
        %694 = vmatprep.subr.bf16.mxu0 0
        %695 = vmatpush1.bf16.msra.mxu0 0
        %696 = vmatprep.mubr.bf16.mxu0 0
        %697 = vmatmul.mubr.bf16.gmra.mrb[0].mxu0 %v407
        %v698 = vpop.f32.mrb[0].mxu0
        %v699 = vadd.f32 0.0, %v698
        %v700 = vpop.f32.mrb[0].mxu0
        %v701 = vadd.f32 0.0, %v700
        %v702 = vpop.f32.mrb[0].mxu0
        %v703 = vadd.f32 0.0, %v702
        %v704 = vpop.f32.mrb[0].mxu0
        %v705 = vadd.f32 0.0, %v704
        %706 = vdwg.mxu0
        %707 = vmatprep.subr.bf16.mxu0 %v587
        %708 = vmatpush1.bf16.msra.mxu0 %v586
        %709 = vmatprep.subr.bf16.mxu0 %v592
        %710 = vmatpush1.bf16.msra.mxu0 %v591
        %711 = vmatprep.subr.bf16.mxu0 %v597
        %712 = vmatpush1.bf16.msra.mxu0 %v596
        %713 = vmatprep.subr.bf16.mxu0 %v602
        %714 = vmatpush1.bf16.msra.mxu0 %v601
        %715 = vmatprep.subr.bf16.mxu0 %v607
        %716 = vmatpush1.bf16.msra.mxu0 %v606
        %717 = vmatprep.subr.bf16.mxu0 %v612
        %718 = vmatpush1.bf16.msra.mxu0 %v611
        %719 = vmatprep.subr.bf16.mxu0 %v617
        %720 = vmatpush1.bf16.msra.mxu0 %v616
        %721 = vmatprep.subr.bf16.mxu0 %v622
        %722 = vmatpush1.bf16.msra.mxu0 %v621
        %723 = vmatprep.subr.bf16.mxu0 0
        %724 = vmatpush1.bf16.msra.mxu0 0
        %725 = vmatprep.subr.bf16.mxu0 0
        %726 = vmatpush1.bf16.msra.mxu0 0
        %727 = vmatprep.subr.bf16.mxu0 0
        %728 = vmatpush1.bf16.msra.mxu0 0
        %729 = vmatprep.subr.bf16.mxu0 0
        %730 = vmatpush1.bf16.msra.mxu0 0
        %731 = vmatprep.subr.bf16.mxu0 0
        %732 = vmatpush1.bf16.msra.mxu0 0
        %733 = vmatprep.subr.bf16.mxu0 0
        %734 = vmatpush1.bf16.msra.mxu0 0
        %735 = vmatprep.subr.bf16.mxu0 0
        %736 = vmatpush1.bf16.msra.mxu0 0
        %737 = vmatprep.subr.bf16.mxu0 0
        %738 = vmatpush1.bf16.msra.mxu0 0
        %739 = vmatprep.mubr.bf16.mxu0 0
        %740 = vmatmul.mubr.bf16.gmra.mrb[0].mxu0 %v407
        %v741 = vpop.f32.mrb[0].mxu0
        %v742 = vadd.f32 0.0, %v741
        %v743 = vpop.f32.mrb[0].mxu0
        %v744 = vadd.f32 0.0, %v743
        %v745 = vpop.f32.mrb[0].mxu0
        %v746 = vadd.f32 0.0, %v745
        %v747 = vpop.f32.mrb[0].mxu0
        %v748 = vadd.f32 0.0, %v747
        %749 = vdwg.mxu0
        %750 = vmatprep.subr.bf16.mxu0 0
        %751 = vmatpush1.bf16.msra.mxu0 %v588
        %752 = vmatprep.subr.bf16.mxu0 0
        %753 = vmatpush1.bf16.msra.mxu0 %v593
        %754 = vmatprep.subr.bf16.mxu0 0
        %755 = vmatpush1.bf16.msra.mxu0 %v598
        %756 = vmatprep.subr.bf16.mxu0 0
        %757 = vmatpush1.bf16.msra.mxu0 %v603
        %758 = vmatprep.subr.bf16.mxu0 0
        %759 = vmatpush1.bf16.msra.mxu0 %v608
        %760 = vmatprep.subr.bf16.mxu0 0
        %761 = vmatpush1.bf16.msra.mxu0 %v613
        %762 = vmatprep.subr.bf16.mxu0 0
        %763 = vmatpush1.bf16.msra.mxu0 %v618
        %764 = vmatprep.subr.bf16.mxu0 0
        %765 = vmatpush1.bf16.msra.mxu0 %v623
        %766 = vmatprep.subr.bf16.mxu0 0
        %767 = vmatpush1.bf16.msra.mxu0 0
        %768 = vmatprep.subr.bf16.mxu0 0
        %769 = vmatpush1.bf16.msra.mxu0 0
        %770 = vmatprep.subr.bf16.mxu0 0
        %771 = vmatpush1.bf16.msra.mxu0 0
        %772 = vmatprep.subr.bf16.mxu0 0
        %773 = vmatpush1.bf16.msra.mxu0 0
        %774 = vmatprep.subr.bf16.mxu0 0
        %775 = vmatpush1.bf16.msra.mxu0 0
        %776 = vmatprep.subr.bf16.mxu0 0
        %777 = vmatpush1.bf16.msra.mxu0 0
        %778 = vmatprep.subr.bf16.mxu0 0
        %779 = vmatpush1.bf16.msra.mxu0 0
        %780 = vmatprep.subr.bf16.mxu0 0
        %781 = vmatpush1.bf16.msra.mxu0 0
        %782 = vmatprep.mubr.bf16.mxu0 0
        %783 = vmatmul.mubr.bf16.gmra.mrb[0].mxu0 %v407
        %v784 = vpop.f32.mrb[0].mxu0
        %v785 = vadd.f32 0.0, %v784
        %v786 = vpop.f32.mrb[0].mxu0
        %v787 = vpop.f32.mrb[0].mxu0
        %v788 = vadd.f32 0.0, %v787
        %v789 = vpop.f32.mrb[0].mxu0
        %790 = vdwg.mxu0
        %v791 = vmul.f32 %v699, %v366
        %v792 = vmul.f32 %v703, %v367
        %v793 = vmul.f32 %v701, %v369
        %v794 = vmul.f32 %v705, %v370
        %v795 = vadd.f32 %v791, %v793
        %v796 = vadd.f32 %v792, %v794
        %v797 = vmul.f32 %v742, %v366
        %v798 = vmul.f32 %v746, %v367
        %v799 = vmul.f32 %v744, %v369
        %v800 = vmul.f32 %v748, %v370
        %v801 = vadd.f32 %v797, %v799
        %v802 = vadd.f32 %v798, %v800
        %vm803 = vcmask 261120
        %v805 = vsel %vm803, %v795, 0
        %v808 = vsel %vm803, %v796, 0
        %v811 = vsel %vm803, %v801, 0
        %v814 = vsel %vm803, %v802, 0
        %816 = vmatprep.subr.mxu0 0.0
        %817 = vmatpush1.xpose.msra.mxu0 %v811
        %818 = vmatprep.subr.mxu0 0.0
        %819 = vmatpush1.xpose.msra.mxu0 %v814
        %820 = vmatprep.subr.mxu0 0.0
        %821 = vmatpush1.xpose.msra.mxu0 0.0
        %822 = vmatprep.subr.mxu0 0.0
        %823 = vmatpush1.xpose.msra.mxu0 0.0
        %824 = vmatprep.subr.mxu0 0.0
        %825 = vmatpush1.xpose.msra.mxu0 0.0
        %826 = vmatprep.subr.mxu0 0.0
        %827 = vmatpush1.xpose.msra.mxu0 0.0
        %828 = vmatprep.subr.mxu0 0.0
        %829 = vmatpush1.xpose.msra.mxu0 0.0
        %830 = vmatprep.subr.mxu0 0.0
        %831 = vmatpush1.xpose.msra.mxu0 0.0
        %832 = vmatprep.subr.mxu0 0.0
        %833 = vmatpush1.xpose.msra.mxu0 0.0
        %834 = vmatprep.subr.mxu0 0.0
        %835 = vmatpush1.xpose.msra.mxu0 0.0
        %836 = vmatprep.subr.mxu0 0.0
        %837 = vmatpush1.xpose.msra.mxu0 0.0
        %838 = vmatprep.subr.mxu0 0.0
        %839 = vmatpush1.xpose.msra.mxu0 0.0
        %840 = vmatprep.subr.mxu0 0.0
        %841 = vmatpush1.xpose.msra.mxu0 0.0
        %842 = vmatprep.subr.mxu0 0.0
        %843 = vmatpush1.xpose.msra.mxu0 0.0
        %844 = vmatprep.subr.mxu0 0.0
        %845 = vmatpush1.xpose.msra.mxu0 0.0
        %846 = vmatprep.subr.mxu0 0.0
        %847 = vmatpush1.xpose.msra.mxu0 0.0
        %848 = vmatprep.subr.mxu0 0.0
        %849 = vmatpush1.xpose.msra.mxu0 0.0
        %850 = vmatprep.subr.mxu0 0.0
        %851 = vmatpush1.xpose.msra.mxu0 0.0
        %852 = vmatprep.subr.mxu0 0.0
        %853 = vmatpush1.xpose.msra.mxu0 0.0
        %854 = vmatprep.subr.mxu0 0.0
        %855 = vmatpush1.xpose.msra.mxu0 0.0
        %856 = vmatprep.subr.mxu0 0.0
        %857 = vmatpush1.xpose.msra.mxu0 0.0
        %858 = vmatprep.subr.mxu0 0.0
        %859 = vmatpush1.xpose.msra.mxu0 0.0
        %860 = vmatprep.subr.mxu0 0.0
        %861 = vmatpush1.xpose.msra.mxu0 0.0
        %862 = vmatprep.subr.mxu0 0.0
        %863 = vmatpush1.xpose.msra.mxu0 0.0
        %864 = vmatprep.subr.mxu0 0.0
        %865 = vmatpush1.xpose.msra.mxu0 0.0
        %866 = vmatprep.subr.mxu0 0.0
        %867 = vmatpush1.xpose.msra.mxu0 0.0
        %868 = vmatprep.subr.mxu0 0.0
        %869 = vmatpush1.xpose.msra.mxu0 0.0
        %870 = vmatprep.subr.mxu0 0.0
        %871 = vmatpush1.xpose.msra.mxu0 0.0
        %872 = vmatprep.subr.mxu0 0.0
        %873 = vmatpush1.xpose.msra.mxu0 0.0
        %874 = vmatprep.subr.mxu0 0.0
        %875 = vmatpush1.xpose.msra.mxu0 0.0
        %876 = vmatprep.subr.mxu0 0.0
        %877 = vmatpush1.xpose.msra.mxu0 0.0
        %878 = vmatprep.subr.mxu0 0.0
        %879 = vmatpush1.xpose.msra.mxu0 0.0
        %880 = vmatprep.mubr.f32.mxu0 0.0
        %881 = vmatmul.mubr.f32.gmra.mrb[0].mxu0 %v805
        %v882 = vpop.f32.mrb[0].mxu0
        %v883 = vadd.f32 %v364, %v882
        %v884 = vpop.f32.mrb[0].mxu0
        %885 = vmatprep.mubr.f32.mxu0 0.0
        %886 = vmatmul.mubr.f32.gmra.mrb[0].mxu0 %v808
        %v887 = vpop.f32.mrb[0].mxu0
        %v888 = vadd.f32 %v365, %v887
        %v889 = vpop.f32.mrb[0].mxu0
        %890 = vdwg.mxu0
        %vm891 = vcmask 130048
        %v892 = vsel %vm891, %v883, -inf
        %893 = vmax.xlane.f32.xlu0 %v892
        %v894 = vpop.xlane.xlu0 %893
        %v895 = vsel %vm891, %v888, -inf
        %896 = vmax.xlane.f32.xlu0 %v895
        %v897 = vpop.xlane.xlu0 %896
        %v898 = vsub.f32 %v883, %v894
        %v899 = vsub.f32 %v888, %v897
        %v900 = vmul.f32 %v898, 1.442695
        %v901 = vpow.pop %v900
        %v902 = vmul.f32 %v899, 1.442695
        %v903 = vpow.pop %v902
        %v904 = vsel %vm891, %v901, 0.0
        %905 = vadd.xlane.f32.xlu0 %v904
        %v906 = vpop.xlane.xlu0 %905
        %v907 = vsel %vm891, %v903, 0.0
        %908 = vadd.xlane.f32.xlu0 %v907
        %v909 = vpop.xlane.xlu0 %908
        %v910 = vrcp.pop %v906
        %v911 = vrcp.pop %v909
        %v912 = vmul.f32 %v901, %v910
        %v913 = vmul.f32 %v903, %v911
        %v915 = vsel %vm891, %v912, 0
        %v918 = vsel %vm891, %v913, 0
        %920 = vmatprep.subr.mxu0 0.0
        %921 = vmatpush1.msra.mxu0 %v785
        %922 = vmatprep.subr.mxu0 0.0
        %923 = vmatpush1.msra.mxu0 %v788
        %924 = vmatprep.subr.mxu0 0.0
        %925 = vmatpush1.msra.mxu0 0.0
        %926 = vmatprep.subr.mxu0 0.0
        %927 = vmatpush1.msra.mxu0 0.0
        %928 = vmatprep.subr.mxu0 0.0
        %929 = vmatpush1.msra.mxu0 0.0
        %930 = vmatprep.subr.mxu0 0.0
        %931 = vmatpush1.msra.mxu0 0.0
        %932 = vmatprep.subr.mxu0 0.0
        %933 = vmatpush1.msra.mxu0 0.0
        %934 = vmatprep.subr.mxu0 0.0
        %935 = vmatpush1.msra.mxu0 0.0
        %936 = vmatprep.subr.mxu0 0.0
        %937 = vmatpush1.msra.mxu0 0.0
        %938 = vmatprep.subr.mxu0 0.0
        %939 = vmatpush1.msra.mxu0 0.0
        %940 = vmatprep.subr.mxu0 0.0
        %941 = vmatpush1.msra.mxu0 0.0
        %942 = vmatprep.subr.mxu0 0.0
        %943 = vmatpush1.msra.mxu0 0.0
        %944 = vmatprep.subr.mxu0 0.0
        %945 = vmatpush1.msra.mxu0 0.0
        %946 = vmatprep.subr.mxu0 0.0
        %947 = vmatpush1.msra.mxu0 0.0
        %948 = vmatprep.subr.mxu0 0.0
        %949 = vmatpush1.msra.mxu0 0.0
        %950 = vmatprep.subr.mxu0 0.0
        %951 = vmatpush1.msra.mxu0 0.0
        %952 = vmatprep.subr.mxu0 0.0
        %953 = vmatpush1.msra.mxu0 0.0
        %954 = vmatprep.subr.mxu0 0.0
        %955 = vmatpush1.msra.mxu0 0.0
        %956 = vmatprep.subr.mxu0 0.0
        %957 = vmatpush1.msra.mxu0 0.0
        %958 = vmatprep.subr.mxu0 0.0
        %959 = vmatpush1.msra.mxu0 0.0
        %960 = vmatprep.subr.mxu0 0.0
        %961 = vmatpush1.msra.mxu0 0.0
        %962 = vmatprep.subr.mxu0 0.0
        %963 = vmatpush1.msra.mxu0 0.0
        %964 = vmatprep.subr.mxu0 0.0
        %965 = vmatpush1.msra.mxu0 0.0
        %966 = vmatprep.subr.mxu0 0.0
        %967 = vmatpush1.msra.mxu0 0.0
        %968 = vmatprep.subr.mxu0 0.0
        %969 = vmatpush1.msra.mxu0 0.0
        %970 = vmatprep.subr.mxu0 0.0
        %971 = vmatpush1.msra.mxu0 0.0
        %972 = vmatprep.subr.mxu0 0.0
        %973 = vmatpush1.msra.mxu0 0.0
        %974 = vmatprep.subr.mxu0 0.0
        %975 = vmatpush1.msra.mxu0 0.0
        %976 = vmatprep.subr.mxu0 0.0
        %977 = vmatpush1.msra.mxu0 0.0
        %978 = vmatprep.subr.mxu0 0.0
        %979 = vmatpush1.msra.mxu0 0.0
        %980 = vmatprep.subr.mxu0 0.0
        %981 = vmatpush1.msra.mxu0 0.0
        %982 = vmatprep.subr.mxu0 0.0
        %983 = vmatpush1.msra.mxu0 0.0
        %984 = vmatprep.mubr.f32.mxu0 0.0
        %985 = vmatmul.mubr.f32.gmra.mrb[0].mxu0 %v915
        %v986 = vpop.f32.mrb[0].mxu0
        %v987 = vadd.f32 0.0, %v986
        %v988 = vpop.f32.mrb[0].mxu0
        %989 = vmatprep.mubr.f32.mxu0 0.0
        %990 = vmatmul.mubr.f32.gmra.mrb[0].mxu0 %v918
        %v991 = vpop.f32.mrb[0].mxu0
        %v992 = vadd.f32 0.0, %v991
        %v993 = vpop.f32.mrb[0].mxu0
        %994 = vdwg.mxu0
        %v995 = vpack.c.bf16 %v992, %v987
        %996 = vst.msk [vmem:[#allocation2] sm:$0xff] %vm803, %v995
        %997 = vrot.lane.b32.xlu0 %v795, 96
        %v998 = vpop.permute.xlu0 %997
        %999 = vrot.lane.b32.xlu0 %v796, 96
        %v1000 = vpop.permute.xlu0 %999
        %1001 = vrot.lane.b32.xlu0 %v801, 96
        %v1002 = vpop.permute.xlu0 %1001
        %1003 = vrot.lane.b32.xlu0 %v802, 96
        %v1004 = vpop.permute.xlu0 %1003
        %v1005 = vsel %vm803, %v998, 0
        %v1007 = vsel %vm803, %v1000, 0
        %v1009 = vsel %vm803, %v1002, 0
        %v1011 = vsel %vm803, %v1004, 0
        %1013 = vmatprep.subr.mxu0 0.0
        %1014 = vmatpush1.xpose.msra.mxu0 %v1009
        %1015 = vmatprep.subr.mxu0 0.0
        %1016 = vmatpush1.xpose.msra.mxu0 %v1011
        %1017 = vmatprep.subr.mxu0 0.0
        %1018 = vmatpush1.xpose.msra.mxu0 0.0
        %1019 = vmatprep.subr.mxu0 0.0
        %1020 = vmatpush1.xpose.msra.mxu0 0.0
        %1021 = vmatprep.subr.mxu0 0.0
        %1022 = vmatpush1.xpose.msra.mxu0 0.0
        %1023 = vmatprep.subr.mxu0 0.0
        %1024 = vmatpush1.xpose.msra.mxu0 0.0
        %1025 = vmatprep.subr.mxu0 0.0
        %1026 = vmatpush1.xpose.msra.mxu0 0.0
        %1027 = vmatprep.subr.mxu0 0.0
        %1028 = vmatpush1.xpose.msra.mxu0 0.0
        %1029 = vmatprep.subr.mxu0 0.0
        %1030 = vmatpush1.xpose.msra.mxu0 0.0
        %1031 = vmatprep.subr.mxu0 0.0
        %1032 = vmatpush1.xpose.msra.mxu0 0.0
        %1033 = vmatprep.subr.mxu0 0.0
        %1034 = vmatpush1.xpose.msra.mxu0 0.0
        %1035 = vmatprep.subr.mxu0 0.0
        %1036 = vmatpush1.xpose.msra.mxu0 0.0
        %1037 = vmatprep.subr.mxu0 0.0
        %1038 = vmatpush1.xpose.msra.mxu0 0.0
        %1039 = vmatprep.subr.mxu0 0.0
        %1040 = vmatpush1.xpose.msra.mxu0 0.0
        %1041 = vmatprep.subr.mxu0 0.0
        %1042 = vmatpush1.xpose.msra.mxu0 0.0
        %1043 = vmatprep.subr.mxu0 0.0
        %1044 = vmatpush1.xpose.msra.mxu0 0.0
        %1045 = vmatprep.subr.mxu0 0.0
        %1046 = vmatpush1.xpose.msra.mxu0 0.0
        %1047 = vmatprep.subr.mxu0 0.0
        %1048 = vmatpush1.xpose.msra.mxu0 0.0
        %1049 = vmatprep.subr.mxu0 0.0
        %1050 = vmatpush1.xpose.msra.mxu0 0.0
        %1051 = vmatprep.subr.mxu0 0.0
        %1052 = vmatpush1.xpose.msra.mxu0 0.0
        %1053 = vmatprep.subr.mxu0 0.0
        %1054 = vmatpush1.xpose.msra.mxu0 0.0
        %1055 = vmatprep.subr.mxu0 0.0
        %1056 = vmatpush1.xpose.msra.mxu0 0.0
        %1057 = vmatprep.subr.mxu0 0.0
        %1058 = vmatpush1.xpose.msra.mxu0 0.0
        %1059 = vmatprep.subr.mxu0 0.0
        %1060 = vmatpush1.xpose.msra.mxu0 0.0
        %1061 = vmatprep.subr.mxu0 0.0
        %1062 = vmatpush1.xpose.msra.mxu0 0.0
        %1063 = vmatprep.subr.mxu0 0.0
        %1064 = vmatpush1.xpose.msra.mxu0 0.0
        %1065 = vmatprep.subr.mxu0 0.0
        %1066 = vmatpush1.xpose.msra.mxu0 0.0
        %1067 = vmatprep.subr.mxu0 0.0
        %1068 = vmatpush1.xpose.msra.mxu0 0.0
        %1069 = vmatprep.subr.mxu0 0.0
        %1070 = vmatpush1.xpose.msra.mxu0 0.0
        %1071 = vmatprep.subr.mxu0 0.0
        %1072 = vmatpush1.xpose.msra.mxu0 0.0
        %1073 = vmatprep.subr.mxu0 0.0
        %1074 = vmatpush1.xpose.msra.mxu0 0.0
        %1075 = vmatprep.subr.mxu0 0.0
        %1076 = vmatpush1.xpose.msra.mxu0 0.0
        %1077 = vmatprep.mubr.f32.mxu0 0.0
        %1078 = vmatmul.mubr.f32.gmra.mrb[0].mxu0 %v1005
        %v1079 = vpop.f32.mrb[0].mxu0
        %v1080 = vadd.f32 %v364, %v1079
        %v1081 = vpop.f32.mrb[0].mxu0
        %1082 = vmatprep.mubr.f32.mxu0 0.0
        %1083 = vmatmul.mubr.f32.gmra.mrb[0].mxu0 %v1007
        %v1084 = vpop.f32.mrb[0].mxu0
        %v1085 = vadd.f32 %v365, %v1084
        %v1086 = vpop.f32.mrb[0].mxu0
        %1087 = vdwg.mxu0
        %v1088 = vsel %vm891, %v1080, -inf
        %1089 = vmax.xlane.f32.xlu0 %v1088
        %v1090 = vpop.xlane.xlu0 %1089
        %v1091 = vsel %vm891, %v1085, -inf
        %1092 = vmax.xlane.f32.xlu0 %v1091
        %v1093 = vpop.xlane.xlu0 %1092
        %v1094 = vsub.f32 %v1080, %v1090
        %v1095 = vsub.f32 %v1085, %v1093
        %v1096 = vmul.f32 %v1094, 1.442695
        %v1097 = vpow.pop %v1096
        %v1098 = vmul.f32 %v1095, 1.442695
        %v1099 = vpow.pop %v1098
        %v1100 = vsel %vm891, %v1097, 0.0
        %1101 = vadd.xlane.f32.xlu0 %v1100
        %v1102 = vpop.xlane.xlu0 %1101
        %v1103 = vsel %vm891, %v1099, 0.0
        %1104 = vadd.xlane.f32.xlu0 %v1103
        %v1105 = vpop.xlane.xlu0 %1104
        %v1106 = vrcp.pop %v1102
        %v1107 = vrcp.pop %v1105
        %v1108 = vmul.f32 %v1097, %v1106
        %v1109 = vmul.f32 %v1099, %v1107
        %1112 = vrot.lane.b32.xlu0 %v785, 96
        %v1113 = vpop.permute.xlu0 %1112
        %1114 = vrot.lane.b32.xlu0 %v788, 96
        %v1115 = vpop.permute.xlu0 %1114
        %v1119 = vsel %vm891, %v1108, 0
        %v1122 = vsel %vm891, %v1109, 0
        %1124 = vmatprep.subr.mxu0 0.0
        %1125 = vmatpush1.msra.mxu0 %v1113
        %1126 = vmatprep.subr.mxu0 0.0
        %1127 = vmatpush1.msra.mxu0 %v1115
        %1128 = vmatprep.subr.mxu0 0.0
        %1129 = vmatpush1.msra.mxu0 0.0
        %1130 = vmatprep.subr.mxu0 0.0
        %1131 = vmatpush1.msra.mxu0 0.0
        %1132 = vmatprep.subr.mxu0 0.0
        %1133 = vmatpush1.msra.mxu0 0.0
        %1134 = vmatprep.subr.mxu0 0.0
        %1135 = vmatpush1.msra.mxu0 0.0
        %1136 = vmatprep.subr.mxu0 0.0
        %1137 = vmatpush1.msra.mxu0 0.0
        %1138 = vmatprep.subr.mxu0 0.0
        %1139 = vmatpush1.msra.mxu0 0.0
        %1140 = vmatprep.subr.mxu0 0.0
        %1141 = vmatpush1.msra.mxu0 0.0
        %1142 = vmatprep.subr.mxu0 0.0
        %1143 = vmatpush1.msra.mxu0 0.0
        %1144 = vmatprep.subr.mxu0 0.0
        %1145 = vmatpush1.msra.mxu0 0.0
        %1146 = vmatprep.subr.mxu0 0.0
        %1147 = vmatpush1.msra.mxu0 0.0
        %1148 = vmatprep.subr.mxu0 0.0
        %1149 = vmatpush1.msra.mxu0 0.0
        %1150 = vmatprep.subr.mxu0 0.0
        %1151 = vmatpush1.msra.mxu0 0.0
        %1152 = vmatprep.subr.mxu0 0.0
        %1153 = vmatpush1.msra.mxu0 0.0
        %1154 = vmatprep.subr.mxu0 0.0
        %1155 = vmatpush1.msra.mxu0 0.0
        %1156 = vmatprep.subr.mxu0 0.0
        %1157 = vmatpush1.msra.mxu0 0.0
        %1158 = vmatprep.subr.mxu0 0.0
        %1159 = vmatpush1.msra.mxu0 0.0
        %1160 = vmatprep.subr.mxu0 0.0
        %1161 = vmatpush1.msra.mxu0 0.0
        %1162 = vmatprep.subr.mxu0 0.0
        %1163 = vmatpush1.msra.mxu0 0.0
        %1164 = vmatprep.subr.mxu0 0.0
        %1165 = vmatpush1.msra.mxu0 0.0
        %1166 = vmatprep.subr.mxu0 0.0
        %1167 = vmatpush1.msra.mxu0 0.0
        %1168 = vmatprep.subr.mxu0 0.0
        %1169 = vmatpush1.msra.mxu0 0.0
        %1170 = vmatprep.subr.mxu0 0.0
        %1171 = vmatpush1.msra.mxu0 0.0
        %1172 = vmatprep.subr.mxu0 0.0
        %1173 = vmatpush1.msra.mxu0 0.0
        %1174 = vmatprep.subr.mxu0 0.0
        %1175 = vmatpush1.msra.mxu0 0.0
        %1176 = vmatprep.subr.mxu0 0.0
        %1177 = vmatpush1.msra.mxu0 0.0
        %1178 = vmatprep.subr.mxu0 0.0
        %1179 = vmatpush1.msra.mxu0 0.0
        %1180 = vmatprep.subr.mxu0 0.0
        %1181 = vmatpush1.msra.mxu0 0.0
        %1182 = vmatprep.subr.mxu0 0.0
        %1183 = vmatpush1.msra.mxu0 0.0
        %1184 = vmatprep.subr.mxu0 0.0
        %1185 = vmatpush1.msra.mxu0 0.0
        %1186 = vmatprep.subr.mxu0 0.0
        %1187 = vmatpush1.msra.mxu0 0.0
        %1188 = vmatprep.mubr.f32.mxu0 0.0
        %1189 = vmatmul.mubr.f32.gmra.mrb[0].mxu0 %v1119
        %v1190 = vpop.f32.mrb[0].mxu0
        %v1191 = vadd.f32 0.0, %v1190
        %v1192 = vpop.f32.mrb[0].mxu0
        %1193 = vmatprep.mubr.f32.mxu0 0.0
        %1194 = vmatmul.mubr.f32.gmra.mrb[0].mxu0 %v1122
        %v1195 = vpop.f32.mrb[0].mxu0
        %v1196 = vadd.f32 0.0, %v1195
        %v1197 = vpop.f32.mrb[0].mxu0
        %1198 = vdwg.mxu0
        %v1199 = vpack.c.bf16 %v1196, %v1191
        %1201 = vrot.lane.b32.xlu0 %v1199, 32
        %v1202 = vpop.permute.xlu0 %1201
        %vm1204 = vcmask 523520
        %1205 = vst.msk [vmem:[#allocation2] sm:$0xff] %vm1204, %v1202
        %1206 = vrot.lane.b32.xlu0 %v795, 64
        %v1207 = vpop.permute.xlu0 %1206
        %1208 = vrot.lane.b32.xlu0 %v796, 64
        %v1209 = vpop.permute.xlu0 %1208
        %1210 = vrot.lane.b32.xlu0 %v801, 64
        %v1211 = vpop.permute.xlu0 %1210
        %1212 = vrot.lane.b32.xlu0 %v802, 64
        %v1213 = vpop.permute.xlu0 %1212
        %v1214 = vsel %vm803, %v1207, 0
        %v1216 = vsel %vm803, %v1209, 0
        %v1218 = vsel %vm803, %v1211, 0
        %v1220 = vsel %vm803, %v1213, 0
        %1222 = vmatprep.subr.mxu0 0.0
        %1223 = vmatpush1.xpose.msra.mxu0 %v1218
        %1224 = vmatprep.subr.mxu0 0.0
        %1225 = vmatpush1.xpose.msra.mxu0 %v1220
        %1226 = vmatprep.subr.mxu0 0.0
        %1227 = vmatpush1.xpose.msra.mxu0 0.0
        %1228 = vmatprep.subr.mxu0 0.0
        %1229 = vmatpush1.xpose.msra.mxu0 0.0
        %1230 = vmatprep.subr.mxu0 0.0
        %1231 = vmatpush1.xpose.msra.mxu0 0.0
        %1232 = vmatprep.subr.mxu0 0.0
        %1233 = vmatpush1.xpose.msra.mxu0 0.0
        %1234 = vmatprep.subr.mxu0 0.0
        %1235 = vmatpush1.xpose.msra.mxu0 0.0
        %1236 = vmatprep.subr.mxu0 0.0
        %1237 = vmatpush1.xpose.msra.mxu0 0.0
        %1238 = vmatprep.subr.mxu0 0.0
        %1239 = vmatpush1.xpose.msra.mxu0 0.0
        %1240 = vmatprep.subr.mxu0 0.0
        %1241 = vmatpush1.xpose.msra.mxu0 0.0
        %1242 = vmatprep.subr.mxu0 0.0
        %1243 = vmatpush1.xpose.msra.mxu0 0.0
        %1244 = vmatprep.subr.mxu0 0.0
        %1245 = vmatpush1.xpose.msra.mxu0 0.0
        %1246 = vmatprep.subr.mxu0 0.0
        %1247 = vmatpush1.xpose.msra.mxu0 0.0
        %1248 = vmatprep.subr.mxu0 0.0
        %1249 = vmatpush1.xpose.msra.mxu0 0.0
        %1250 = vmatprep.subr.mxu0 0.0
        %1251 = vmatpush1.xpose.msra.mxu0 0.0
        %1252 = vmatprep.subr.mxu0 0.0
        %1253 = vmatpush1.xpose.msra.mxu0 0.0
        %1254 = vmatprep.subr.mxu0 0.0
        %1255 = vmatpush1.xpose.msra.mxu0 0.0
        %1256 = vmatprep.subr.mxu0 0.0
        %1257 = vmatpush1.xpose.msra.mxu0 0.0
        %1258 = vmatprep.subr.mxu0 0.0
        %1259 = vmatpush1.xpose.msra.mxu0 0.0
        %1260 = vmatprep.subr.mxu0 0.0
        %1261 = vmatpush1.xpose.msra.mxu0 0.0
        %1262 = vmatprep.subr.mxu0 0.0
        %1263 = vmatpush1.xpose.msra.mxu0 0.0
        %1264 = vmatprep.subr.mxu0 0.0
        %1265 = vmatpush1.xpose.msra.mxu0 0.0
        %1266 = vmatprep.subr.mxu0 0.0
        %1267 = vmatpush1.xpose.msra.mxu0 0.0
        %1268 = vmatprep.subr.mxu0 0.0
        %1269 = vmatpush1.xpose.msra.mxu0 0.0
        %1270 = vmatprep.subr.mxu0 0.0
        %1271 = vmatpush1.xpose.msra.mxu0 0.0
        %1272 = vmatprep.subr.mxu0 0.0
        %1273 = vmatpush1.xpose.msra.mxu0 0.0
        %1274 = vmatprep.subr.mxu0 0.0
        %1275 = vmatpush1.xpose.msra.mxu0 0.0
        %1276 = vmatprep.subr.mxu0 0.0
        %1277 = vmatpush1.xpose.msra.mxu0 0.0
        %1278 = vmatprep.subr.mxu0 0.0
        %1279 = vmatpush1.xpose.msra.mxu0 0.0
        %1280 = vmatprep.subr.mxu0 0.0
        %1281 = vmatpush1.xpose.msra.mxu0 0.0
        %1282 = vmatprep.subr.mxu0 0.0
        %1283 = vmatpush1.xpose.msra.mxu0 0.0
        %1284 = vmatprep.subr.mxu0 0.0
        %1285 = vmatpush1.xpose.msra.mxu0 0.0
        %1286 = vmatprep.mubr.f32.mxu0 0.0
        %1287 = vmatmul.mubr.f32.gmra.mrb[0].mxu0 %v1214
        %v1288 = vpop.f32.mrb[0].mxu0
        %v1289 = vadd.f32 %v364, %v1288
        %v1290 = vpop.f32.mrb[0].mxu0
        %1291 = vmatprep.mubr.f32.mxu0 0.0
        %1292 = vmatmul.mubr.f32.gmra.mrb[0].mxu0 %v1216
        %v1293 = vpop.f32.mrb[0].mxu0
        %v1294 = vadd.f32 %v365, %v1293
        %v1295 = vpop.f32.mrb[0].mxu0
        %1296 = vdwg.mxu0
        %v1297 = vsel %vm891, %v1289, -inf
        %1298 = vmax.xlane.f32.xlu0 %v1297
        %v1299 = vpop.xlane.xlu0 %1298
        %v1300 = vsel %vm891, %v1294, -inf
        %1301 = vmax.xlane.f32.xlu0 %v1300
        %v1302 = vpop.xlane.xlu0 %1301
        %v1303 = vsub.f32 %v1289, %v1299
        %v1304 = vsub.f32 %v1294, %v1302
        %v1305 = vmul.f32 %v1303, 1.442695
        %v1306 = vpow.pop %v1305
        %v1307 = vmul.f32 %v1304, 1.442695
        %v1308 = vpow.pop %v1307
        %v1309 = vsel %vm891, %v1306, 0.0
        %1310 = vadd.xlane.f32.xlu0 %v1309
        %v1311 = vpop.xlane.xlu0 %1310
        %v1312 = vsel %vm891, %v1308, 0.0
        %1313 = vadd.xlane.f32.xlu0 %v1312
        %v1314 = vpop.xlane.xlu0 %1313
        %v1315 = vrcp.pop %v1311
        %v1316 = vrcp.pop %v1314
        %v1317 = vmul.f32 %v1306, %v1315
        %v1318 = vmul.f32 %v1308, %v1316
        %1319 = vrot.lane.b32.xlu0 %v785, 64
        %v1320 = vpop.permute.xlu0 %1319
        %1321 = vrot.lane.b32.xlu0 %v788, 64
        %v1322 = vpop.permute.xlu0 %1321
        %v1326 = vsel %vm891, %v1317, 0
        %v1329 = vsel %vm891, %v1318, 0
        %1331 = vmatprep.subr.mxu0 0.0
        %1332 = vmatpush1.msra.mxu0 %v1320
        %1333 = vmatprep.subr.mxu0 0.0
        %1334 = vmatpush1.msra.mxu0 %v1322
        %1335 = vmatprep.subr.mxu0 0.0
        %1336 = vmatpush1.msra.mxu0 0.0
        %1337 = vmatprep.subr.mxu0 0.0
        %1338 = vmatpush1.msra.mxu0 0.0
        %1339 = vmatprep.subr.mxu0 0.0
        %1340 = vmatpush1.msra.mxu0 0.0
        %1341 = vmatprep.subr.mxu0 0.0
        %1342 = vmatpush1.msra.mxu0 0.0
        %1343 = vmatprep.subr.mxu0 0.0
        %1344 = vmatpush1.msra.mxu0 0.0
        %1345 = vmatprep.subr.mxu0 0.0
        %1346 = vmatpush1.msra.mxu0 0.0
        %1347 = vmatprep.subr.mxu0 0.0
        %1348 = vmatpush1.msra.mxu0 0.0
        %1349 = vmatprep.subr.mxu0 0.0
        %1350 = vmatpush1.msra.mxu0 0.0
        %1351 = vmatprep.subr.mxu0 0.0
        %1352 = vmatpush1.msra.mxu0 0.0
        %1353 = vmatprep.subr.mxu0 0.0
        %1354 = vmatpush1.msra.mxu0 0.0
        %1355 = vmatprep.subr.mxu0 0.0
        %1356 = vmatpush1.msra.mxu0 0.0
        %1357 = vmatprep.subr.mxu0 0.0
        %1358 = vmatpush1.msra.mxu0 0.0
        %1359 = vmatprep.subr.mxu0 0.0
        %1360 = vmatpush1.msra.mxu0 0.0
        %1361 = vmatprep.subr.mxu0 0.0
        %1362 = vmatpush1.msra.mxu0 0.0
        %1363 = vmatprep.subr.mxu0 0.0
        %1364 = vmatpush1.msra.mxu0 0.0
        %1365 = vmatprep.subr.mxu0 0.0
        %1366 = vmatpush1.msra.mxu0 0.0
        %1367 = vmatprep.subr.mxu0 0.0
        %1368 = vmatpush1.msra.mxu0 0.0
        %1369 = vmatprep.subr.mxu0 0.0
        %1370 = vmatpush1.msra.mxu0 0.0
        %1371 = vmatprep.subr.mxu0 0.0
        %1372 = vmatpush1.msra.mxu0 0.0
        %1373 = vmatprep.subr.mxu0 0.0
        %1374 = vmatpush1.msra.mxu0 0.0
        %1375 = vmatprep.subr.mxu0 0.0
        %1376 = vmatpush1.msra.mxu0 0.0
        %1377 = vmatprep.subr.mxu0 0.0
        %1378 = vmatpush1.msra.mxu0 0.0
        %1379 = vmatprep.subr.mxu0 0.0
        %1380 = vmatpush1.msra.mxu0 0.0
        %1381 = vmatprep.subr.mxu0 0.0
        %1382 = vmatpush1.msra.mxu0 0.0
        %1383 = vmatprep.subr.mxu0 0.0
        %1384 = vmatpush1.msra.mxu0 0.0
        %1385 = vmatprep.subr.mxu0 0.0
        %1386 = vmatpush1.msra.mxu0 0.0
        %1387 = vmatprep.subr.mxu0 0.0
        %1388 = vmatpush1.msra.mxu0 0.0
        %1389 = vmatprep.subr.mxu0 0.0
        %1390 = vmatpush1.msra.mxu0 0.0
        %1391 = vmatprep.subr.mxu0 0.0
        %1392 = vmatpush1.msra.mxu0 0.0
        %1393 = vmatprep.subr.mxu0 0.0
        %1394 = vmatpush1.msra.mxu0 0.0
        %1395 = vmatprep.mubr.f32.mxu0 0.0
        %1396 = vmatmul.mubr.f32.gmra.mrb[0].mxu0 %v1326
        %v1397 = vpop.f32.mrb[0].mxu0
        %v1398 = vadd.f32 0.0, %v1397
        %v1399 = vpop.f32.mrb[0].mxu0
        %1400 = vmatprep.mubr.f32.mxu0 0.0
        %1401 = vmatmul.mubr.f32.gmra.mrb[0].mxu0 %v1329
        %v1402 = vpop.f32.mrb[0].mxu0
        %v1403 = vadd.f32 0.0, %v1402
        %v1404 = vpop.f32.mrb[0].mxu0
        %1405 = vdwg.mxu0
        %v1406 = vpack.c.bf16 %v1403, %v1398
        %1408 = vrot.lane.b32.xlu0 %v1406, 64
        %v1409 = vpop.permute.xlu0 %1408
        %vm1411 = vcmask 785920
        %1412 = vst.msk [vmem:[#allocation2] sm:$0xff] %vm1411, %v1409
        %1413 = vrot.lane.b32.xlu0 %v795, 32
        %v1414 = vpop.permute.xlu0 %1413
        %1415 = vrot.lane.b32.xlu0 %v796, 32
        %v1416 = vpop.permute.xlu0 %1415
        %1417 = vrot.lane.b32.xlu0 %v801, 32
        %v1418 = vpop.permute.xlu0 %1417
        %1419 = vrot.lane.b32.xlu0 %v802, 32
        %v1420 = vpop.permute.xlu0 %1419
        %v1421 = vsel %vm803, %v1414, 0
        %v1423 = vsel %vm803, %v1416, 0
        %v1425 = vsel %vm803, %v1418, 0
        %v1427 = vsel %vm803, %v1420, 0
        %1429 = vmatprep.subr.mxu0 0.0
        %1430 = vmatpush1.xpose.msra.mxu0 %v1425
        %1431 = vmatprep.subr.mxu0 0.0
        %1432 = vmatpush1.xpose.msra.mxu0 %v1427
        %1433 = vmatprep.subr.mxu0 0.0
        %1434 = vmatpush1.xpose.msra.mxu0 0.0
        %1435 = vmatprep.subr.mxu0 0.0
        %1436 = vmatpush1.xpose.msra.mxu0 0.0
        %1437 = vmatprep.subr.mxu0 0.0
        %1438 = vmatpush1.xpose.msra.mxu0 0.0
        %1439 = vmatprep.subr.mxu0 0.0
        %1440 = vmatpush1.xpose.msra.mxu0 0.0
        %1441 = vmatprep.subr.mxu0 0.0
        %1442 = vmatpush1.xpose.msra.mxu0 0.0
        %1443 = vmatprep.subr.mxu0 0.0
        %1444 = vmatpush1.xpose.msra.mxu0 0.0
        %1445 = vmatprep.subr.mxu0 0.0
        %1446 = vmatpush1.xpose.msra.mxu0 0.0
        %1447 = vmatprep.subr.mxu0 0.0
        %1448 = vmatpush1.xpose.msra.mxu0 0.0
        %1449 = vmatprep.subr.mxu0 0.0
        %1450 = vmatpush1.xpose.msra.mxu0 0.0
        %1451 = vmatprep.subr.mxu0 0.0
        %1452 = vmatpush1.xpose.msra.mxu0 0.0
        %1453 = vmatprep.subr.mxu0 0.0
        %1454 = vmatpush1.xpose.msra.mxu0 0.0
        %1455 = vmatprep.subr.mxu0 0.0
        %1456 = vmatpush1.xpose.msra.mxu0 0.0
        %1457 = vmatprep.subr.mxu0 0.0
        %1458 = vmatpush1.xpose.msra.mxu0 0.0
        %1459 = vmatprep.subr.mxu0 0.0
        %1460 = vmatpush1.xpose.msra.mxu0 0.0
        %1461 = vmatprep.subr.mxu0 0.0
        %1462 = vmatpush1.xpose.msra.mxu0 0.0
        %1463 = vmatprep.subr.mxu0 0.0
        %1464 = vmatpush1.xpose.msra.mxu0 0.0
        %1465 = vmatprep.subr.mxu0 0.0
        %1466 = vmatpush1.xpose.msra.mxu0 0.0
        %1467 = vmatprep.subr.mxu0 0.0
        %1468 = vmatpush1.xpose.msra.mxu0 0.0
        %1469 = vmatprep.subr.mxu0 0.0
        %1470 = vmatpush1.xpose.msra.mxu0 0.0
        %1471 = vmatprep.subr.mxu0 0.0
        %1472 = vmatpush1.xpose.msra.mxu0 0.0
        %1473 = vmatprep.subr.mxu0 0.0
        %1474 = vmatpush1.xpose.msra.mxu0 0.0
        %1475 = vmatprep.subr.mxu0 0.0
        %1476 = vmatpush1.xpose.msra.mxu0 0.0
        %1477 = vmatprep.subr.mxu0 0.0
        %1478 = vmatpush1.xpose.msra.mxu0 0.0
        %1479 = vmatprep.subr.mxu0 0.0
        %1480 = vmatpush1.xpose.msra.mxu0 0.0
        %1481 = vmatprep.subr.mxu0 0.0
        %1482 = vmatpush1.xpose.msra.mxu0 0.0
        %1483 = vmatprep.subr.mxu0 0.0
        %1484 = vmatpush1.xpose.msra.mxu0 0.0
        %1485 = vmatprep.subr.mxu0 0.0
        %1486 = vmatpush1.xpose.msra.mxu0 0.0
        %1487 = vmatprep.subr.mxu0 0.0
        %1488 = vmatpush1.xpose.msra.mxu0 0.0
        %1489 = vmatprep.subr.mxu0 0.0
        %1490 = vmatpush1.xpose.msra.mxu0 0.0
        %1491 = vmatprep.subr.mxu0 0.0
        %1492 = vmatpush1.xpose.msra.mxu0 0.0
        %1493 = vmatprep.mubr.f32.mxu0 0.0
        %1494 = vmatmul.mubr.f32.gmra.mrb[0].mxu0 %v1421
        %v1495 = vpop.f32.mrb[0].mxu0
        %v1496 = vadd.f32 %v364, %v1495
        %v1497 = vpop.f32.mrb[0].mxu0
        %1498 = vmatprep.mubr.f32.mxu0 0.0
        %1499 = vmatmul.mubr.f32.gmra.mrb[0].mxu0 %v1423
        %v1500 = vpop.f32.mrb[0].mxu0
        %v1501 = vadd.f32 %v365, %v1500
        %v1502 = vpop.f32.mrb[0].mxu0
        %1503 = vdwg.mxu0
        %v1504 = vsel %vm891, %v1496, -inf
        %1505 = vmax.xlane.f32.xlu0 %v1504
        %v1506 = vpop.xlane.xlu0 %1505
        %v1507 = vsel %vm891, %v1501, -inf
        %1508 = vmax.xlane.f32.xlu0 %v1507
        %v1509 = vpop.xlane.xlu0 %1508
        %v1510 = vsub.f32 %v1496, %v1506
        %v1511 = vsub.f32 %v1501, %v1509
        %v1512 = vmul.f32 %v1510, 1.442695
        %v1513 = vpow.pop %v1512
        %v1514 = vmul.f32 %v1511, 1.442695
        %v1515 = vpow.pop %v1514
        %v1516 = vsel %vm891, %v1513, 0.0
        %1517 = vadd.xlane.f32.xlu0 %v1516
        %v1518 = vpop.xlane.xlu0 %1517
        %v1519 = vsel %vm891, %v1515, 0.0
        %1520 = vadd.xlane.f32.xlu0 %v1519
        %v1521 = vpop.xlane.xlu0 %1520
        %v1522 = vrcp.pop %v1518
        %v1523 = vrcp.pop %v1521
        %v1524 = vmul.f32 %v1513, %v1522
        %v1525 = vmul.f32 %v1515, %v1523
        %1526 = vrot.lane.b32.xlu0 %v785, 32
        %v1527 = vpop.permute.xlu0 %1526
        %1528 = vrot.lane.b32.xlu0 %v788, 32
        %v1529 = vpop.permute.xlu0 %1528
        %v1533 = vsel %vm891, %v1524, 0
        %v1536 = vsel %vm891, %v1525, 0
        %1538 = vmatprep.subr.mxu0 0.0
        %1539 = vmatpush1.msra.mxu0 %v1527
        %1540 = vmatprep.subr.mxu0 0.0
        %1541 = vmatpush1.msra.mxu0 %v1529
        %1542 = vmatprep.subr.mxu0 0.0
        %1543 = vmatpush1.msra.mxu0 0.0
        %1544 = vmatprep.subr.mxu0 0.0
        %1545 = vmatpush1.msra.mxu0 0.0
        %1546 = vmatprep.subr.mxu0 0.0
        %1547 = vmatpush1.msra.mxu0 0.0
        %1548 = vmatprep.subr.mxu0 0.0
        %1549 = vmatpush1.msra.mxu0 0.0
        %1550 = vmatprep.subr.mxu0 0.0
        %1551 = vmatpush1.msra.mxu0 0.0
        %1552 = vmatprep.subr.mxu0 0.0
        %1553 = vmatpush1.msra.mxu0 0.0
        %1554 = vmatprep.subr.mxu0 0.0
        %1555 = vmatpush1.msra.mxu0 0.0
        %1556 = vmatprep.subr.mxu0 0.0
        %1557 = vmatpush1.msra.mxu0 0.0
        %1558 = vmatprep.subr.mxu0 0.0
        %1559 = vmatpush1.msra.mxu0 0.0
        %1560 = vmatprep.subr.mxu0 0.0
        %1561 = vmatpush1.msra.mxu0 0.0
        %1562 = vmatprep.subr.mxu0 0.0
        %1563 = vmatpush1.msra.mxu0 0.0
        %1564 = vmatprep.subr.mxu0 0.0
        %1565 = vmatpush1.msra.mxu0 0.0
        %1566 = vmatprep.subr.mxu0 0.0
        %1567 = vmatpush1.msra.mxu0 0.0
        %1568 = vmatprep.subr.mxu0 0.0
        %1569 = vmatpush1.msra.mxu0 0.0
        %1570 = vmatprep.subr.mxu0 0.0
        %1571 = vmatpush1.msra.mxu0 0.0
        %1572 = vmatprep.subr.mxu0 0.0
        %1573 = vmatpush1.msra.mxu0 0.0
        %1574 = vmatprep.subr.mxu0 0.0
        %1575 = vmatpush1.msra.mxu0 0.0
        %1576 = vmatprep.subr.mxu0 0.0
        %1577 = vmatpush1.msra.mxu0 0.0
        %1578 = vmatprep.subr.mxu0 0.0
        %1579 = vmatpush1.msra.mxu0 0.0
        %1580 = vmatprep.subr.mxu0 0.0
        %1581 = vmatpush1.msra.mxu0 0.0
        %1582 = vmatprep.subr.mxu0 0.0
        %1583 = vmatpush1.msra.mxu0 0.0
        %1584 = vmatprep.subr.mxu0 0.0
        %1585 = vmatpush1.msra.mxu0 0.0
        %1586 = vmatprep.subr.mxu0 0.0
        %1587 = vmatpush1.msra.mxu0 0.0
        %1588 = vmatprep.subr.mxu0 0.0
        %1589 = vmatpush1.msra.mxu0 0.0
        %1590 = vmatprep.subr.mxu0 0.0
        %1591 = vmatpush1.msra.mxu0 0.0
        %1592 = vmatprep.subr.mxu0 0.0
        %1593 = vmatpush1.msra.mxu0 0.0
        %1594 = vmatprep.subr.mxu0 0.0
        %1595 = vmatpush1.msra.mxu0 0.0
        %1596 = vmatprep.subr.mxu0 0.0
        %1597 = vmatpush1.msra.mxu0 0.0
        %1598 = vmatprep.subr.mxu0 0.0
        %1599 = vmatpush1.msra.mxu0 0.0
        %1600 = vmatprep.subr.mxu0 0.0
        %1601 = vmatpush1.msra.mxu0 0.0
        %1602 = vmatprep.mubr.f32.mxu0 0.0
        %1603 = vmatmul.mubr.f32.gmra.mrb[0].mxu0 %v1533
        %v1604 = vpop.f32.mrb[0].mxu0
        %v1605 = vadd.f32 0.0, %v1604
        %v1606 = vpop.f32.mrb[0].mxu0
        %1607 = vmatprep.mubr.f32.mxu0 0.0
        %1608 = vmatmul.mubr.f32.gmra.mrb[0].mxu0 %v1536
        %v1609 = vpop.f32.mrb[0].mxu0
        %v1610 = vadd.f32 0.0, %v1609
        %v1611 = vpop.f32.mrb[0].mxu0
        %1612 = vdwg.mxu0
        %v1613 = vpack.c.bf16 %v1610, %v1605
        %1615 = vrot.lane.b32.xlu0 %v1613, 96
        %v1616 = vpop.permute.xlu0 %1615
        %vm1618 = vcmask 1048320
        %1619 = vst.msk [vmem:[#allocation2] sm:$0xff] %vm1618, %v1616
        %v1620 = vld [vmem:[#allocation2] sm:$0xff]
        %v1621 = vld [vmem:[%s6] sm:$0xf]
        %v1622 = vld [vmem:[%s6 + $0x4] sm:$0xf]
        %v1623 = vld [vmem:[%s6 + $0x8] sm:$0xf]
        %v1624 = vld [vmem:[%s6 + $0xc] sm:$0xf]
        %v1625 = vld [vmem:[%s6 + $0x10] sm:$0xf]
        %v1626 = vld [vmem:[%s6 + $0x14] sm:$0xf]
        %v1627 = vld [vmem:[%s6 + $0x18] sm:$0xf]
        %v1628 = vld [vmem:[%s6 + $0x1c] sm:$0xf]
        %v1629 = vld [vmem:[%s6 + $0x20] sm:$0xf]
        %v1630 = vld [vmem:[%s6 + $0x24] sm:$0xf]
        %v1631 = vld [vmem:[%s6 + $0x28] sm:$0xf]
        %v1632 = vld [vmem:[%s6 + $0x2c] sm:$0xf]
        %v1633 = vld [vmem:[%s6 + $0x30] sm:$0xf]
        %v1634 = vld [vmem:[%s6 + $0x34] sm:$0xf]
        %v1635 = vld [vmem:[%s6 + $0x38] sm:$0xf]
        %v1636 = vld [vmem:[%s6 + $0x3c] sm:$0xf]
        %v1653 = vunpack.c.l.b16 %v1621
        %v1654 = vunpack.c.l.b16 %v1622
        %v1655 = vunpack.c.l.b16 %v1623
        %v1656 = vunpack.c.l.b16 %v1624
        %v1657 = vunpack.c.l.b16 %v1625
        %v1658 = vunpack.c.l.b16 %v1626
        %v1659 = vunpack.c.l.b16 %v1627
        %v1660 = vunpack.c.l.b16 %v1628
        %v1661 = vunpack.c.l.b16 %v1629
        %v1662 = vunpack.c.l.b16 %v1630
        %v1663 = vunpack.c.l.b16 %v1631
        %v1664 = vunpack.c.l.b16 %v1632
        %v1665 = vunpack.c.l.b16 %v1633
        %v1666 = vunpack.c.l.b16 %v1634
        %v1667 = vunpack.c.l.b16 %v1635
        %v1668 = vunpack.c.l.b16 %v1636
        %v1669 = vpack.c.b16 %v1654, %v1653
        %v1670 = vpack.c.b16 %v1656, %v1655
        %v1671 = vpack.c.b16 %v1658, %v1657
        %v1672 = vpack.c.b16 %v1660, %v1659
        %v1673 = vpack.c.b16 %v1662, %v1661
        %v1674 = vpack.c.b16 %v1664, %v1663
        %v1675 = vpack.c.b16 %v1666, %v1665
        %v1676 = vpack.c.b16 %v1668, %v1667
        %1685 = vmatprep.subr.bf16.mxu0 0
        %1686 = vmatpush1.bf16.msra.mxu0 %v1669
        %1687 = vmatprep.subr.bf16.mxu0 0
        %1688 = vmatpush1.bf16.msra.mxu0 %v1670
        %1689 = vmatprep.subr.bf16.mxu0 0
        %1690 = vmatpush1.bf16.msra.mxu0 %v1671
        %1691 = vmatprep.subr.bf16.mxu0 0
        %1692 = vmatpush1.bf16.msra.mxu0 %v1672
        %1693 = vmatprep.subr.bf16.mxu0 0
        %1694 = vmatpush1.bf16.msra.mxu0 %v1673
        %1695 = vmatprep.subr.bf16.mxu0 0
        %1696 = vmatpush1.bf16.msra.mxu0 %v1674
        %1697 = vmatprep.subr.bf16.mxu0 0
        %1698 = vmatpush1.bf16.msra.mxu0 %v1675
        %1699 = vmatprep.subr.bf16.mxu0 0
        %1700 = vmatpush1.bf16.msra.mxu0 %v1676
        %1701 = vmatprep.subr.bf16.mxu0 0
        %1702 = vmatpush1.bf16.msra.mxu0 0
        %1703 = vmatprep.subr.bf16.mxu0 0
        %1704 = vmatpush1.bf16.msra.mxu0 0
        %1705 = vmatprep.subr.bf16.mxu0 0
        %1706 = vmatpush1.bf16.msra.mxu0 0
        %1707 = vmatprep.subr.bf16.mxu0 0
        %1708 = vmatpush1.bf16.msra.mxu0 0
        %1709 = vmatprep.subr.bf16.mxu0 0
        %1710 = vmatpush1.bf16.msra.mxu0 0
        %1711 = vmatprep.subr.bf16.mxu0 0
        %1712 = vmatpush1.bf16.msra.mxu0 0
        %1713 = vmatprep.subr.bf16.mxu0 0
        %1714 = vmatpush1.bf16.msra.mxu0 0
        %1715 = vmatprep.subr.bf16.mxu0 0
        %1716 = vmatpush1.bf16.msra.mxu0 0
        %1717 = vmatprep.mubr.bf16.mxu0 0
        %1718 = vmatmul.mubr.bf16.gmra.mrb[0].mxu0 %v1620
        %v1719 = vpop.f32.mrb[0].mxu0
        %v1720 = vadd.f32 0.0, %v1719
        %v1721 = vpop.f32.mrb[0].mxu0
        %v1722 = vpop.f32.mrb[0].mxu0
        %v1723 = vadd.f32 0.0, %v1722
        %v1724 = vpop.f32.mrb[0].mxu0
        %1725 = vdwg.mxu0
        %v1726 = vadd.f32 %v362, %v1720
        %v1727 = vadd.f32 %v363, %v1723
        %1728 = vadd.xlane.f32.xlu0 %v1726
        %v1729 = vpop.xlane.xlu0 %1728
        %1730 = vadd.xlane.f32.xlu0 %v1727
        %v1731 = vpop.xlane.xlu0 %1730
        %v1732 = vmul.f32 %v1729, %v376
        %v1733 = vmul.f32 %v1731, %v376
        %v1734 = vsub.f32 %v1726, %v1732
        %v1735 = vsub.f32 %v1727, %v1733
        %v1736 = vmul.f32 %v1734, %v1734
        %v1737 = vmul.f32 %v1735, %v1735
        %1738 = vadd.xlane.f32.xlu0 %v1736
        %v1739 = vpop.xlane.xlu0 %1738
        %1740 = vadd.xlane.f32.xlu0 %v1737
        %v1741 = vpop.xlane.xlu0 %1740
        %v1742 = vmul.f32 %v1739, %v376
        %v1743 = vmul.f32 %v1741, %v376
        %v1744 = vadd.f32 %v1742, 1e-05
        %v1745 = vadd.f32 %v1743, 1e-05
        %v1746 = vrsqrt.pop %v1744
        %v1747 = vrsqrt.pop %v1745
        %v1748 = vmul.f32 %v1734, %v1746
        %v1749 = vmul.f32 %v1735, %v1747
        %v1750 = vlaneseq
        %v1751 = vshrl.u32 %v1750, 7
        %v1752 = vsub.s32 2, %v1751
        %v1753 = vrot.slane %v371, %v1752
        %v1754 = vmul.f32 %v1748, %v1753
        %v1755 = vmul.f32 %v1749, %v1753
        %v1756 = vlaneseq
        %v1757 = vshrl.u32 %v1756, 7
        %v1758 = vsub.s32 3, %v1757
        %v1759 = vrot.slane %v371, %v1758
        %v1760 = vadd.f32 %v1754, %v1759
        %v1761 = vadd.f32 %v1755, %v1759
        %v1762 = vpack.c.bf16 %v1761, %v1760
        %v1763 = vld [vmem:[%s7] sm:$0xff]
        %v1764 = vld [vmem:[%s7 + $0x8] sm:$0xff]
        %v1765 = vld [vmem:[%s7 + $0x10] sm:$0xff]
        %v1766 = vld [vmem:[%s7 + $0x18] sm:$0xff]
        %v1767 = vld [vmem:[%s7 + $0x20] sm:$0xff]
        %v1768 = vld [vmem:[%s7 + $0x28] sm:$0xff]
        %v1769 = vld [vmem:[%s7 + $0x30] sm:$0xff]
        %v1770 = vld [vmem:[%s7 + $0x38] sm:$0xff]
        %v1771 = vld [vmem:[%s7 + $0x40] sm:$0xff]
        %v1772 = vld [vmem:[%s7 + $0x48] sm:$0xff]
        %v1773 = vld [vmem:[%s7 + $0x50] sm:$0xff]
        %v1774 = vld [vmem:[%s7 + $0x58] sm:$0xff]
        %v1775 = vld [vmem:[%s7 + $0x60] sm:$0xff]
        %v1776 = vld [vmem:[%s7 + $0x68] sm:$0xff]
        %v1777 = vld [vmem:[%s7 + $0x70] sm:$0xff]
        %v1778 = vld [vmem:[%s7 + $0x78] sm:$0xff]
        %v1779 = vld [vmem:[%s7 + $0x80] sm:$0xff]
        %v1780 = vld [vmem:[%s7 + $0x88] sm:$0xff]
        %v1781 = vld [vmem:[%s7 + $0x90] sm:$0xff]
        %v1782 = vld [vmem:[%s7 + $0x98] sm:$0xff]
        %v1783 = vld [vmem:[%s7 + $0xa0] sm:$0xff]
        %v1784 = vld [vmem:[%s7 + $0xa8] sm:$0xff]
        %v1785 = vld [vmem:[%s7 + $0xb0] sm:$0xff]
        %v1786 = vld [vmem:[%s7 + $0xb8] sm:$0xff]
        %v1787 = vld [vmem:[%s7 + $0xc0] sm:$0xff]
        %v1788 = vld [vmem:[%s7 + $0xc8] sm:$0xff]
        %v1789 = vld [vmem:[%s7 + $0xd0] sm:$0xff]
        %v1790 = vld [vmem:[%s7 + $0xd8] sm:$0xff]
        %v1791 = vld [vmem:[%s7 + $0xe0] sm:$0xff]
        %v1792 = vld [vmem:[%s7 + $0xe8] sm:$0xff]
        %v1793 = vld [vmem:[%s7 + $0xf0] sm:$0xff]
        %v1794 = vld [vmem:[%s7 + $0xf8] sm:$0xff]
        %v1827 = vunpack.c.l.b16 %v1763
        %v1828 = vunpack.c.h.b16 %v1763
        %v1829 = vunpack.c.l.b16 %v1764
        %v1830 = vunpack.c.h.b16 %v1764
        %v1831 = vunpack.c.l.b16 %v1765
        %v1832 = vunpack.c.h.b16 %v1765
        %v1833 = vunpack.c.l.b16 %v1766
        %v1834 = vunpack.c.h.b16 %v1766
        %v1835 = vunpack.c.l.b16 %v1767
        %v1836 = vunpack.c.h.b16 %v1767
        %v1837 = vunpack.c.l.b16 %v1768
        %v1838 = vunpack.c.h.b16 %v1768
        %v1839 = vunpack.c.l.b16 %v1769
        %v1840 = vunpack.c.h.b16 %v1769
        %v1841 = vunpack.c.l.b16 %v1770
        %v1842 = vunpack.c.h.b16 %v1770
        %v1843 = vunpack.c.l.b16 %v1771
        %v1844 = vunpack.c.h.b16 %v1771
        %v1845 = vunpack.c.l.b16 %v1772
        %v1846 = vunpack.c.h.b16 %v1772
        %v1847 = vunpack.c.l.b16 %v1773
        %v1848 = vunpack.c.h.b16 %v1773
        %v1849 = vunpack.c.l.b16 %v1774
        %v1850 = vunpack.c.h.b16 %v1774
        %v1851 = vunpack.c.l.b16 %v1775
        %v1852 = vunpack.c.h.b16 %v1775
        %v1853 = vunpack.c.l.b16 %v1776
        %v1854 = vunpack.c.h.b16 %v1776
        %v1855 = vunpack.c.l.b16 %v1777
        %v1856 = vunpack.c.h.b16 %v1777
        %v1857 = vunpack.c.l.b16 %v1778
        %v1858 = vunpack.c.h.b16 %v1778
        %v1859 = vunpack.c.l.b16 %v1779
        %v1860 = vunpack.c.h.b16 %v1779
        %v1861 = vunpack.c.l.b16 %v1780
        %v1862 = vunpack.c.h.b16 %v1780
        %v1863 = vunpack.c.l.b16 %v1781
        %v1864 = vunpack.c.h.b16 %v1781
        %v1865 = vunpack.c.l.b16 %v1782
        %v1866 = vunpack.c.h.b16 %v1782
        %v1867 = vunpack.c.l.b16 %v1783
        %v1868 = vunpack.c.h.b16 %v1783
        %v1869 = vunpack.c.l.b16 %v1784
        %v1870 = vunpack.c.h.b16 %v1784
        %v1871 = vunpack.c.l.b16 %v1785
        %v1872 = vunpack.c.h.b16 %v1785
        %v1873 = vunpack.c.l.b16 %v1786
        %v1874 = vunpack.c.h.b16 %v1786
        %v1875 = vunpack.c.l.b16 %v1787
        %v1876 = vunpack.c.h.b16 %v1787
        %v1877 = vunpack.c.l.b16 %v1788
        %v1878 = vunpack.c.h.b16 %v1788
        %v1879 = vunpack.c.l.b16 %v1789
        %v1880 = vunpack.c.h.b16 %v1789
        %v1881 = vunpack.c.l.b16 %v1790
        %v1882 = vunpack.c.h.b16 %v1790
        %v1883 = vunpack.c.l.b16 %v1791
        %v1884 = vunpack.c.h.b16 %v1791
        %v1885 = vunpack.c.l.b16 %v1792
        %v1886 = vunpack.c.h.b16 %v1792
        %v1887 = vunpack.c.l.b16 %v1793
        %v1888 = vunpack.c.h.b16 %v1793
        %v1889 = vunpack.c.l.b16 %v1794
        %v1890 = vunpack.c.h.b16 %v1794
        %v1891 = vpack.c.b16 %v1831, %v1827
        %v1892 = vpack.c.b16 %v1832, %v1828
        %v1893 = vpack.c.b16 %v1833, %v1829
        %v1894 = vpack.c.b16 %v1834, %v1830
        %v1895 = vpack.c.b16 %v1839, %v1835
        %v1896 = vpack.c.b16 %v1840, %v1836
        %v1897 = vpack.c.b16 %v1841, %v1837
        %v1898 = vpack.c.b16 %v1842, %v1838
        %v1899 = vpack.c.b16 %v1847, %v1843
        %v1900 = vpack.c.b16 %v1848, %v1844
        %v1901 = vpack.c.b16 %v1849, %v1845
        %v1902 = vpack.c.b16 %v1850, %v1846
        %v1903 = vpack.c.b16 %v1855, %v1851
        %v1904 = vpack.c.b16 %v1856, %v1852
        %v1905 = vpack.c.b16 %v1857, %v1853
        %v1906 = vpack.c.b16 %v1858, %v1854
        %v1907 = vpack.c.b16 %v1863, %v1859
        %v1908 = vpack.c.b16 %v1864, %v1860
        %v1909 = vpack.c.b16 %v1865, %v1861
        %v1910 = vpack.c.b16 %v1866, %v1862
        %v1911 = vpack.c.b16 %v1871, %v1867
        %v1912 = vpack.c.b16 %v1872, %v1868
        %v1913 = vpack.c.b16 %v1873, %v1869
        %v1914 = vpack.c.b16 %v1874, %v1870
        %v1915 = vpack.c.b16 %v1879, %v1875
        %v1916 = vpack.c.b16 %v1880, %v1876
        %v1917 = vpack.c.b16 %v1881, %v1877
        %v1918 = vpack.c.b16 %v1882, %v1878
        %v1919 = vpack.c.b16 %v1887, %v1883
        %v1920 = vpack.c.b16 %v1888, %v1884
        %v1921 = vpack.c.b16 %v1889, %v1885
        %v1922 = vpack.c.b16 %v1890, %v1886
        %1955 = vmatprep.subr.bf16.mxu0 %v1892
        %1956 = vmatpush1.bf16.msra.mxu0 %v1891
        %1957 = vmatprep.subr.bf16.mxu0 %v1896
        %1958 = vmatpush1.bf16.msra.mxu0 %v1895
        %1959 = vmatprep.subr.bf16.mxu0 %v1900
        %1960 = vmatpush1.bf16.msra.mxu0 %v1899
        %1961 = vmatprep.subr.bf16.mxu0 %v1904
        %1962 = vmatpush1.bf16.msra.mxu0 %v1903
        %1963 = vmatprep.subr.bf16.mxu0 %v1908
        %1964 = vmatpush1.bf16.msra.mxu0 %v1907
        %1965 = vmatprep.subr.bf16.mxu0 %v1912
        %1966 = vmatpush1.bf16.msra.mxu0 %v1911
        %1967 = vmatprep.subr.bf16.mxu0 %v1916
        %1968 = vmatpush1.bf16.msra.mxu0 %v1915
        %1969 = vmatprep.subr.bf16.mxu0 %v1920
        %1970 = vmatpush1.bf16.msra.mxu0 %v1919
        %1971 = vmatprep.subr.bf16.mxu0 0
        %1972 = vmatpush1.bf16.msra.mxu0 0
        %1973 = vmatprep.subr.bf16.mxu0 0
        %1974 = vmatpush1.bf16.msra.mxu0 0
        %1975 = vmatprep.subr.bf16.mxu0 0
        %1976 = vmatpush1.bf16.msra.mxu0 0
        %1977 = vmatprep.subr.bf16.mxu0 0
        %1978 = vmatpush1.bf16.msra.mxu0 0
        %1979 = vmatprep.subr.bf16.mxu0 0
        %1980 = vmatpush1.bf16.msra.mxu0 0
        %1981 = vmatprep.subr.bf16.mxu0 0
        %1982 = vmatpush1.bf16.msra.mxu0 0
        %1983 = vmatprep.subr.bf16.mxu0 0
        %1984 = vmatpush1.bf16.msra.mxu0 0
        %1985 = vmatprep.subr.bf16.mxu0 0
        %1986 = vmatpush1.bf16.msra.mxu0 0
        %1987 = vmatprep.mubr.bf16.mxu0 0
        %1988 = vmatmul.mubr.bf16.gmra.mrb[0].mxu0 %v1762
        %v1989 = vpop.f32.mrb[0].mxu0
        %v1990 = vadd.f32 0.0, %v1989
        %v1991 = vpop.f32.mrb[0].mxu0
        %v1992 = vadd.f32 0.0, %v1991
        %v1993 = vpop.f32.mrb[0].mxu0
        %v1994 = vadd.f32 0.0, %v1993
        %v1995 = vpop.f32.mrb[0].mxu0
        %v1996 = vadd.f32 0.0, %v1995
        %1997 = vdwg.mxu0
        %1998 = vmatprep.subr.bf16.mxu0 %v1894
        %1999 = vmatpush1.bf16.msra.mxu0 %v1893
        %2000 = vmatprep.subr.bf16.mxu0 %v1898
        %2001 = vmatpush1.bf16.msra.mxu0 %v1897
        %2002 = vmatprep.subr.bf16.mxu0 %v1902
        %2003 = vmatpush1.bf16.msra.mxu0 %v1901
        %2004 = vmatprep.subr.bf16.mxu0 %v1906
        %2005 = vmatpush1.bf16.msra.mxu0 %v1905
        %2006 = vmatprep.subr.bf16.mxu0 %v1910
        %2007 = vmatpush1.bf16.msra.mxu0 %v1909
        %2008 = vmatprep.subr.bf16.mxu0 %v1914
        %2009 = vmatpush1.bf16.msra.mxu0 %v1913
        %2010 = vmatprep.subr.bf16.mxu0 %v1918
        %2011 = vmatpush1.bf16.msra.mxu0 %v1917
        %2012 = vmatprep.subr.bf16.mxu0 %v1922
        %2013 = vmatpush1.bf16.msra.mxu0 %v1921
        %2014 = vmatprep.subr.bf16.mxu0 0
        %2015 = vmatpush1.bf16.msra.mxu0 0
        %2016 = vmatprep.subr.bf16.mxu0 0
        %2017 = vmatpush1.bf16.msra.mxu0 0
        %2018 = vmatprep.subr.bf16.mxu0 0
        %2019 = vmatpush1.bf16.msra.mxu0 0
        %2020 = vmatprep.subr.bf16.mxu0 0
        %2021 = vmatpush1.bf16.msra.mxu0 0
        %2022 = vmatprep.subr.bf16.mxu0 0
        %2023 = vmatpush1.bf16.msra.mxu0 0
        %2024 = vmatprep.subr.bf16.mxu0 0
        %2025 = vmatpush1.bf16.msra.mxu0 0
        %2026 = vmatprep.subr.bf16.mxu0 0
        %2027 = vmatpush1.bf16.msra.mxu0 0
        %2028 = vmatprep.subr.bf16.mxu0 0
        %2029 = vmatpush1.bf16.msra.mxu0 0
        %2030 = vmatprep.mubr.bf16.mxu0 0
        %2031 = vmatmul.mubr.bf16.gmra.mrb[0].mxu0 %v1762
        %v2032 = vpop.f32.mrb[0].mxu0
        %v2033 = vadd.f32 0.0, %v2032
        %v2034 = vpop.f32.mrb[0].mxu0
        %v2035 = vadd.f32 0.0, %v2034
        %v2036 = vpop.f32.mrb[0].mxu0
        %v2037 = vadd.f32 0.0, %v2036
        %v2038 = vpop.f32.mrb[0].mxu0
        %v2039 = vadd.f32 0.0, %v2038
        %2040 = vdwg.mxu0
        %v2041 = vxor.u32 %v1990, 2147483648
        %v2042 = vxor.u32 %v1992, 2147483648
        %v2043 = vxor.u32 %v1994, 2147483648
        %v2044 = vxor.u32 %v1996, 2147483648
        %v2045 = vmul.f32 %v2041, 1.442695
        %v2046 = vpow.pop %v2045
        %v2047 = vmul.f32 %v2042, 1.442695
        %v2048 = vpow.pop %v2047
        %v2049 = vmul.f32 %v2043, 1.442695
        %v2050 = vpow.pop %v2049
        %v2051 = vmul.f32 %v2044, 1.442695
        %v2052 = vpow.pop %v2051
        %v2053 = vadd.f32 %v2046, 1.0
        %v2054 = vadd.f32 %v2048, 1.0
        %v2055 = vadd.f32 %v2050, 1.0
        %v2056 = vadd.f32 %v2052, 1.0
        %v2057 = vrcp.pop %v2053
        %v2058 = vmul.f32 1.0, %v2057
        %v2059 = vrcp.pop %v2054
        %v2060 = vmul.f32 1.0, %v2059
        %v2061 = vrcp.pop %v2055
        %v2062 = vmul.f32 1.0, %v2061
        %v2063 = vrcp.pop %v2056
        %v2064 = vmul.f32 1.0, %v2063
        %v2065 = vmul.f32 %v1990, %v2058
        %v2066 = vmul.f32 %v1992, %v2060
        %v2067 = vmul.f32 %v1994, %v2062
        %v2068 = vmul.f32 %v1996, %v2064
        %v2069 = vmul.f32 %v2065, %v2033
        %v2070 = vmul.f32 %v2066, %v2035
        %v2071 = vmul.f32 %v2067, %v2037
        %v2072 = vmul.f32 %v2068, %v2039
        %v2073 = vpack.c.bf16 %v2071, %v2069
        %v2074 = vpack.c.bf16 %v2072, %v2070
        %v2075 = vld [vmem:[%s8] sm:$0xf]
        %v2076 = vld [vmem:[%s8 + $0x4] sm:$0xf]
        %v2077 = vld [vmem:[%s8 + $0x8] sm:$0xf]
        %v2078 = vld [vmem:[%s8 + $0xc] sm:$0xf]
        %v2079 = vld [vmem:[%s8 + $0x10] sm:$0xf]
        %v2080 = vld [vmem:[%s8 + $0x14] sm:$0xf]
        %v2081 = vld [vmem:[%s8 + $0x18] sm:$0xf]
        %v2082 = vld [vmem:[%s8 + $0x1c] sm:$0xf]
        %v2083 = vld [vmem:[%s8 + $0x20] sm:$0xf]
        %v2084 = vld [vmem:[%s8 + $0x24] sm:$0xf]
        %v2085 = vld [vmem:[%s8 + $0x28] sm:$0xf]
        %v2086 = vld [vmem:[%s8 + $0x2c] sm:$0xf]
        %v2087 = vld [vmem:[%s8 + $0x30] sm:$0xf]
        %v2088 = vld [vmem:[%s8 + $0x34] sm:$0xf]
        %v2089 = vld [vmem:[%s8 + $0x38] sm:$0xf]
        %v2090 = vld [vmem:[%s8 + $0x3c] sm:$0xf]
        %v2091 = vld [vmem:[%s8 + $0x40] sm:$0xf]
        %v2092 = vld [vmem:[%s8 + $0x44] sm:$0xf]
        %v2093 = vld [vmem:[%s8 + $0x48] sm:$0xf]
        %v2094 = vld [vmem:[%s8 + $0x4c] sm:$0xf]
        %v2095 = vld [vmem:[%s8 + $0x50] sm:$0xf]
        %v2096 = vld [vmem:[%s8 + $0x54] sm:$0xf]
        %v2097 = vld [vmem:[%s8 + $0x58] sm:$0xf]
        %v2098 = vld [vmem:[%s8 + $0x5c] sm:$0xf]
        %v2099 = vld [vmem:[%s8 + $0x60] sm:$0xf]
        %v2100 = vld [vmem:[%s8 + $0x64] sm:$0xf]
        %v2101 = vld [vmem:[%s8 + $0x68] sm:$0xf]
        %v2102 = vld [vmem:[%s8 + $0x6c] sm:$0xf]
        %v2103 = vld [vmem:[%s8 + $0x70] sm:$0xf]
        %v2104 = vld [vmem:[%s8 + $0x74] sm:$0xf]
        %v2105 = vld [vmem:[%s8 + $0x78] sm:$0xf]
        %v2106 = vld [vmem:[%s8 + $0x7c] sm:$0xf]
        %v2139 = vunpack.c.l.b16 %v2075
        %v2140 = vunpack.c.l.b16 %v2076
        %v2141 = vunpack.c.l.b16 %v2077
        %v2142 = vunpack.c.l.b16 %v2078
        %v2143 = vunpack.c.l.b16 %v2079
        %v2144 = vunpack.c.l.b16 %v2080
        %v2145 = vunpack.c.l.b16 %v2081
        %v2146 = vunpack.c.l.b16 %v2082
        %v2147 = vunpack.c.l.b16 %v2083
        %v2148 = vunpack.c.l.b16 %v2084
        %v2149 = vunpack.c.l.b16 %v2085
        %v2150 = vunpack.c.l.b16 %v2086
        %v2151 = vunpack.c.l.b16 %v2087
        %v2152 = vunpack.c.l.b16 %v2088
        %v2153 = vunpack.c.l.b16 %v2089
        %v2154 = vunpack.c.l.b16 %v2090
        %v2155 = vunpack.c.l.b16 %v2091
        %v2156 = vunpack.c.l.b16 %v2092
        %v2157 = vunpack.c.l.b16 %v2093
        %v2158 = vunpack.c.l.b16 %v2094
        %v2159 = vunpack.c.l.b16 %v2095
        %v2160 = vunpack.c.l.b16 %v2096
        %v2161 = vunpack.c.l.b16 %v2097
        %v2162 = vunpack.c.l.b16 %v2098
        %v2163 = vunpack.c.l.b16 %v2099
        %v2164 = vunpack.c.l.b16 %v2100
        %v2165 = vunpack.c.l.b16 %v2101
        %v2166 = vunpack.c.l.b16 %v2102
        %v2167 = vunpack.c.l.b16 %v2103
        %v2168 = vunpack.c.l.b16 %v2104
        %v2169 = vunpack.c.l.b16 %v2105
        %v2170 = vunpack.c.l.b16 %v2106
        %v2171 = vpack.c.b16 %v2140, %v2139
        %v2172 = vpack.c.b16 %v2142, %v2141
        %v2173 = vpack.c.b16 %v2144, %v2143
        %v2174 = vpack.c.b16 %v2146, %v2145
        %v2175 = vpack.c.b16 %v2148, %v2147
        %v2176 = vpack.c.b16 %v2150, %v2149
        %v2177 = vpack.c.b16 %v2152, %v2151
        %v2178 = vpack.c.b16 %v2154, %v2153
        %v2179 = vpack.c.b16 %v2156, %v2155
        %v2180 = vpack.c.b16 %v2158, %v2157
        %v2181 = vpack.c.b16 %v2160, %v2159
        %v2182 = vpack.c.b16 %v2162, %v2161
        %v2183 = vpack.c.b16 %v2164, %v2163
        %v2184 = vpack.c.b16 %v2166, %v2165
        %v2185 = vpack.c.b16 %v2168, %v2167
        %v2186 = vpack.c.b16 %v2170, %v2169
        %2203 = vmatprep.subr.bf16.mxu0 0
        %2204 = vmatpush1.bf16.msra.mxu0 %v2171
        %2205 = vmatprep.subr.bf16.mxu0 0
        %2206 = vmatpush1.bf16.msra.mxu0 %v2172
        %2207 = vmatprep.subr.bf16.mxu0 0
        %2208 = vmatpush1.bf16.msra.mxu0 %v2173
        %2209 = vmatprep.subr.bf16.mxu0 0
        %2210 = vmatpush1.bf16.msra.mxu0 %v2174
        %2211 = vmatprep.subr.bf16.mxu0 0
        %2212 = vmatpush1.bf16.msra.mxu0 %v2175
        %2213 = vmatprep.subr.bf16.mxu0 0
        %2214 = vmatpush1.bf16.msra.mxu0 %v2176
        %2215 = vmatprep.subr.bf16.mxu0 0
        %2216 = vmatpush1.bf16.msra.mxu0 %v2177
        %2217 = vmatprep.subr.bf16.mxu0 0
        %2218 = vmatpush1.bf16.msra.mxu0 %v2178
        %2219 = vmatprep.subr.bf16.mxu0 0
        %2220 = vmatpush1.bf16.msra.mxu0 %v2179
        %2221 = vmatprep.subr.bf16.mxu0 0
        %2222 = vmatpush1.bf16.msra.mxu0 %v2180
        %2223 = vmatprep.subr.bf16.mxu0 0
        %2224 = vmatpush1.bf16.msra.mxu0 %v2181
        %2225 = vmatprep.subr.bf16.mxu0 0
        %2226 = vmatpush1.bf16.msra.mxu0 %v2182
        %2227 = vmatprep.subr.bf16.mxu0 0
        %2228 = vmatpush1.bf16.msra.mxu0 %v2183
        %2229 = vmatprep.subr.bf16.mxu0 0
        %2230 = vmatpush1.bf16.msra.mxu0 %v2184
        %2231 = vmatprep.subr.bf16.mxu0 0
        %2232 = vmatpush1.bf16.msra.mxu0 %v2185
        %2233 = vmatprep.subr.bf16.mxu0 0
        %2234 = vmatpush1.bf16.msra.mxu0 %v2186
        %2235 = vmatprep.mubr.bf16.mxu0 %v2074
        %2236 = vmatmul.mubr.bf16.gmra.mrb[0].mxu0 %v2073
        %v2237 = vpop.f32.mrb[0].mxu0
        %v2238 = vadd.f32 0.0, %v2237
        %v2239 = vpop.f32.mrb[0].mxu0
        %v2240 = vpop.f32.mrb[0].mxu0
        %v2241 = vadd.f32 0.0, %v2240
        %v2242 = vpop.f32.mrb[0].mxu0
        %2243 = vdwg.mxu0
        %v2244 = vadd.f32 %v1726, %v2238
        %v2245 = vadd.f32 %v1727, %v2241
        %s2246 = scalar_lea.vmem %s3, 4
        %v2247 = vld [vmem:[%s2246] sm:$0xf]
        %2248 = vadd.xlane.f32.xlu0 %v2244
        %v2249 = vpop.xlane.xlu0 %2248
        %2250 = vadd.xlane.f32.xlu0 %v2245
        %v2251 = vpop.xlane.xlu0 %2250
        %v2252 = vmul.f32 %v2249, %v376
        %v2253 = vmul.f32 %v2251, %v376
        %v2254 = vsub.f32 %v2244, %v2252
        %v2255 = vsub.f32 %v2245, %v2253
        %v2256 = vmul.f32 %v2254, %v2254
        %v2257 = vmul.f32 %v2255, %v2255
        %2258 = vadd.xlane.f32.xlu0 %v2256
        %v2259 = vpop.xlane.xlu0 %2258
        %2260 = vadd.xlane.f32.xlu0 %v2257
        %v2261 = vpop.xlane.xlu0 %2260
        %v2262 = vmul.f32 %v2259, %v376
        %v2263 = vmul.f32 %v2261, %v376
        %v2264 = vadd.f32 %v2262, 1e-05
        %v2265 = vadd.f32 %v2263, 1e-05
        %v2266 = vrsqrt.pop %v2264
        %v2267 = vrsqrt.pop %v2265
        %v2268 = vmul.f32 %v2254, %v2266
        %v2269 = vmul.f32 %v2255, %v2267
        %v2270 = vlaneseq
        %v2271 = vshrl.u32 %v2270, 7
        %v2272 = vsub.s32 0, %v2271
        %v2273 = vrot.slane %v2247, %v2272
        %v2274 = vmul.f32 %v2268, %v2273
        %v2275 = vmul.f32 %v2269, %v2273
        %v2276 = vlaneseq
        %v2277 = vshrl.u32 %v2276, 7
        %v2278 = vsub.s32 1, %v2277
        %v2279 = vrot.slane %v2247, %v2278
        %v2280 = vadd.f32 %v2274, %v2279
        %v2281 = vadd.f32 %v2275, %v2279
        %v2282 = vpack.c.bf16 %v2281, %v2280
        %s2283 = scalar_lea.vmem %s5, 320
        %v2284 = vld [vmem:[%s2283] sm:$0xff]
        %v2285 = vld [vmem:[%s2283 + $0x8] sm:$0xff]
        %v2286 = vld [vmem:[%s2283 + $0x10] sm:$0xf]
        %v2287 = vld [vmem:[%s2283 + $0x14] sm:$0xff]
        %v2288 = vld [vmem:[%s2283 + $0x1c] sm:$0xff]
        %v2289 = vld [vmem:[%s2283 + $0x24] sm:$0xf]
        %v2290 = vld [vmem:[%s2283 + $0x28] sm:$0xff]
        %v2291 = vld [vmem:[%s2283 + $0x30] sm:$0xff]
        %v2292 = vld [vmem:[%s2283 + $0x38] sm:$0xf]
        %v2293 = vld [vmem:[%s2283 + $0x3c] sm:$0xff]
        %v2294 = vld [vmem:[%s2283 + $0x44] sm:$0xff]
        %v2295 = vld [vmem:[%s2283 + $0x4c] sm:$0xf]
        %v2296 = vld [vmem:[%s2283 + $0x50] sm:$0xff]
        %v2297 = vld [vmem:[%s2283 + $0x58] sm:$0xff]
        %v2298 = vld [vmem:[%s2283 + $0x60] sm:$0xf]
        %v2299 = vld [vmem:[%s2283 + $0x64] sm:$0xff]
        %v2300 = vld [vmem:[%s2283 + $0x6c] sm:$0xff]
        %v2301 = vld [vmem:[%s2283 + $0x74] sm:$0xf]
        %v2302 = vld [vmem:[%s2283 + $0x78] sm:$0xff]
        %v2303 = vld [vmem:[%s2283 + $0x80] sm:$0xff]
        %v2304 = vld [vmem:[%s2283 + $0x88] sm:$0xf]
        %v2305 = vld [vmem:[%s2283 + $0x8c] sm:$0xff]
        %v2306 = vld [vmem:[%s2283 + $0x94] sm:$0xff]
        %v2307 = vld [vmem:[%s2283 + $0x9c] sm:$0xf]
        %v2308 = vld [vmem:[%s2283 + $0xa0] sm:$0xff]
        %v2309 = vld [vmem:[%s2283 + $0xa8] sm:$0xff]
        %v2310 = vld [vmem:[%s2283 + $0xb0] sm:$0xf]
        %v2311 = vld [vmem:[%s2283 + $0xb4] sm:$0xff]
        %v2312 = vld [vmem:[%s2283 + $0xbc] sm:$0xff]
        %v2313 = vld [vmem:[%s2283 + $0xc4] sm:$0xf]
        %v2314 = vld [vmem:[%s2283 + $0xc8] sm:$0xff]
        %v2315 = vld [vmem:[%s2283 + $0xd0] sm:$0xff]
        %v2316 = vld [vmem:[%s2283 + $0xd8] sm:$0xf]
        %v2317 = vld [vmem:[%s2283 + $0xdc] sm:$0xff]
        %v2318 = vld [vmem:[%s2283 + $0xe4] sm:$0xff]
        %v2319 = vld [vmem:[%s2283 + $0xec] sm:$0xf]
        %v2320 = vld [vmem:[%s2283 + $0xf0] sm:$0xff]
        %v2321 = vld [vmem:[%s2283 + $0xf8] sm:$0xff]
        %v2322 = vld [vmem:[%s2283 + $0x100] sm:$0xf]
        %v2323 = vld [vmem:[%s2283 + $0x104] sm:$0xff]
        %v2324 = vld [vmem:[%s2283 + $0x10c] sm:$0xff]
        %v2325 = vld [vmem:[%s2283 + $0x114] sm:$0xf]
        %v2326 = vld [vmem:[%s2283 + $0x118] sm:$0xff]
        %v2327 = vld [vmem:[%s2283 + $0x120] sm:$0xff]
        %v2328 = vld [vmem:[%s2283 + $0x128] sm:$0xf]
        %v2329 = vld [vmem:[%s2283 + $0x12c] sm:$0xff]
        %v2330 = vld [vmem:[%s2283 + $0x134] sm:$0xff]
        %v2331 = vld [vmem:[%s2283 + $0x13c] sm:$0xf]
        %v2380 = vunpack.c.l.b16 %v2284
        %v2381 = vunpack.c.h.b16 %v2284
        %v2382 = vunpack.c.l.b16 %v2285
        %v2383 = vunpack.c.h.b16 %v2285
        %v2384 = vunpack.c.l.b16 %v2286
        %v2385 = vunpack.c.l.b16 %v2287
        %v2386 = vunpack.c.h.b16 %v2287
        %v2387 = vunpack.c.l.b16 %v2288
        %v2388 = vunpack.c.h.b16 %v2288
        %v2389 = vunpack.c.l.b16 %v2289
        %v2390 = vunpack.c.l.b16 %v2290
        %v2391 = vunpack.c.h.b16 %v2290
        %v2392 = vunpack.c.l.b16 %v2291
        %v2393 = vunpack.c.h.b16 %v2291
        %v2394 = vunpack.c.l.b16 %v2292
        %v2395 = vunpack.c.l.b16 %v2293
        %v2396 = vunpack.c.h.b16 %v2293
        %v2397 = vunpack.c.l.b16 %v2294
        %v2398 = vunpack.c.h.b16 %v2294
        %v2399 = vunpack.c.l.b16 %v2295
        %v2400 = vunpack.c.l.b16 %v2296
        %v2401 = vunpack.c.h.b16 %v2296
        %v2402 = vunpack.c.l.b16 %v2297
        %v2403 = vunpack.c.h.b16 %v2297
        %v2404 = vunpack.c.l.b16 %v2298
        %v2405 = vunpack.c.l.b16 %v2299
        %v2406 = vunpack.c.h.b16 %v2299
        %v2407 = vunpack.c.l.b16 %v2300
        %v2408 = vunpack.c.h.b16 %v2300
        %v2409 = vunpack.c.l.b16 %v2301
        %v2410 = vunpack.c.l.b16 %v2302
        %v2411 = vunpack.c.h.b16 %v2302
        %v2412 = vunpack.c.l.b16 %v2303
        %v2413 = vunpack.c.h.b16 %v2303
        %v2414 = vunpack.c.l.b16 %v2304
        %v2415 = vunpack.c.l.b16 %v2305
        %v2416 = vunpack.c.h.b16 %v2305
        %v2417 = vunpack.c.l.b16 %v2306
        %v2418 = vunpack.c.h.b16 %v2306
        %v2419 = vunpack.c.l.b16 %v2307
        %v2420 = vunpack.c.l.b16 %v2308
        %v2421 = vunpack.c.h.b16 %v2308
        %v2422 = vunpack.c.l.b16 %v2309
        %v2423 = vunpack.c.h.b16 %v2309
        %v2424 = vunpack.c.l.b16 %v2310
        %v2425 = vunpack.c.l.b16 %v2311
        %v2426 = vunpack.c.h.b16 %v2311
        %v2427 = vunpack.c.l.b16 %v2312
        %v2428 = vunpack.c.h.b16 %v2312
        %v2429 = vunpack.c.l.b16 %v2313
        %v2430 = vunpack.c.l.b16 %v2314
        %v2431 = vunpack.c.h.b16 %v2314
        %v2432 = vunpack.c.l.b16 %v2315
        %v2433 = vunpack.c.h.b16 %v2315
        %v2434 = vunpack.c.l.b16 %v2316
        %v2435 = vunpack.c.l.b16 %v2317
        %v2436 = vunpack.c.h.b16 %v2317
        %v2437 = vunpack.c.l.b16 %v2318
        %v2438 = vunpack.c.h.b16 %v2318
        %v2439 = vunpack.c.l.b16 %v2319
        %v2440 = vunpack.c.l.b16 %v2320
        %v2441 = vunpack.c.h.b16 %v2320
        %v2442 = vunpack.c.l.b16 %v2321
        %v2443 = vunpack.c.h.b16 %v2321
        %v2444 = vunpack.c.l.b16 %v2322
        %v2445 = vunpack.c.l.b16 %v2323
        %v2446 = vunpack.c.h.b16 %v2323
        %v2447 = vunpack.c.l.b16 %v2324
        %v2448 = vunpack.c.h.b16 %v2324
        %v2449 = vunpack.c.l.b16 %v2325
        %v2450 = vunpack.c.l.b16 %v2326
        %v2451 = vunpack.c.h.b16 %v2326
        %v2452 = vunpack.c.l.b16 %v2327
        %v2453 = vunpack.c.h.b16 %v2327
        %v2454 = vunpack.c.l.b16 %v2328
        %v2455 = vunpack.c.l.b16 %v2329
        %v2456 = vunpack.c.h.b16 %v2329
        %v2457 = vunpack.c.l.b16 %v2330
        %v2458 = vunpack.c.h.b16 %v2330
        %v2459 = vunpack.c.l.b16 %v2331
        %v2460 = vpack.c.b16 %v2385, %v2380
        %v2461 = vpack.c.b16 %v2386, %v2381
        %v2462 = vpack.c.b16 %v2387, %v2382
        %v2463 = vpack.c.b16 %v2388, %v2383
        %v2464 = vpack.c.b16 %v2389, %v2384
        %v2465 = vpack.c.b16 %v2395, %v2390
        %v2466 = vpack.c.b16 %v2396, %v2391
        %v2467 = vpack.c.b16 %v2397, %v2392
        %v2468 = vpack.c.b16 %v2398, %v2393
        %v2469 = vpack.c.b16 %v2399, %v2394
        %v2470 = vpack.c.b16 %v2405, %v2400
        %v2471 = vpack.c.b16 %v2406, %v2401
        %v2472 = vpack.c.b16 %v2407, %v2402
        %v2473 = vpack.c.b16 %v2408, %v2403
        %v2474 = vpack.c.b16 %v2409, %v2404
        %v2475 = vpack.c.b16 %v2415, %v2410
        %v2476 = vpack.c.b16 %v2416, %v2411
        %v2477 = vpack.c.b16 %v2417, %v2412
        %v2478 = vpack.c.b16 %v2418, %v2413
        %v2479 = vpack.c.b16 %v2419, %v2414
        %v2480 = vpack.c.b16 %v2425, %v2420
        %v2481 = vpack.c.b16 %v2426, %v2421
        %v2482 = vpack.c.b16 %v2427, %v2422
        %v2483 = vpack.c.b16 %v2428, %v2423
        %v2484 = vpack.c.b16 %v2429, %v2424
        %v2485 = vpack.c.b16 %v2435, %v2430
        %v2486 = vpack.c.b16 %v2436, %v2431
        %v2487 = vpack.c.b16 %v2437, %v2432
        %v2488 = vpack.c.b16 %v2438, %v2433
        %v2489 = vpack.c.b16 %v2439, %v2434
        %v2490 = vpack.c.b16 %v2445, %v2440
        %v2491 = vpack.c.b16 %v2446, %v2441
        %v2492 = vpack.c.b16 %v2447, %v2442
        %v2493 = vpack.c.b16 %v2448, %v2443
        %v2494 = vpack.c.b16 %v2449, %v2444
        %v2495 = vpack.c.b16 %v2455, %v2450
        %v2496 = vpack.c.b16 %v2456, %v2451
        %v2497 = vpack.c.b16 %v2457, %v2452
        %v2498 = vpack.c.b16 %v2458, %v2453
        %v2499 = vpack.c.b16 %v2459, %v2454
        %2540 = vmatprep.subr.bf16.mxu0 %v2461
        %2541 = vmatpush1.bf16.msra.mxu0 %v2460
        %2542 = vmatprep.subr.bf16.mxu0 %v2466
        %2543 = vmatpush1.bf16.msra.mxu0 %v2465
        %2544 = vmatprep.subr.bf16.mxu0 %v2471
        %2545 = vmatpush1.bf16.msra.mxu0 %v2470
        %2546 = vmatprep.subr.bf16.mxu0 %v2476
        %2547 = vmatpush1.bf16.msra.mxu0 %v2475
        %2548 = vmatprep.subr.bf16.mxu0 %v2481
        %2549 = vmatpush1.bf16.msra.mxu0 %v2480
        %2550 = vmatprep.subr.bf16.mxu0 %v2486
        %2551 = vmatpush1.bf16.msra.mxu0 %v2485
        %2552 = vmatprep.subr.bf16.mxu0 %v2491
        %2553 = vmatpush1.bf16.msra.mxu0 %v2490
        %2554 = vmatprep.subr.bf16.mxu0 %v2496
        %2555 = vmatpush1.bf16.msra.mxu0 %v2495
        %2556 = vmatprep.subr.bf16.mxu0 0
        %2557 = vmatpush1.bf16.msra.mxu0 0
        %2558 = vmatprep.subr.bf16.mxu0 0
        %2559 = vmatpush1.bf16.msra.mxu0 0
        %2560 = vmatprep.subr.bf16.mxu0 0
        %2561 = vmatpush1.bf16.msra.mxu0 0
        %2562 = vmatprep.subr.bf16.mxu0 0
        %2563 = vmatpush1.bf16.msra.mxu0 0
        %2564 = vmatprep.subr.bf16.mxu0 0
        %2565 = vmatpush1.bf16.msra.mxu0 0
        %2566 = vmatprep.subr.bf16.mxu0 0
        %2567 = vmatpush1.bf16.msra.mxu0 0
        %2568 = vmatprep.subr.bf16.mxu0 0
        %2569 = vmatpush1.bf16.msra.mxu0 0
        %2570 = vmatprep.subr.bf16.mxu0 0
        %2571 = vmatpush1.bf16.msra.mxu0 0
        %2572 = vmatprep.mubr.bf16.mxu0 0
        %2573 = vmatmul.mubr.bf16.gmra.mrb[0].mxu0 %v2282
        %v2574 = vpop.f32.mrb[0].mxu0
        %v2575 = vadd.f32 0.0, %v2574
        %v2576 = vpop.f32.mrb[0].mxu0
        %v2577 = vadd.f32 0.0, %v2576
        %v2578 = vpop.f32.mrb[0].mxu0
        %v2579 = vadd.f32 0.0, %v2578
        %v2580 = vpop.f32.mrb[0].mxu0
        %v2581 = vadd.f32 0.0, %v2580
        %2582 = vdwg.mxu0
        %2583 = vmatprep.subr.bf16.mxu0 %v2463
        %2584 = vmatpush1.bf16.msra.mxu0 %v2462
        %2585 = vmatprep.subr.bf16.mxu0 %v2468
        %2586 = vmatpush1.bf16.msra.mxu0 %v2467
        %2587 = vmatprep.subr.bf16.mxu0 %v2473
        %2588 = vmatpush1.bf16.msra.mxu0 %v2472
        %2589 = vmatprep.subr.bf16.mxu0 %v2478
        %2590 = vmatpush1.bf16.msra.mxu0 %v2477
        %2591 = vmatprep.subr.bf16.mxu0 %v2483
        %2592 = vmatpush1.bf16.msra.mxu0 %v2482
        %2593 = vmatprep.subr.bf16.mxu0 %v2488
        %2594 = vmatpush1.bf16.msra.mxu0 %v2487
        %2595 = vmatprep.subr.bf16.mxu0 %v2493
        %2596 = vmatpush1.bf16.msra.mxu0 %v2492
        %2597 = vmatprep.subr.bf16.mxu0 %v2498
        %2598 = vmatpush1.bf16.msra.mxu0 %v2497
        %2599 = vmatprep.subr.bf16.mxu0 0
        %2600 = vmatpush1.bf16.msra.mxu0 0
        %2601 = vmatprep.subr.bf16.mxu0 0
        %2602 = vmatpush1.bf16.msra.mxu0 0
        %2603 = vmatprep.subr.bf16.mxu0 0
        %2604 = vmatpush1.bf16.msra.mxu0 0
        %2605 = vmatprep.subr.bf16.mxu0 0
        %2606 = vmatpush1.bf16.msra.mxu0 0
        %2607 = vmatprep.subr.bf16.mxu0 0
        %2608 = vmatpush1.bf16.msra.mxu0 0
        %2609 = vmatprep.subr.bf16.mxu0 0
        %2610 = vmatpush1.bf16.msra.mxu0 0
        %2611 = vmatprep.subr.bf16.mxu0 0
        %2612 = vmatpush1.bf16.msra.mxu0 0
        %2613 = vmatprep.subr.bf16.mxu0 0
        %2614 = vmatpush1.bf16.msra.mxu0 0
        %2615 = vmatprep.mubr.bf16.mxu0 0
        %2616 = vmatmul.mubr.bf16.gmra.mrb[0].mxu0 %v2282
        %v2617 = vpop.f32.mrb[0].mxu0
        %v2618 = vadd.f32 0.0, %v2617
        %v2619 = vpop.f32.mrb[0].mxu0
        %v2620 = vadd.f32 0.0, %v2619
        %v2621 = vpop.f32.mrb[0].mxu0
        %v2622 = vadd.f32 0.0, %v2621
        %v2623 = vpop.f32.mrb[0].mxu0
        %v2624 = vadd.f32 0.0, %v2623
        %2625 = vdwg.mxu0
        %2626 = vmatprep.subr.bf16.mxu0 0
        %2627 = vmatpush1.bf16.msra.mxu0 %v2464
        %2628 = vmatprep.subr.bf16.mxu0 0
        %2629 = vmatpush1.bf16.msra.mxu0 %v2469
        %2630 = vmatprep.subr.bf16.mxu0 0
        %2631 = vmatpush1.bf16.msra.mxu0 %v2474
        %2632 = vmatprep.subr.bf16.mxu0 0
        %2633 = vmatpush1.bf16.msra.mxu0 %v2479
        %2634 = vmatprep.subr.bf16.mxu0 0
        %2635 = vmatpush1.bf16.msra.mxu0 %v2484
        %2636 = vmatprep.subr.bf16.mxu0 0
        %2637 = vmatpush1.bf16.msra.mxu0 %v2489
        %2638 = vmatprep.subr.bf16.mxu0 0
        %2639 = vmatpush1.bf16.msra.mxu0 %v2494
        %2640 = vmatprep.subr.bf16.mxu0 0
        %2641 = vmatpush1.bf16.msra.mxu0 %v2499
        %2642 = vmatprep.subr.bf16.mxu0 0
        %2643 = vmatpush1.bf16.msra.mxu0 0
        %2644 = vmatprep.subr.bf16.mxu0 0
        %2645 = vmatpush1.bf16.msra.mxu0 0
        %2646 = vmatprep.subr.bf16.mxu0 0
        %2647 = vmatpush1.bf16.msra.mxu0 0
        %2648 = vmatprep.subr.bf16.mxu0 0
        %2649 = vmatpush1.bf16.msra.mxu0 0
        %2650 = vmatprep.subr.bf16.mxu0 0
        %2651 = vmatpush1.bf16.msra.mxu0 0
        %2652 = vmatprep.subr.bf16.mxu0 0
        %2653 = vmatpush1.bf16.msra.mxu0 0
        %2654 = vmatprep.subr.bf16.mxu0 0
        %2655 = vmatpush1.bf16.msra.mxu0 0
        %2656 = vmatprep.subr.bf16.mxu0 0
        %2657 = vmatpush1.bf16.msra.mxu0 0
        %2658 = vmatprep.mubr.bf16.mxu0 0
        %2659 = vmatmul.mubr.bf16.gmra.mrb[0].mxu0 %v2282
        %v2660 = vpop.f32.mrb[0].mxu0
        %v2661 = vadd.f32 0.0, %v2660
        %v2662 = vpop.f32.mrb[0].mxu0
        %v2663 = vpop.f32.mrb[0].mxu0
        %v2664 = vadd.f32 0.0, %v2663
        %v2665 = vpop.f32.mrb[0].mxu0
        %2666 = vdwg.mxu0
        %v2667 = vmul.f32 %v2575, %v366
        %v2668 = vmul.f32 %v2579, %v367
        %v2669 = vmul.f32 %v2577, %v369
        %v2670 = vmul.f32 %v2581, %v370
        %v2671 = vadd.f32 %v2667, %v2669
        %v2672 = vadd.f32 %v2668, %v2670
        %v2673 = vmul.f32 %v2618, %v366
        %v2674 = vmul.f32 %v2622, %v367
        %v2675 = vmul.f32 %v2620, %v369
        %v2676 = vmul.f32 %v2624, %v370
        %v2677 = vadd.f32 %v2673, %v2675
        %v2678 = vadd.f32 %v2674, %v2676
        %v2680 = vsel %vm803, %v2671, 0
        %v2683 = vsel %vm803, %v2672, 0
        %v2686 = vsel %vm803, %v2677, 0
        %v2689 = vsel %vm803, %v2678, 0
        %2691 = vmatprep.subr.mxu0 0.0
        %2692 = vmatpush1.xpose.msra.mxu0 %v2686
        %2693 = vmatprep.subr.mxu0 0.0
        %2694 = vmatpush1.xpose.msra.mxu0 %v2689
        %2695 = vmatprep.subr.mxu0 0.0
        %2696 = vmatpush1.xpose.msra.mxu0 0.0
        %2697 = vmatprep.subr.mxu0 0.0
        %2698 = vmatpush1.xpose.msra.mxu0 0.0
        %2699 = vmatprep.subr.mxu0 0.0
        %2700 = vmatpush1.xpose.msra.mxu0 0.0
        %2701 = vmatprep.subr.mxu0 0.0
        %2702 = vmatpush1.xpose.msra.mxu0 0.0
        %2703 = vmatprep.subr.mxu0 0.0
        %2704 = vmatpush1.xpose.msra.mxu0 0.0
        %2705 = vmatprep.subr.mxu0 0.0
        %2706 = vmatpush1.xpose.msra.mxu0 0.0
        %2707 = vmatprep.subr.mxu0 0.0
        %2708 = vmatpush1.xpose.msra.mxu0 0.0
        %2709 = vmatprep.subr.mxu0 0.0
        %2710 = vmatpush1.xpose.msra.mxu0 0.0
        %2711 = vmatprep.subr.mxu0 0.0
        %2712 = vmatpush1.xpose.msra.mxu0 0.0
        %2713 = vmatprep.subr.mxu0 0.0
        %2714 = vmatpush1.xpose.msra.mxu0 0.0
        %2715 = vmatprep.subr.mxu0 0.0
        %2716 = vmatpush1.xpose.msra.mxu0 0.0
        %2717 = vmatprep.subr.mxu0 0.0
        %2718 = vmatpush1.xpose.msra.mxu0 0.0
        %2719 = vmatprep.subr.mxu0 0.0
        %2720 = vmatpush1.xpose.msra.mxu0 0.0
        %2721 = vmatprep.subr.mxu0 0.0
        %2722 = vmatpush1.xpose.msra.mxu0 0.0
        %2723 = vmatprep.subr.mxu0 0.0
        %2724 = vmatpush1.xpose.msra.mxu0 0.0
        %2725 = vmatprep.subr.mxu0 0.0
        %2726 = vmatpush1.xpose.msra.mxu0 0.0
        %2727 = vmatprep.subr.mxu0 0.0
        %2728 = vmatpush1.xpose.msra.mxu0 0.0
        %2729 = vmatprep.subr.mxu0 0.0
        %2730 = vmatpush1.xpose.msra.mxu0 0.0
        %2731 = vmatprep.subr.mxu0 0.0
        %2732 = vmatpush1.xpose.msra.mxu0 0.0
        %2733 = vmatprep.subr.mxu0 0.0
        %2734 = vmatpush1.xpose.msra.mxu0 0.0
        %2735 = vmatprep.subr.mxu0 0.0
        %2736 = vmatpush1.xpose.msra.mxu0 0.0
        %2737 = vmatprep.subr.mxu0 0.0
        %2738 = vmatpush1.xpose.msra.mxu0 0.0
        %2739 = vmatprep.subr.mxu0 0.0
        %2740 = vmatpush1.xpose.msra.mxu0 0.0
        %2741 = vmatprep.subr.mxu0 0.0
        %2742 = vmatpush1.xpose.msra.mxu0 0.0
        %2743 = vmatprep.subr.mxu0 0.0
        %2744 = vmatpush1.xpose.msra.mxu0 0.0
        %2745 = vmatprep.subr.mxu0 0.0
        %2746 = vmatpush1.xpose.msra.mxu0 0.0
        %2747 = vmatprep.subr.mxu0 0.0
        %2748 = vmatpush1.xpose.msra.mxu0 0.0
        %2749 = vmatprep.subr.mxu0 0.0
        %2750 = vmatpush1.xpose.msra.mxu0 0.0
        %2751 = vmatprep.subr.mxu0 0.0
        %2752 = vmatpush1.xpose.msra.mxu0 0.0
        %2753 = vmatprep.subr.mxu0 0.0
        %2754 = vmatpush1.xpose.msra.mxu0 0.0
        %2755 = vmatprep.mubr.f32.mxu0 0.0
        %2756 = vmatmul.mubr.f32.gmra.mrb[0].mxu0 %v2680
        %v2757 = vpop.f32.mrb[0].mxu0
        %v2758 = vadd.f32 %v364, %v2757
        %v2759 = vpop.f32.mrb[0].mxu0
        %2760 = vmatprep.mubr.f32.mxu0 0.0
        %2761 = vmatmul.mubr.f32.gmra.mrb[0].mxu0 %v2683
        %v2762 = vpop.f32.mrb[0].mxu0
        %v2763 = vadd.f32 %v365, %v2762
        %v2764 = vpop.f32.mrb[0].mxu0
        %2765 = vdwg.mxu0
        %v2766 = vsel %vm891, %v2758, -inf
        %2767 = vmax.xlane.f32.xlu0 %v2766
        %v2768 = vpop.xlane.xlu0 %2767
        %v2769 = vsel %vm891, %v2763, -inf
        %2770 = vmax.xlane.f32.xlu0 %v2769
        %v2771 = vpop.xlane.xlu0 %2770
        %v2772 = vsub.f32 %v2758, %v2768
        %v2773 = vsub.f32 %v2763, %v2771
        %v2774 = vmul.f32 %v2772, 1.442695
        %v2775 = vpow.pop %v2774
        %v2776 = vmul.f32 %v2773, 1.442695
        %v2777 = vpow.pop %v2776
        %v2778 = vsel %vm891, %v2775, 0.0
        %2779 = vadd.xlane.f32.xlu0 %v2778
        %v2780 = vpop.xlane.xlu0 %2779
        %v2781 = vsel %vm891, %v2777, 0.0
        %2782 = vadd.xlane.f32.xlu0 %v2781
        %v2783 = vpop.xlane.xlu0 %2782
        %v2784 = vrcp.pop %v2780
        %v2785 = vrcp.pop %v2783
        %v2786 = vmul.f32 %v2775, %v2784
        %v2787 = vmul.f32 %v2777, %v2785
        %v2789 = vsel %vm891, %v2786, 0
        %v2792 = vsel %vm891, %v2787, 0
        %2794 = vmatprep.subr.mxu0 0.0
        %2795 = vmatpush1.msra.mxu0 %v2661
        %2796 = vmatprep.subr.mxu0 0.0
        %2797 = vmatpush1.msra.mxu0 %v2664
        %2798 = vmatprep.subr.mxu0 0.0
        %2799 = vmatpush1.msra.mxu0 0.0
        %2800 = vmatprep.subr.mxu0 0.0
        %2801 = vmatpush1.msra.mxu0 0.0
        %2802 = vmatprep.subr.mxu0 0.0
        %2803 = vmatpush1.msra.mxu0 0.0
        %2804 = vmatprep.subr.mxu0 0.0
        %2805 = vmatpush1.msra.mxu0 0.0
        %2806 = vmatprep.subr.mxu0 0.0
        %2807 = vmatpush1.msra.mxu0 0.0
        %2808 = vmatprep.subr.mxu0 0.0
        %2809 = vmatpush1.msra.mxu0 0.0
        %2810 = vmatprep.subr.mxu0 0.0
        %2811 = vmatpush1.msra.mxu0 0.0
        %2812 = vmatprep.subr.mxu0 0.0
        %2813 = vmatpush1.msra.mxu0 0.0
        %2814 = vmatprep.subr.mxu0 0.0
        %2815 = vmatpush1.msra.mxu0 0.0
        %2816 = vmatprep.subr.mxu0 0.0
        %2817 = vmatpush1.msra.mxu0 0.0
        %2818 = vmatprep.subr.mxu0 0.0
        %2819 = vmatpush1.msra.mxu0 0.0
        %2820 = vmatprep.subr.mxu0 0.0
        %2821 = vmatpush1.msra.mxu0 0.0
        %2822 = vmatprep.subr.mxu0 0.0
        %2823 = vmatpush1.msra.mxu0 0.0
        %2824 = vmatprep.subr.mxu0 0.0
        %2825 = vmatpush1.msra.mxu0 0.0
        %2826 = vmatprep.subr.mxu0 0.0
        %2827 = vmatpush1.msra.mxu0 0.0
        %2828 = vmatprep.subr.mxu0 0.0
        %2829 = vmatpush1.msra.mxu0 0.0
        %2830 = vmatprep.subr.mxu0 0.0
        %2831 = vmatpush1.msra.mxu0 0.0
        %2832 = vmatprep.subr.mxu0 0.0
        %2833 = vmatpush1.msra.mxu0 0.0
        %2834 = vmatprep.subr.mxu0 0.0
        %2835 = vmatpush1.msra.mxu0 0.0
        %2836 = vmatprep.subr.mxu0 0.0
        %2837 = vmatpush1.msra.mxu0 0.0
        %2838 = vmatprep.subr.mxu0 0.0
        %2839 = vmatpush1.msra.mxu0 0.0
        %2840 = vmatprep.subr.mxu0 0.0
        %2841 = vmatpush1.msra.mxu0 0.0
        %2842 = vmatprep.subr.mxu0 0.0
        %2843 = vmatpush1.msra.mxu0 0.0
        %2844 = vmatprep.subr.mxu0 0.0
        %2845 = vmatpush1.msra.mxu0 0.0
        %2846 = vmatprep.subr.mxu0 0.0
        %2847 = vmatpush1.msra.mxu0 0.0
        %2848 = vmatprep.subr.mxu0 0.0
        %2849 = vmatpush1.msra.mxu0 0.0
        %2850 = vmatprep.subr.mxu0 0.0
        %2851 = vmatpush1.msra.mxu0 0.0
        %2852 = vmatprep.subr.mxu0 0.0
        %2853 = vmatpush1.msra.mxu0 0.0
        %2854 = vmatprep.subr.mxu0 0.0
        %2855 = vmatpush1.msra.mxu0 0.0
        %2856 = vmatprep.subr.mxu0 0.0
        %2857 = vmatpush1.msra.mxu0 0.0
        %2858 = vmatprep.mubr.f32.mxu0 0.0
        %2859 = vmatmul.mubr.f32.gmra.mrb[0].mxu0 %v2789
        %v2860 = vpop.f32.mrb[0].mxu0
        %v2861 = vadd.f32 0.0, %v2860
        %v2862 = vpop.f32.mrb[0].mxu0
        %2863 = vmatprep.mubr.f32.mxu0 0.0
        %2864 = vmatmul.mubr.f32.gmra.mrb[0].mxu0 %v2792
        %v2865 = vpop.f32.mrb[0].mxu0
        %v2866 = vadd.f32 0.0, %v2865
        %v2867 = vpop.f32.mrb[0].mxu0
        %2868 = vdwg.mxu0
        %v2869 = vpack.c.bf16 %v2866, %v2861
        %2870 = vst.msk [vmem:[#allocation2] sm:$0xff] %vm803, %v2869
        %2871 = vrot.lane.b32.xlu0 %v2671, 96
        %v2872 = vpop.permute.xlu0 %2871
        %2873 = vrot.lane.b32.xlu0 %v2672, 96
        %v2874 = vpop.permute.xlu0 %2873
        %2875 = vrot.lane.b32.xlu0 %v2677, 96
        %v2876 = vpop.permute.xlu0 %2875
        %2877 = vrot.lane.b32.xlu0 %v2678, 96
        %v2878 = vpop.permute.xlu0 %2877
        %v2879 = vsel %vm803, %v2872, 0
        %v2881 = vsel %vm803, %v2874, 0
        %v2883 = vsel %vm803, %v2876, 0
        %v2885 = vsel %vm803, %v2878, 0
        %2887 = vmatprep.subr.mxu0 0.0
        %2888 = vmatpush1.xpose.msra.mxu0 %v2883
        %2889 = vmatprep.subr.mxu0 0.0
        %2890 = vmatpush1.xpose.msra.mxu0 %v2885
        %2891 = vmatprep.subr.mxu0 0.0
        %2892 = vmatpush1.xpose.msra.mxu0 0.0
        %2893 = vmatprep.subr.mxu0 0.0
        %2894 = vmatpush1.xpose.msra.mxu0 0.0
        %2895 = vmatprep.subr.mxu0 0.0
        %2896 = vmatpush1.xpose.msra.mxu0 0.0
        %2897 = vmatprep.subr.mxu0 0.0
        %2898 = vmatpush1.xpose.msra.mxu0 0.0
        %2899 = vmatprep.subr.mxu0 0.0
        %2900 = vmatpush1.xpose.msra.mxu0 0.0
        %2901 = vmatprep.subr.mxu0 0.0
        %2902 = vmatpush1.xpose.msra.mxu0 0.0
        %2903 = vmatprep.subr.mxu0 0.0
        %2904 = vmatpush1.xpose.msra.mxu0 0.0
        %2905 = vmatprep.subr.mxu0 0.0
        %2906 = vmatpush1.xpose.msra.mxu0 0.0
        %2907 = vmatprep.subr.mxu0 0.0
        %2908 = vmatpush1.xpose.msra.mxu0 0.0
        %2909 = vmatprep.subr.mxu0 0.0
        %2910 = vmatpush1.xpose.msra.mxu0 0.0
        %2911 = vmatprep.subr.mxu0 0.0
        %2912 = vmatpush1.xpose.msra.mxu0 0.0
        %2913 = vmatprep.subr.mxu0 0.0
        %2914 = vmatpush1.xpose.msra.mxu0 0.0
        %2915 = vmatprep.subr.mxu0 0.0
        %2916 = vmatpush1.xpose.msra.mxu0 0.0
        %2917 = vmatprep.subr.mxu0 0.0
        %2918 = vmatpush1.xpose.msra.mxu0 0.0
        %2919 = vmatprep.subr.mxu0 0.0
        %2920 = vmatpush1.xpose.msra.mxu0 0.0
        %2921 = vmatprep.subr.mxu0 0.0
        %2922 = vmatpush1.xpose.msra.mxu0 0.0
        %2923 = vmatprep.subr.mxu0 0.0
        %2924 = vmatpush1.xpose.msra.mxu0 0.0
        %2925 = vmatprep.subr.mxu0 0.0
        %2926 = vmatpush1.xpose.msra.mxu0 0.0
        %2927 = vmatprep.subr.mxu0 0.0
        %2928 = vmatpush1.xpose.msra.mxu0 0.0
        %2929 = vmatprep.subr.mxu0 0.0
        %2930 = vmatpush1.xpose.msra.mxu0 0.0
        %2931 = vmatprep.subr.mxu0 0.0
        %2932 = vmatpush1.xpose.msra.mxu0 0.0
        %2933 = vmatprep.subr.mxu0 0.0
        %2934 = vmatpush1.xpose.msra.mxu0 0.0
        %2935 = vmatprep.subr.mxu0 0.0
        %2936 = vmatpush1.xpose.msra.mxu0 0.0
        %2937 = vmatprep.subr.mxu0 0.0
        %2938 = vmatpush1.xpose.msra.mxu0 0.0
        %2939 = vmatprep.subr.mxu0 0.0
        %2940 = vmatpush1.xpose.msra.mxu0 0.0
        %2941 = vmatprep.subr.mxu0 0.0
        %2942 = vmatpush1.xpose.msra.mxu0 0.0
        %2943 = vmatprep.subr.mxu0 0.0
        %2944 = vmatpush1.xpose.msra.mxu0 0.0
        %2945 = vmatprep.subr.mxu0 0.0
        %2946 = vmatpush1.xpose.msra.mxu0 0.0
        %2947 = vmatprep.subr.mxu0 0.0
        %2948 = vmatpush1.xpose.msra.mxu0 0.0
        %2949 = vmatprep.subr.mxu0 0.0
        %2950 = vmatpush1.xpose.msra.mxu0 0.0
        %2951 = vmatprep.mubr.f32.mxu0 0.0
        %2952 = vmatmul.mubr.f32.gmra.mrb[0].mxu0 %v2879
        %v2953 = vpop.f32.mrb[0].mxu0
        %v2954 = vadd.f32 %v364, %v2953
        %v2955 = vpop.f32.mrb[0].mxu0
        %2956 = vmatprep.mubr.f32.mxu0 0.0
        %2957 = vmatmul.mubr.f32.gmra.mrb[0].mxu0 %v2881
        %v2958 = vpop.f32.mrb[0].mxu0
        %v2959 = vadd.f32 %v365, %v2958
        %v2960 = vpop.f32.mrb[0].mxu0
        %2961 = vdwg.mxu0
        %v2962 = vsel %vm891, %v2954, -inf
        %2963 = vmax.xlane.f32.xlu0 %v2962
        %v2964 = vpop.xlane.xlu0 %2963
        %v2965 = vsel %vm891, %v2959, -inf
        %2966 = vmax.xlane.f32.xlu0 %v2965
        %v2967 = vpop.xlane.xlu0 %2966
        %v2968 = vsub.f32 %v2954, %v2964
        %v2969 = vsub.f32 %v2959, %v2967
        %v2970 = vmul.f32 %v2968, 1.442695
        %v2971 = vpow.pop %v2970
        %v2972 = vmul.f32 %v2969, 1.442695
        %v2973 = vpow.pop %v2972
        %v2974 = vsel %vm891, %v2971, 0.0
        %2975 = vadd.xlane.f32.xlu0 %v2974
        %v2976 = vpop.xlane.xlu0 %2975
        %v2977 = vsel %vm891, %v2973, 0.0
        %2978 = vadd.xlane.f32.xlu0 %v2977
        %v2979 = vpop.xlane.xlu0 %2978
        %v2980 = vrcp.pop %v2976
        %v2981 = vrcp.pop %v2979
        %v2982 = vmul.f32 %v2971, %v2980
        %v2983 = vmul.f32 %v2973, %v2981
        %2986 = vrot.lane.b32.xlu0 %v2661, 96
        %v2987 = vpop.permute.xlu0 %2986
        %2988 = vrot.lane.b32.xlu0 %v2664, 96
        %v2989 = vpop.permute.xlu0 %2988
        %v2993 = vsel %vm891, %v2982, 0
        %v2996 = vsel %vm891, %v2983, 0
        %2998 = vmatprep.subr.mxu0 0.0
        %2999 = vmatpush1.msra.mxu0 %v2987
        %3000 = vmatprep.subr.mxu0 0.0
        %3001 = vmatpush1.msra.mxu0 %v2989
        %3002 = vmatprep.subr.mxu0 0.0
        %3003 = vmatpush1.msra.mxu0 0.0
        %3004 = vmatprep.subr.mxu0 0.0
        %3005 = vmatpush1.msra.mxu0 0.0
        %3006 = vmatprep.subr.mxu0 0.0
        %3007 = vmatpush1.msra.mxu0 0.0
        %3008 = vmatprep.subr.mxu0 0.0
        %3009 = vmatpush1.msra.mxu0 0.0
        %3010 = vmatprep.subr.mxu0 0.0
        %3011 = vmatpush1.msra.mxu0 0.0
        %3012 = vmatprep.subr.mxu0 0.0
        %3013 = vmatpush1.msra.mxu0 0.0
        %3014 = vmatprep.subr.mxu0 0.0
        %3015 = vmatpush1.msra.mxu0 0.0
        %3016 = vmatprep.subr.mxu0 0.0
        %3017 = vmatpush1.msra.mxu0 0.0
        %3018 = vmatprep.subr.mxu0 0.0
        %3019 = vmatpush1.msra.mxu0 0.0
        %3020 = vmatprep.subr.mxu0 0.0
        %3021 = vmatpush1.msra.mxu0 0.0
        %3022 = vmatprep.subr.mxu0 0.0
        %3023 = vmatpush1.msra.mxu0 0.0
        %3024 = vmatprep.subr.mxu0 0.0
        %3025 = vmatpush1.msra.mxu0 0.0
        %3026 = vmatprep.subr.mxu0 0.0
        %3027 = vmatpush1.msra.mxu0 0.0
        %3028 = vmatprep.subr.mxu0 0.0
        %3029 = vmatpush1.msra.mxu0 0.0
        %3030 = vmatprep.subr.mxu0 0.0
        %3031 = vmatpush1.msra.mxu0 0.0
        %3032 = vmatprep.subr.mxu0 0.0
        %3033 = vmatpush1.msra.mxu0 0.0
        %3034 = vmatprep.subr.mxu0 0.0
        %3035 = vmatpush1.msra.mxu0 0.0
        %3036 = vmatprep.subr.mxu0 0.0
        %3037 = vmatpush1.msra.mxu0 0.0
        %3038 = vmatprep.subr.mxu0 0.0
        %3039 = vmatpush1.msra.mxu0 0.0
        %3040 = vmatprep.subr.mxu0 0.0
        %3041 = vmatpush1.msra.mxu0 0.0
        %3042 = vmatprep.subr.mxu0 0.0
        %3043 = vmatpush1.msra.mxu0 0.0
        %3044 = vmatprep.subr.mxu0 0.0
        %3045 = vmatpush1.msra.mxu0 0.0
        %3046 = vmatprep.subr.mxu0 0.0
        %3047 = vmatpush1.msra.mxu0 0.0
        %3048 = vmatprep.subr.mxu0 0.0
        %3049 = vmatpush1.msra.mxu0 0.0
        %3050 = vmatprep.subr.mxu0 0.0
        %3051 = vmatpush1.msra.mxu0 0.0
        %3052 = vmatprep.subr.mxu0 0.0
        %3053 = vmatpush1.msra.mxu0 0.0
        %3054 = vmatprep.subr.mxu0 0.0
        %3055 = vmatpush1.msra.mxu0 0.0
        %3056 = vmatprep.subr.mxu0 0.0
        %3057 = vmatpush1.msra.mxu0 0.0
        %3058 = vmatprep.subr.mxu0 0.0
        %3059 = vmatpush1.msra.mxu0 0.0
        %3060 = vmatprep.subr.mxu0 0.0
        %3061 = vmatpush1.msra.mxu0 0.0
        %3062 = vmatprep.mubr.f32.mxu0 0.0
        %3063 = vmatmul.mubr.f32.gmra.mrb[0].mxu0 %v2993
        %v3064 = vpop.f32.mrb[0].mxu0
        %v3065 = vadd.f32 0.0, %v3064
        %v3066 = vpop.f32.mrb[0].mxu0
        %3067 = vmatprep.mubr.f32.mxu0 0.0
        %3068 = vmatmul.mubr.f32.gmra.mrb[0].mxu0 %v2996
        %v3069 = vpop.f32.mrb[0].mxu0
        %v3070 = vadd.f32 0.0, %v3069
        %v3071 = vpop.f32.mrb[0].mxu0
        %3072 = vdwg.mxu0
        %v3073 = vpack.c.bf16 %v3070, %v3065
        %3075 = vrot.lane.b32.xlu0 %v3073, 32
        %v3076 = vpop.permute.xlu0 %3075
        %3078 = vst.msk [vmem:[#allocation2] sm:$0xff] %vm1204, %v3076
        %3079 = vrot.lane.b32.xlu0 %v2671, 64
        %v3080 = vpop.permute.xlu0 %3079
        %3081 = vrot.lane.b32.xlu0 %v2672, 64
        %v3082 = vpop.permute.xlu0 %3081
        %3083 = vrot.lane.b32.xlu0 %v2677, 64
        %v3084 = vpop.permute.xlu0 %3083
        %3085 = vrot.lane.b32.xlu0 %v2678, 64
        %v3086 = vpop.permute.xlu0 %3085
        %v3087 = vsel %vm803, %v3080, 0
        %v3089 = vsel %vm803, %v3082, 0
        %v3091 = vsel %vm803, %v3084, 0
        %v3093 = vsel %vm803, %v3086, 0
        %3095 = vmatprep.subr.mxu0 0.0
        %3096 = vmatpush1.xpose.msra.mxu0 %v3091
        %3097 = vmatprep.subr.mxu0 0.0
        %3098 = vmatpush1.xpose.msra.mxu0 %v3093
        %3099 = vmatprep.subr.mxu0 0.0
        %3100 = vmatpush1.xpose.msra.mxu0 0.0
        %3101 = vmatprep.subr.mxu0 0.0
        %3102 = vmatpush1.xpose.msra.mxu0 0.0
        %3103 = vmatprep.subr.mxu0 0.0
        %3104 = vmatpush1.xpose.msra.mxu0 0.0
        %3105 = vmatprep.subr.mxu0 0.0
        %3106 = vmatpush1.xpose.msra.mxu0 0.0
        %3107 = vmatprep.subr.mxu0 0.0
        %3108 = vmatpush1.xpose.msra.mxu0 0.0
        %3109 = vmatprep.subr.mxu0 0.0
        %3110 = vmatpush1.xpose.msra.mxu0 0.0
        %3111 = vmatprep.subr.mxu0 0.0
        %3112 = vmatpush1.xpose.msra.mxu0 0.0
        %3113 = vmatprep.subr.mxu0 0.0
        %3114 = vmatpush1.xpose.msra.mxu0 0.0
        %3115 = vmatprep.subr.mxu0 0.0
        %3116 = vmatpush1.xpose.msra.mxu0 0.0
        %3117 = vmatprep.subr.mxu0 0.0
        %3118 = vmatpush1.xpose.msra.mxu0 0.0
        %3119 = vmatprep.subr.mxu0 0.0
        %3120 = vmatpush1.xpose.msra.mxu0 0.0
        %3121 = vmatprep.subr.mxu0 0.0
        %3122 = vmatpush1.xpose.msra.mxu0 0.0
        %3123 = vmatprep.subr.mxu0 0.0
        %3124 = vmatpush1.xpose.msra.mxu0 0.0
        %3125 = vmatprep.subr.mxu0 0.0
        %3126 = vmatpush1.xpose.msra.mxu0 0.0
        %3127 = vmatprep.subr.mxu0 0.0
        %3128 = vmatpush1.xpose.msra.mxu0 0.0
        %3129 = vmatprep.subr.mxu0 0.0
        %3130 = vmatpush1.xpose.msra.mxu0 0.0
        %3131 = vmatprep.subr.mxu0 0.0
        %3132 = vmatpush1.xpose.msra.mxu0 0.0
        %3133 = vmatprep.subr.mxu0 0.0
        %3134 = vmatpush1.xpose.msra.mxu0 0.0
        %3135 = vmatprep.subr.mxu0 0.0
        %3136 = vmatpush1.xpose.msra.mxu0 0.0
        %3137 = vmatprep.subr.mxu0 0.0
        %3138 = vmatpush1.xpose.msra.mxu0 0.0
        %3139 = vmatprep.subr.mxu0 0.0
        %3140 = vmatpush1.xpose.msra.mxu0 0.0
        %3141 = vmatprep.subr.mxu0 0.0
        %3142 = vmatpush1.xpose.msra.mxu0 0.0
        %3143 = vmatprep.subr.mxu0 0.0
        %3144 = vmatpush1.xpose.msra.mxu0 0.0
        %3145 = vmatprep.subr.mxu0 0.0
        %3146 = vmatpush1.xpose.msra.mxu0 0.0
        %3147 = vmatprep.subr.mxu0 0.0
        %3148 = vmatpush1.xpose.msra.mxu0 0.0
        %3149 = vmatprep.subr.mxu0 0.0
        %3150 = vmatpush1.xpose.msra.mxu0 0.0
        %3151 = vmatprep.subr.mxu0 0.0
        %3152 = vmatpush1.xpose.msra.mxu0 0.0
        %3153 = vmatprep.subr.mxu0 0.0
        %3154 = vmatpush1.xpose.msra.mxu0 0.0
        %3155 = vmatprep.subr.mxu0 0.0
        %3156 = vmatpush1.xpose.msra.mxu0 0.0
        %3157 = vmatprep.subr.mxu0 0.0
        %3158 = vmatpush1.xpose.msra.mxu0 0.0
        %3159 = vmatprep.mubr.f32.mxu0 0.0
        %3160 = vmatmul.mubr.f32.gmra.mrb[0].mxu0 %v3087
        %v3161 = vpop.f32.mrb[0].mxu0
        %v3162 = vadd.f32 %v364, %v3161
        %v3163 = vpop.f32.mrb[0].mxu0
        %3164 = vmatprep.mubr.f32.mxu0 0.0
        %3165 = vmatmul.mubr.f32.gmra.mrb[0].mxu0 %v3089
        %v3166 = vpop.f32.mrb[0].mxu0
        %v3167 = vadd.f32 %v365, %v3166
        %v3168 = vpop.f32.mrb[0].mxu0
        %3169 = vdwg.mxu0
        %v3170 = vsel %vm891, %v3162, -inf
        %3171 = vmax.xlane.f32.xlu0 %v3170
        %v3172 = vpop.xlane.xlu0 %3171
        %v3173 = vsel %vm891, %v3167, -inf
        %3174 = vmax.xlane.f32.xlu0 %v3173
        %v3175 = vpop.xlane.xlu0 %3174
        %v3176 = vsub.f32 %v3162, %v3172
        %v3177 = vsub.f32 %v3167, %v3175
        %v3178 = vmul.f32 %v3176, 1.442695
        %v3179 = vpow.pop %v3178
        %v3180 = vmul.f32 %v3177, 1.442695
        %v3181 = vpow.pop %v3180
        %v3182 = vsel %vm891, %v3179, 0.0
        %3183 = vadd.xlane.f32.xlu0 %v3182
        %v3184 = vpop.xlane.xlu0 %3183
        %v3185 = vsel %vm891, %v3181, 0.0
        %3186 = vadd.xlane.f32.xlu0 %v3185
        %v3187 = vpop.xlane.xlu0 %3186
        %v3188 = vrcp.pop %v3184
        %v3189 = vrcp.pop %v3187
        %v3190 = vmul.f32 %v3179, %v3188
        %v3191 = vmul.f32 %v3181, %v3189
        %3192 = vrot.lane.b32.xlu0 %v2661, 64
        %v3193 = vpop.permute.xlu0 %3192
        %3194 = vrot.lane.b32.xlu0 %v2664, 64
        %v3195 = vpop.permute.xlu0 %3194
        %v3199 = vsel %vm891, %v3190, 0
        %v3202 = vsel %vm891, %v3191, 0
        %3204 = vmatprep.subr.mxu0 0.0
        %3205 = vmatpush1.msra.mxu0 %v3193
        %3206 = vmatprep.subr.mxu0 0.0
        %3207 = vmatpush1.msra.mxu0 %v3195
        %3208 = vmatprep.subr.mxu0 0.0
        %3209 = vmatpush1.msra.mxu0 0.0
        %3210 = vmatprep.subr.mxu0 0.0
        %3211 = vmatpush1.msra.mxu0 0.0
        %3212 = vmatprep.subr.mxu0 0.0
        %3213 = vmatpush1.msra.mxu0 0.0
        %3214 = vmatprep.subr.mxu0 0.0
        %3215 = vmatpush1.msra.mxu0 0.0
        %3216 = vmatprep.subr.mxu0 0.0
        %3217 = vmatpush1.msra.mxu0 0.0
        %3218 = vmatprep.subr.mxu0 0.0
        %3219 = vmatpush1.msra.mxu0 0.0
        %3220 = vmatprep.subr.mxu0 0.0
        %3221 = vmatpush1.msra.mxu0 0.0
        %3222 = vmatprep.subr.mxu0 0.0
        %3223 = vmatpush1.msra.mxu0 0.0
        %3224 = vmatprep.subr.mxu0 0.0
        %3225 = vmatpush1.msra.mxu0 0.0
        %3226 = vmatprep.subr.mxu0 0.0
        %3227 = vmatpush1.msra.mxu0 0.0
        %3228 = vmatprep.subr.mxu0 0.0
        %3229 = vmatpush1.msra.mxu0 0.0
        %3230 = vmatprep.subr.mxu0 0.0
        %3231 = vmatpush1.msra.mxu0 0.0
        %3232 = vmatprep.subr.mxu0 0.0
        %3233 = vmatpush1.msra.mxu0 0.0
        %3234 = vmatprep.subr.mxu0 0.0
        %3235 = vmatpush1.msra.mxu0 0.0
        %3236 = vmatprep.subr.mxu0 0.0
        %3237 = vmatpush1.msra.mxu0 0.0
        %3238 = vmatprep.subr.mxu0 0.0
        %3239 = vmatpush1.msra.mxu0 0.0
        %3240 = vmatprep.subr.mxu0 0.0
        %3241 = vmatpush1.msra.mxu0 0.0
        %3242 = vmatprep.subr.mxu0 0.0
        %3243 = vmatpush1.msra.mxu0 0.0
        %3244 = vmatprep.subr.mxu0 0.0
        %3245 = vmatpush1.msra.mxu0 0.0
        %3246 = vmatprep.subr.mxu0 0.0
        %3247 = vmatpush1.msra.mxu0 0.0
        %3248 = vmatprep.subr.mxu0 0.0
        %3249 = vmatpush1.msra.mxu0 0.0
        %3250 = vmatprep.subr.mxu0 0.0
        %3251 = vmatpush1.msra.mxu0 0.0
        %3252 = vmatprep.subr.mxu0 0.0
        %3253 = vmatpush1.msra.mxu0 0.0
        %3254 = vmatprep.subr.mxu0 0.0
        %3255 = vmatpush1.msra.mxu0 0.0
        %3256 = vmatprep.subr.mxu0 0.0
        %3257 = vmatpush1.msra.mxu0 0.0
        %3258 = vmatprep.subr.mxu0 0.0
        %3259 = vmatpush1.msra.mxu0 0.0
        %3260 = vmatprep.subr.mxu0 0.0
        %3261 = vmatpush1.msra.mxu0 0.0
        %3262 = vmatprep.subr.mxu0 0.0
        %3263 = vmatpush1.msra.mxu0 0.0
        %3264 = vmatprep.subr.mxu0 0.0
        %3265 = vmatpush1.msra.mxu0 0.0
        %3266 = vmatprep.subr.mxu0 0.0
        %3267 = vmatpush1.msra.mxu0 0.0
        %3268 = vmatprep.mubr.f32.mxu0 0.0
        %3269 = vmatmul.mubr.f32.gmra.mrb[0].mxu0 %v3199
        %v3270 = vpop.f32.mrb[0].mxu0
        %v3271 = vadd.f32 0.0, %v3270
        %v3272 = vpop.f32.mrb[0].mxu0
        %3273 = vmatprep.mubr.f32.mxu0 0.0
        %3274 = vmatmul.mubr.f32.gmra.mrb[0].mxu0 %v3202
        %v3275 = vpop.f32.mrb[0].mxu0
        %v3276 = vadd.f32 0.0, %v3275
        %v3277 = vpop.f32.mrb[0].mxu0
        %3278 = vdwg.mxu0
        %v3279 = vpack.c.bf16 %v3276, %v3271
        %3281 = vrot.lane.b32.xlu0 %v3279, 64
        %v3282 = vpop.permute.xlu0 %3281
        %3284 = vst.msk [vmem:[#allocation2] sm:$0xff] %vm1411, %v3282
        %3285 = vrot.lane.b32.xlu0 %v2671, 32
        %v3286 = vpop.permute.xlu0 %3285
        %3287 = vrot.lane.b32.xlu0 %v2672, 32
        %v3288 = vpop.permute.xlu0 %3287
        %3289 = vrot.lane.b32.xlu0 %v2677, 32
        %v3290 = vpop.permute.xlu0 %3289
        %3291 = vrot.lane.b32.xlu0 %v2678, 32
        %v3292 = vpop.permute.xlu0 %3291
        %v3293 = vsel %vm803, %v3286, 0
        %v3295 = vsel %vm803, %v3288, 0
        %v3297 = vsel %vm803, %v3290, 0
        %v3299 = vsel %vm803, %v3292, 0
        %3301 = vmatprep.subr.mxu0 0.0
        %3302 = vmatpush1.xpose.msra.mxu0 %v3297
        %3303 = vmatprep.subr.mxu0 0.0
        %3304 = vmatpush1.xpose.msra.mxu0 %v3299
        %3305 = vmatprep.subr.mxu0 0.0
        %3306 = vmatpush1.xpose.msra.mxu0 0.0
        %3307 = vmatprep.subr.mxu0 0.0
        %3308 = vmatpush1.xpose.msra.mxu0 0.0
        %3309 = vmatprep.subr.mxu0 0.0
        %3310 = vmatpush1.xpose.msra.mxu0 0.0
        %3311 = vmatprep.subr.mxu0 0.0
        %3312 = vmatpush1.xpose.msra.mxu0 0.0
        %3313 = vmatprep.subr.mxu0 0.0
        %3314 = vmatpush1.xpose.msra.mxu0 0.0
        %3315 = vmatprep.subr.mxu0 0.0
        %3316 = vmatpush1.xpose.msra.mxu0 0.0
        %3317 = vmatprep.subr.mxu0 0.0
        %3318 = vmatpush1.xpose.msra.mxu0 0.0
        %3319 = vmatprep.subr.mxu0 0.0
        %3320 = vmatpush1.xpose.msra.mxu0 0.0
        %3321 = vmatprep.subr.mxu0 0.0
        %3322 = vmatpush1.xpose.msra.mxu0 0.0
        %3323 = vmatprep.subr.mxu0 0.0
        %3324 = vmatpush1.xpose.msra.mxu0 0.0
        %3325 = vmatprep.subr.mxu0 0.0
        %3326 = vmatpush1.xpose.msra.mxu0 0.0
        %3327 = vmatprep.subr.mxu0 0.0
        %3328 = vmatpush1.xpose.msra.mxu0 0.0
        %3329 = vmatprep.subr.mxu0 0.0
        %3330 = vmatpush1.xpose.msra.mxu0 0.0
        %3331 = vmatprep.subr.mxu0 0.0
        %3332 = vmatpush1.xpose.msra.mxu0 0.0
        %3333 = vmatprep.subr.mxu0 0.0
        %3334 = vmatpush1.xpose.msra.mxu0 0.0
        %3335 = vmatprep.subr.mxu0 0.0
        %3336 = vmatpush1.xpose.msra.mxu0 0.0
        %3337 = vmatprep.subr.mxu0 0.0
        %3338 = vmatpush1.xpose.msra.mxu0 0.0
        %3339 = vmatprep.subr.mxu0 0.0
        %3340 = vmatpush1.xpose.msra.mxu0 0.0
        %3341 = vmatprep.subr.mxu0 0.0
        %3342 = vmatpush1.xpose.msra.mxu0 0.0
        %3343 = vmatprep.subr.mxu0 0.0
        %3344 = vmatpush1.xpose.msra.mxu0 0.0
        %3345 = vmatprep.subr.mxu0 0.0
        %3346 = vmatpush1.xpose.msra.mxu0 0.0
        %3347 = vmatprep.subr.mxu0 0.0
        %3348 = vmatpush1.xpose.msra.mxu0 0.0
        %3349 = vmatprep.subr.mxu0 0.0
        %3350 = vmatpush1.xpose.msra.mxu0 0.0
        %3351 = vmatprep.subr.mxu0 0.0
        %3352 = vmatpush1.xpose.msra.mxu0 0.0
        %3353 = vmatprep.subr.mxu0 0.0
        %3354 = vmatpush1.xpose.msra.mxu0 0.0
        %3355 = vmatprep.subr.mxu0 0.0
        %3356 = vmatpush1.xpose.msra.mxu0 0.0
        %3357 = vmatprep.subr.mxu0 0.0
        %3358 = vmatpush1.xpose.msra.mxu0 0.0
        %3359 = vmatprep.subr.mxu0 0.0
        %3360 = vmatpush1.xpose.msra.mxu0 0.0
        %3361 = vmatprep.subr.mxu0 0.0
        %3362 = vmatpush1.xpose.msra.mxu0 0.0
        %3363 = vmatprep.subr.mxu0 0.0
        %3364 = vmatpush1.xpose.msra.mxu0 0.0
        %3365 = vmatprep.mubr.f32.mxu0 0.0
        %3366 = vmatmul.mubr.f32.gmra.mrb[0].mxu0 %v3293
        %v3367 = vpop.f32.mrb[0].mxu0
        %v3368 = vadd.f32 %v364, %v3367
        %v3369 = vpop.f32.mrb[0].mxu0
        %3370 = vmatprep.mubr.f32.mxu0 0.0
        %3371 = vmatmul.mubr.f32.gmra.mrb[0].mxu0 %v3295
        %v3372 = vpop.f32.mrb[0].mxu0
        %v3373 = vadd.f32 %v365, %v3372
        %v3374 = vpop.f32.mrb[0].mxu0
        %3375 = vdwg.mxu0
        %v3376 = vsel %vm891, %v3368, -inf
        %3377 = vmax.xlane.f32.xlu0 %v3376
        %v3378 = vpop.xlane.xlu0 %3377
        %v3379 = vsel %vm891, %v3373, -inf
        %3380 = vmax.xlane.f32.xlu0 %v3379
        %v3381 = vpop.xlane.xlu0 %3380
        %v3382 = vsub.f32 %v3368, %v3378
        %v3383 = vsub.f32 %v3373, %v3381
        %v3384 = vmul.f32 %v3382, 1.442695
        %v3385 = vpow.pop %v3384
        %v3386 = vmul.f32 %v3383, 1.442695
        %v3387 = vpow.pop %v3386
        %v3388 = vsel %vm891, %v3385, 0.0
        %3389 = vadd.xlane.f32.xlu0 %v3388
        %v3390 = vpop.xlane.xlu0 %3389
        %v3391 = vsel %vm891, %v3387, 0.0
        %3392 = vadd.xlane.f32.xlu0 %v3391
        %v3393 = vpop.xlane.xlu0 %3392
        %v3394 = vrcp.pop %v3390
        %v3395 = vrcp.pop %v3393
        %v3396 = vmul.f32 %v3385, %v3394
        %v3397 = vmul.f32 %v3387, %v3395
        %3398 = vrot.lane.b32.xlu0 %v2661, 32
        %v3399 = vpop.permute.xlu0 %3398
        %3400 = vrot.lane.b32.xlu0 %v2664, 32
        %v3401 = vpop.permute.xlu0 %3400
        %v3405 = vsel %vm891, %v3396, 0
        %v3408 = vsel %vm891, %v3397, 0
        %3410 = vmatprep.subr.mxu0 0.0
        %3411 = vmatpush1.msra.mxu0 %v3399
        %3412 = vmatprep.subr.mxu0 0.0
        %3413 = vmatpush1.msra.mxu0 %v3401
        %3414 = vmatprep.subr.mxu0 0.0
        %3415 = vmatpush1.msra.mxu0 0.0
        %3416 = vmatprep.subr.mxu0 0.0
        %3417 = vmatpush1.msra.mxu0 0.0
        %3418 = vmatprep.subr.mxu0 0.0
        %3419 = vmatpush1.msra.mxu0 0.0
        %3420 = vmatprep.subr.mxu0 0.0
        %3421 = vmatpush1.msra.mxu0 0.0
        %3422 = vmatprep.subr.mxu0 0.0
        %3423 = vmatpush1.msra.mxu0 0.0
        %3424 = vmatprep.subr.mxu0 0.0
        %3425 = vmatpush1.msra.mxu0 0.0
        %3426 = vmatprep.subr.mxu0 0.0
        %3427 = vmatpush1.msra.mxu0 0.0
        %3428 = vmatprep.subr.mxu0 0.0
        %3429 = vmatpush1.msra.mxu0 0.0
        %3430 = vmatprep.subr.mxu0 0.0
        %3431 = vmatpush1.msra.mxu0 0.0
        %3432 = vmatprep.subr.mxu0 0.0
        %3433 = vmatpush1.msra.mxu0 0.0
        %3434 = vmatprep.subr.mxu0 0.0
        %3435 = vmatpush1.msra.mxu0 0.0
        %3436 = vmatprep.subr.mxu0 0.0
        %3437 = vmatpush1.msra.mxu0 0.0
        %3438 = vmatprep.subr.mxu0 0.0
        %3439 = vmatpush1.msra.mxu0 0.0
        %3440 = vmatprep.subr.mxu0 0.0
        %3441 = vmatpush1.msra.mxu0 0.0
        %3442 = vmatprep.subr.mxu0 0.0
        %3443 = vmatpush1.msra.mxu0 0.0
        %3444 = vmatprep.subr.mxu0 0.0
        %3445 = vmatpush1.msra.mxu0 0.0
        %3446 = vmatprep.subr.mxu0 0.0
        %3447 = vmatpush1.msra.mxu0 0.0
        %3448 = vmatprep.subr.mxu0 0.0
        %3449 = vmatpush1.msra.mxu0 0.0
        %3450 = vmatprep.subr.mxu0 0.0
        %3451 = vmatpush1.msra.mxu0 0.0
        %3452 = vmatprep.subr.mxu0 0.0
        %3453 = vmatpush1.msra.mxu0 0.0
        %3454 = vmatprep.subr.mxu0 0.0
        %3455 = vmatpush1.msra.mxu0 0.0
        %3456 = vmatprep.subr.mxu0 0.0
        %3457 = vmatpush1.msra.mxu0 0.0
        %3458 = vmatprep.subr.mxu0 0.0
        %3459 = vmatpush1.msra.mxu0 0.0
        %3460 = vmatprep.subr.mxu0 0.0
        %3461 = vmatpush1.msra.mxu0 0.0
        %3462 = vmatprep.subr.mxu0 0.0
        %3463 = vmatpush1.msra.mxu0 0.0
        %3464 = vmatprep.subr.mxu0 0.0
        %3465 = vmatpush1.msra.mxu0 0.0
        %3466 = vmatprep.subr.mxu0 0.0
        %3467 = vmatpush1.msra.mxu0 0.0
        %3468 = vmatprep.subr.mxu0 0.0
        %3469 = vmatpush1.msra.mxu0 0.0
        %3470 = vmatprep.subr.mxu0 0.0
        %3471 = vmatpush1.msra.mxu0 0.0
        %3472 = vmatprep.subr.mxu0 0.0
        %3473 = vmatpush1.msra.mxu0 0.0
        %3474 = vmatprep.mubr.f32.mxu0 0.0
        %3475 = vmatmul.mubr.f32.gmra.mrb[0].mxu0 %v3405
        %v3476 = vpop.f32.mrb[0].mxu0
        %v3477 = vadd.f32 0.0, %v3476
        %v3478 = vpop.f32.mrb[0].mxu0
        %3479 = vmatprep.mubr.f32.mxu0 0.0
        %3480 = vmatmul.mubr.f32.gmra.mrb[0].mxu0 %v3408
        %v3481 = vpop.f32.mrb[0].mxu0
        %v3482 = vadd.f32 0.0, %v3481
        %v3483 = vpop.f32.mrb[0].mxu0
        %3484 = vdwg.mxu0
        %v3485 = vpack.c.bf16 %v3482, %v3477
        %3487 = vrot.lane.b32.xlu0 %v3485, 96
        %v3488 = vpop.permute.xlu0 %3487
        %3490 = vst.msk [vmem:[#allocation2] sm:$0xff] %vm1618, %v3488
        %v3491 = vld [vmem:[#allocation2] sm:$0xff]
        %s3492 = scalar_lea.vmem %s6, 64
        %v3493 = vld [vmem:[%s3492] sm:$0xf]
        %v3494 = vld [vmem:[%s3492 + $0x4] sm:$0xf]
        %v3495 = vld [vmem:[%s3492 + $0x8] sm:$0xf]
        %v3496 = vld [vmem:[%s3492 + $0xc] sm:$0xf]
        %v3497 = vld [vmem:[%s3492 + $0x10] sm:$0xf]
        %v3498 = vld [vmem:[%s3492 + $0x14] sm:$0xf]
        %v3499 = vld [vmem:[%s3492 + $0x18] sm:$0xf]
        %v3500 = vld [vmem:[%s3492 + $0x1c] sm:$0xf]
        %v3501 = vld [vmem:[%s3492 + $0x20] sm:$0xf]
        %v3502 = vld [vmem:[%s3492 + $0x24] sm:$0xf]
        %v3503 = vld [vmem:[%s3492 + $0x28] sm:$0xf]
        %v3504 = vld [vmem:[%s3492 + $0x2c] sm:$0xf]
        %v3505 = vld [vmem:[%s3492 + $0x30] sm:$0xf]
        %v3506 = vld [vmem:[%s3492 + $0x34] sm:$0xf]
        %v3507 = vld [vmem:[%s3492 + $0x38] sm:$0xf]
        %v3508 = vld [vmem:[%s3492 + $0x3c] sm:$0xf]
        %v3525 = vunpack.c.l.b16 %v3493
        %v3526 = vunpack.c.l.b16 %v3494
        %v3527 = vunpack.c.l.b16 %v3495
        %v3528 = vunpack.c.l.b16 %v3496
        %v3529 = vunpack.c.l.b16 %v3497
        %v3530 = vunpack.c.l.b16 %v3498
        %v3531 = vunpack.c.l.b16 %v3499
        %v3532 = vunpack.c.l.b16 %v3500
        %v3533 = vunpack.c.l.b16 %v3501
        %v3534 = vunpack.c.l.b16 %v3502
        %v3535 = vunpack.c.l.b16 %v3503
        %v3536 = vunpack.c.l.b16 %v3504
        %v3537 = vunpack.c.l.b16 %v3505
        %v3538 = vunpack.c.l.b16 %v3506
        %v3539 = vunpack.c.l.b16 %v3507
        %v3540 = vunpack.c.l.b16 %v3508
        %v3541 = vpack.c.b16 %v3526, %v3525
        %v3542 = vpack.c.b16 %v3528, %v3527
        %v3543 = vpack.c.b16 %v3530, %v3529
        %v3544 = vpack.c.b16 %v3532, %v3531
        %v3545 = vpack.c.b16 %v3534, %v3533
        %v3546 = vpack.c.b16 %v3536, %v3535
        %v3547 = vpack.c.b16 %v3538, %v3537
        %v3548 = vpack.c.b16 %v3540, %v3539
        %3557 = vmatprep.subr.bf16.mxu0 0
        %3558 = vmatpush1.bf16.msra.mxu0 %v3541
        %3559 = vmatprep.subr.bf16.mxu0 0
        %3560 = vmatpush1.bf16.msra.mxu0 %v3542
        %3561 = vmatprep.subr.bf16.mxu0 0
        %3562 = vmatpush1.bf16.msra.mxu0 %v3543
        %3563 = vmatprep.subr.bf16.mxu0 0
        %3564 = vmatpush1.bf16.msra.mxu0 %v3544
        %3565 = vmatprep.subr.bf16.mxu0 0
        %3566 = vmatpush1.bf16.msra.mxu0 %v3545
        %3567 = vmatprep.subr.bf16.mxu0 0
        %3568 = vmatpush1.bf16.msra.mxu0 %v3546
        %3569 = vmatprep.subr.bf16.mxu0 0
        %3570 = vmatpush1.bf16.msra.mxu0 %v3547
        %3571 = vmatprep.subr.bf16.mxu0 0
        %3572 = vmatpush1.bf16.msra.mxu0 %v3548
        %3573 = vmatprep.subr.bf16.mxu0 0
        %3574 = vmatpush1.bf16.msra.mxu0 0
        %3575 = vmatprep.subr.bf16.mxu0 0
        %3576 = vmatpush1.bf16.msra.mxu0 0
        %3577 = vmatprep.subr.bf16.mxu0 0
        %3578 = vmatpush1.bf16.msra.mxu0 0
        %3579 = vmatprep.subr.bf16.mxu0 0
        %3580 = vmatpush1.bf16.msra.mxu0 0
        %3581 = vmatprep.subr.bf16.mxu0 0
        %3582 = vmatpush1.bf16.msra.mxu0 0
        %3583 = vmatprep.subr.bf16.mxu0 0
        %3584 = vmatpush1.bf16.msra.mxu0 0
        %3585 = vmatprep.subr.bf16.mxu0 0
        %3586 = vmatpush1.bf16.msra.mxu0 0
        %3587 = vmatprep.subr.bf16.mxu0 0
        %3588 = vmatpush1.bf16.msra.mxu0 0
        %3589 = vmatprep.mubr.bf16.mxu0 0
        %3590 = vmatmul.mubr.bf16.gmra.mrb[0].mxu0 %v3491
        %v3591 = vpop.f32.mrb[0].mxu0
        %v3592 = vadd.f32 0.0, %v3591
        %v3593 = vpop.f32.mrb[0].mxu0
        %v3594 = vpop.f32.mrb[0].mxu0
        %v3595 = vadd.f32 0.0, %v3594
        %v3596 = vpop.f32.mrb[0].mxu0
        %3597 = vdwg.mxu0
        %v3598 = vadd.f32 %v2244, %v3592
        %v3599 = vadd.f32 %v2245, %v3595
        %3600 = vadd.xlane.f32.xlu0 %v3598
        %v3601 = vpop.xlane.xlu0 %3600
        %3602 = vadd.xlane.f32.xlu0 %v3599
        %v3603 = vpop.xlane.xlu0 %3602
        %v3604 = vmul.f32 %v3601, %v376
        %v3605 = vmul.f32 %v3603, %v376
        %v3606 = vsub.f32 %v3598, %v3604
        %v3607 = vsub.f32 %v3599, %v3605
        %v3608 = vmul.f32 %v3606, %v3606
        %v3609 = vmul.f32 %v3607, %v3607
        %3610 = vadd.xlane.f32.xlu0 %v3608
        %v3611 = vpop.xlane.xlu0 %3610
        %3612 = vadd.xlane.f32.xlu0 %v3609
        %v3613 = vpop.xlane.xlu0 %3612
        %v3614 = vmul.f32 %v3611, %v376
        %v3615 = vmul.f32 %v3613, %v376
        %v3616 = vadd.f32 %v3614, 1e-05
        %v3617 = vadd.f32 %v3615, 1e-05
        %v3618 = vrsqrt.pop %v3616
        %v3619 = vrsqrt.pop %v3617
        %v3620 = vmul.f32 %v3606, %v3618
        %v3621 = vmul.f32 %v3607, %v3619
        %v3622 = vlaneseq
        %v3623 = vshrl.u32 %v3622, 7
        %v3624 = vsub.s32 2, %v3623
        %v3625 = vrot.slane %v2247, %v3624
        %v3626 = vmul.f32 %v3620, %v3625
        %v3627 = vmul.f32 %v3621, %v3625
        %v3628 = vlaneseq
        %v3629 = vshrl.u32 %v3628, 7
        %v3630 = vsub.s32 3, %v3629
        %v3631 = vrot.slane %v2247, %v3630
        %v3632 = vadd.f32 %v3626, %v3631
        %v3633 = vadd.f32 %v3627, %v3631
        %v3634 = vpack.c.bf16 %v3633, %v3632
        %s3635 = scalar_lea.vmem %s7, 256
        %v3636 = vld [vmem:[%s3635] sm:$0xff]
        %v3637 = vld [vmem:[%s3635 + $0x8] sm:$0xff]
        %v3638 = vld [vmem:[%s3635 + $0x10] sm:$0xff]
        %v3639 = vld [vmem:[%s3635 + $0x18] sm:$0xff]
        %v3640 = vld [vmem:[%s3635 + $0x20] sm:$0xff]
        %v3641 = vld [vmem:[%s3635 + $0x28] sm:$0xff]
        %v3642 = vld [vmem:[%s3635 + $0x30] sm:$0xff]
        %v3643 = vld [vmem:[%s3635 + $0x38] sm:$0xff]
        %v3644 = vld [vmem:[%s3635 + $0x40] sm:$0xff]
        %v3645 = vld [vmem:[%s3635 + $0x48] sm:$0xff]
        %v3646 = vld [vmem:[%s3635 + $0x50] sm:$0xff]
        %v3647 = vld [vmem:[%s3635 + $0x58] sm:$0xff]
        %v3648 = vld [vmem:[%s3635 + $0x60] sm:$0xff]
        %v3649 = vld [vmem:[%s3635 + $0x68] sm:$0xff]
        %v3650 = vld [vmem:[%s3635 + $0x70] sm:$0xff]
        %v3651 = vld [vmem:[%s3635 + $0x78] sm:$0xff]
        %v3652 = vld [vmem:[%s3635 + $0x80] sm:$0xff]
        %v3653 = vld [vmem:[%s3635 + $0x88] sm:$0xff]
        %v3654 = vld [vmem:[%s3635 + $0x90] sm:$0xff]
        %v3655 = vld [vmem:[%s3635 + $0x98] sm:$0xff]
        %v3656 = vld [vmem:[%s3635 + $0xa0] sm:$0xff]
        %v3657 = vld [vmem:[%s3635 + $0xa8] sm:$0xff]
        %v3658 = vld [vmem:[%s3635 + $0xb0] sm:$0xff]
        %v3659 = vld [vmem:[%s3635 + $0xb8] sm:$0xff]
        %v3660 = vld [vmem:[%s3635 + $0xc0] sm:$0xff]
        %v3661 = vld [vmem:[%s3635 + $0xc8] sm:$0xff]
        %v3662 = vld [vmem:[%s3635 + $0xd0] sm:$0xff]
        %v3663 = vld [vmem:[%s3635 + $0xd8] sm:$0xff]
        %v3664 = vld [vmem:[%s3635 + $0xe0] sm:$0xff]
        %v3665 = vld [vmem:[%s3635 + $0xe8] sm:$0xff]
        %v3666 = vld [vmem:[%s3635 + $0xf0] sm:$0xff]
        %v3667 = vld [vmem:[%s3635 + $0xf8] sm:$0xff]
        %v3700 = vunpack.c.l.b16 %v3636
        %v3701 = vunpack.c.h.b16 %v3636
        %v3702 = vunpack.c.l.b16 %v3637
        %v3703 = vunpack.c.h.b16 %v3637
        %v3704 = vunpack.c.l.b16 %v3638
        %v3705 = vunpack.c.h.b16 %v3638
        %v3706 = vunpack.c.l.b16 %v3639
        %v3707 = vunpack.c.h.b16 %v3639
        %v3708 = vunpack.c.l.b16 %v3640
        %v3709 = vunpack.c.h.b16 %v3640
        %v3710 = vunpack.c.l.b16 %v3641
        %v3711 = vunpack.c.h.b16 %v3641
        %v3712 = vunpack.c.l.b16 %v3642
        %v3713 = vunpack.c.h.b16 %v3642
        %v3714 = vunpack.c.l.b16 %v3643
        %v3715 = vunpack.c.h.b16 %v3643
        %v3716 = vunpack.c.l.b16 %v3644
        %v3717 = vunpack.c.h.b16 %v3644
        %v3718 = vunpack.c.l.b16 %v3645
        %v3719 = vunpack.c.h.b16 %v3645
        %v3720 = vunpack.c.l.b16 %v3646
        %v3721 = vunpack.c.h.b16 %v3646
        %v3722 = vunpack.c.l.b16 %v3647
        %v3723 = vunpack.c.h.b16 %v3647
        %v3724 = vunpack.c.l.b16 %v3648
        %v3725 = vunpack.c.h.b16 %v3648
        %v3726 = vunpack.c.l.b16 %v3649
        %v3727 = vunpack.c.h.b16 %v3649
        %v3728 = vunpack.c.l.b16 %v3650
        %v3729 = vunpack.c.h.b16 %v3650
        %v3730 = vunpack.c.l.b16 %v3651
        %v3731 = vunpack.c.h.b16 %v3651
        %v3732 = vunpack.c.l.b16 %v3652
        %v3733 = vunpack.c.h.b16 %v3652
        %v3734 = vunpack.c.l.b16 %v3653
        %v3735 = vunpack.c.h.b16 %v3653
        %v3736 = vunpack.c.l.b16 %v3654
        %v3737 = vunpack.c.h.b16 %v3654
        %v3738 = vunpack.c.l.b16 %v3655
        %v3739 = vunpack.c.h.b16 %v3655
        %v3740 = vunpack.c.l.b16 %v3656
        %v3741 = vunpack.c.h.b16 %v3656
        %v3742 = vunpack.c.l.b16 %v3657
        %v3743 = vunpack.c.h.b16 %v3657
        %v3744 = vunpack.c.l.b16 %v3658
        %v3745 = vunpack.c.h.b16 %v3658
        %v3746 = vunpack.c.l.b16 %v3659
        %v3747 = vunpack.c.h.b16 %v3659
        %v3748 = vunpack.c.l.b16 %v3660
        %v3749 = vunpack.c.h.b16 %v3660
        %v3750 = vunpack.c.l.b16 %v3661
        %v3751 = vunpack.c.h.b16 %v3661
        %v3752 = vunpack.c.l.b16 %v3662
        %v3753 = vunpack.c.h.b16 %v3662
        %v3754 = vunpack.c.l.b16 %v3663
        %v3755 = vunpack.c.h.b16 %v3663
        %v3756 = vunpack.c.l.b16 %v3664
        %v3757 = vunpack.c.h.b16 %v3664
        %v3758 = vunpack.c.l.b16 %v3665
        %v3759 = vunpack.c.h.b16 %v3665
        %v3760 = vunpack.c.l.b16 %v3666
        %v3761 = vunpack.c.h.b16 %v3666
        %v3762 = vunpack.c.l.b16 %v3667
        %v3763 = vunpack.c.h.b16 %v3667
        %v3764 = vpack.c.b16 %v3704, %v3700
        %v3765 = vpack.c.b16 %v3705, %v3701
        %v3766 = vpack.c.b16 %v3706, %v3702
        %v3767 = vpack.c.b16 %v3707, %v3703
        %v3768 = vpack.c.b16 %v3712, %v3708
        %v3769 = vpack.c.b16 %v3713, %v3709
        %v3770 = vpack.c.b16 %v3714, %v3710
        %v3771 = vpack.c.b16 %v3715, %v3711
        %v3772 = vpack.c.b16 %v3720, %v3716
        %v3773 = vpack.c.b16 %v3721, %v3717
        %v3774 = vpack.c.b16 %v3722, %v3718
        %v3775 = vpack.c.b16 %v3723, %v3719
        %v3776 = vpack.c.b16 %v3728, %v3724
        %v3777 = vpack.c.b16 %v3729, %v3725
        %v3778 = vpack.c.b16 %v3730, %v3726
        %v3779 = vpack.c.b16 %v3731, %v3727
        %v3780 = vpack.c.b16 %v3736, %v3732
        %v3781 = vpack.c.b16 %v3737, %v3733
        %v3782 = vpack.c.b16 %v3738, %v3734
        %v3783 = vpack.c.b16 %v3739, %v3735
        %v3784 = vpack.c.b16 %v3744, %v3740
        %v3785 = vpack.c.b16 %v3745, %v3741
        %v3786 = vpack.c.b16 %v3746, %v3742
        %v3787 = vpack.c.b16 %v3747, %v3743
        %v3788 = vpack.c.b16 %v3752, %v3748
        %v3789 = vpack.c.b16 %v3753, %v3749
        %v3790 = vpack.c.b16 %v3754, %v3750
        %v3791 = vpack.c.b16 %v3755, %v3751
        %v3792 = vpack.c.b16 %v3760, %v3756
        %v3793 = vpack.c.b16 %v3761, %v3757
        %v3794 = vpack.c.b16 %v3762, %v3758
        %v3795 = vpack.c.b16 %v3763, %v3759
        %3828 = vmatprep.subr.bf16.mxu0 %v3765
        %3829 = vmatpush1.bf16.msra.mxu0 %v3764
        %3830 = vmatprep.subr.bf16.mxu0 %v3769
        %3831 = vmatpush1.bf16.msra.mxu0 %v3768
        %3832 = vmatprep.subr.bf16.mxu0 %v3773
        %3833 = vmatpush1.bf16.msra.mxu0 %v3772
        %3834 = vmatprep.subr.bf16.mxu0 %v3777
        %3835 = vmatpush1.bf16.msra.mxu0 %v3776
        %3836 = vmatprep.subr.bf16.mxu0 %v3781
        %3837 = vmatpush1.bf16.msra.mxu0 %v3780
        %3838 = vmatprep.subr.bf16.mxu0 %v3785
        %3839 = vmatpush1.bf16.msra.mxu0 %v3784
        %3840 = vmatprep.subr.bf16.mxu0 %v3789
        %3841 = vmatpush1.bf16.msra.mxu0 %v3788
        %3842 = vmatprep.subr.bf16.mxu0 %v3793
        %3843 = vmatpush1.bf16.msra.mxu0 %v3792
        %3844 = vmatprep.subr.bf16.mxu0 0
        %3845 = vmatpush1.bf16.msra.mxu0 0
        %3846 = vmatprep.subr.bf16.mxu0 0
        %3847 = vmatpush1.bf16.msra.mxu0 0
        %3848 = vmatprep.subr.bf16.mxu0 0
        %3849 = vmatpush1.bf16.msra.mxu0 0
        %3850 = vmatprep.subr.bf16.mxu0 0
        %3851 = vmatpush1.bf16.msra.mxu0 0
        %3852 = vmatprep.subr.bf16.mxu0 0
        %3853 = vmatpush1.bf16.msra.mxu0 0
        %3854 = vmatprep.subr.bf16.mxu0 0
        %3855 = vmatpush1.bf16.msra.mxu0 0
        %3856 = vmatprep.subr.bf16.mxu0 0
        %3857 = vmatpush1.bf16.msra.mxu0 0
        %3858 = vmatprep.subr.bf16.mxu0 0
        %3859 = vmatpush1.bf16.msra.mxu0 0
        %3860 = vmatprep.mubr.bf16.mxu0 0
        %3861 = vmatmul.mubr.bf16.gmra.mrb[0].mxu0 %v3634
        %v3862 = vpop.f32.mrb[0].mxu0
        %v3863 = vadd.f32 0.0, %v3862
        %v3864 = vpop.f32.mrb[0].mxu0
        %v3865 = vadd.f32 0.0, %v3864
        %v3866 = vpop.f32.mrb[0].mxu0
        %v3867 = vadd.f32 0.0, %v3866
        %v3868 = vpop.f32.mrb[0].mxu0
        %v3869 = vadd.f32 0.0, %v3868
        %3870 = vdwg.mxu0
        %3871 = vmatprep.subr.bf16.mxu0 %v3767
        %3872 = vmatpush1.bf16.msra.mxu0 %v3766
        %3873 = vmatprep.subr.bf16.mxu0 %v3771
        %3874 = vmatpush1.bf16.msra.mxu0 %v3770
        %3875 = vmatprep.subr.bf16.mxu0 %v3775
        %3876 = vmatpush1.bf16.msra.mxu0 %v3774
        %3877 = vmatprep.subr.bf16.mxu0 %v3779
        %3878 = vmatpush1.bf16.msra.mxu0 %v3778
        %3879 = vmatprep.subr.bf16.mxu0 %v3783
        %3880 = vmatpush1.bf16.msra.mxu0 %v3782
        %3881 = vmatprep.subr.bf16.mxu0 %v3787
        %3882 = vmatpush1.bf16.msra.mxu0 %v3786
        %3883 = vmatprep.subr.bf16.mxu0 %v3791
        %3884 = vmatpush1.bf16.msra.mxu0 %v3790
        %3885 = vmatprep.subr.bf16.mxu0 %v3795
        %3886 = vmatpush1.bf16.msra.mxu0 %v3794
        %3887 = vmatprep.subr.bf16.mxu0 0
        %3888 = vmatpush1.bf16.msra.mxu0 0
        %3889 = vmatprep.subr.bf16.mxu0 0
        %3890 = vmatpush1.bf16.msra.mxu0 0
        %3891 = vmatprep.subr.bf16.mxu0 0
        %3892 = vmatpush1.bf16.msra.mxu0 0
        %3893 = vmatprep.subr.bf16.mxu0 0
        %3894 = vmatpush1.bf16.msra.mxu0 0
        %3895 = vmatprep.subr.bf16.mxu0 0
        %3896 = vmatpush1.bf16.msra.mxu0 0
        %3897 = vmatprep.subr.bf16.mxu0 0
        %3898 = vmatpush1.bf16.msra.mxu0 0
        %3899 = vmatprep.subr.bf16.mxu0 0
        %3900 = vmatpush1.bf16.msra.mxu0 0
        %3901 = vmatprep.subr.bf16.mxu0 0
        %3902 = vmatpush1.bf16.msra.mxu0 0
        %3903 = vmatprep.mubr.bf16.mxu0 0
        %3904 = vmatmul.mubr.bf16.gmra.mrb[0].mxu0 %v3634
        %v3905 = vpop.f32.mrb[0].mxu0
        %v3906 = vadd.f32 0.0, %v3905
        %v3907 = vpop.f32.mrb[0].mxu0
        %v3908 = vadd.f32 0.0, %v3907
        %v3909 = vpop.f32.mrb[0].mxu0
        %v3910 = vadd.f32 0.0, %v3909
        %v3911 = vpop.f32.mrb[0].mxu0
        %v3912 = vadd.f32 0.0, %v3911
        %3913 = vdwg.mxu0
        %v3914 = vxor.u32 %v3863, 2147483648
        %v3915 = vxor.u32 %v3865, 2147483648
        %v3916 = vxor.u32 %v3867, 2147483648
        %v3917 = vxor.u32 %v3869, 2147483648
        %v3918 = vmul.f32 %v3914, 1.442695
        %v3919 = vpow.pop %v3918
        %v3920 = vmul.f32 %v3915, 1.442695
        %v3921 = vpow.pop %v3920
        %v3922 = vmul.f32 %v3916, 1.442695
        %v3923 = vpow.pop %v3922
        %v3924 = vmul.f32 %v3917, 1.442695
        %v3925 = vpow.pop %v3924
        %v3926 = vadd.f32 %v3919, 1.0
        %v3927 = vadd.f32 %v3921, 1.0
        %v3928 = vadd.f32 %v3923, 1.0
        %v3929 = vadd.f32 %v3925, 1.0
        %v3930 = vrcp.pop %v3926
        %v3931 = vmul.f32 1.0, %v3930
        %v3932 = vrcp.pop %v3927
        %v3933 = vmul.f32 1.0, %v3932
        %v3934 = vrcp.pop %v3928
        %v3935 = vmul.f32 1.0, %v3934
        %v3936 = vrcp.pop %v3929
        %v3937 = vmul.f32 1.0, %v3936
        %v3938 = vmul.f32 %v3863, %v3931
        %v3939 = vmul.f32 %v3865, %v3933
        %v3940 = vmul.f32 %v3867, %v3935
        %v3941 = vmul.f32 %v3869, %v3937
        %v3942 = vmul.f32 %v3938, %v3906
        %v3943 = vmul.f32 %v3939, %v3908
        %v3944 = vmul.f32 %v3940, %v3910
        %v3945 = vmul.f32 %v3941, %v3912
        %v3946 = vpack.c.bf16 %v3944, %v3942
        %v3947 = vpack.c.bf16 %v3945, %v3943
        %s3948 = scalar_lea.vmem %s8, 128
        %v3949 = vld [vmem:[%s3948] sm:$0xf]
        %v3950 = vld [vmem:[%s3948 + $0x4] sm:$0xf]
        %v3951 = vld [vmem:[%s3948 + $0x8] sm:$0xf]
        %v3952 = vld [vmem:[%s3948 + $0xc] sm:$0xf]
        %v3953 = vld [vmem:[%s3948 + $0x10] sm:$0xf]
        %v3954 = vld [vmem:[%s3948 + $0x14] sm:$0xf]
        %v3955 = vld [vmem:[%s3948 + $0x18] sm:$0xf]
        %v3956 = vld [vmem:[%s3948 + $0x1c] sm:$0xf]
        %v3957 = vld [vmem:[%s3948 + $0x20] sm:$0xf]
        %v3958 = vld [vmem:[%s3948 + $0x24] sm:$0xf]
        %v3959 = vld [vmem:[%s3948 + $0x28] sm:$0xf]
        %v3960 = vld [vmem:[%s3948 + $0x2c] sm:$0xf]
        %v3961 = vld [vmem:[%s3948 + $0x30] sm:$0xf]
        %v3962 = vld [vmem:[%s3948 + $0x34] sm:$0xf]
        %v3963 = vld [vmem:[%s3948 + $0x38] sm:$0xf]
        %v3964 = vld [vmem:[%s3948 + $0x3c] sm:$0xf]
        %v3965 = vld [vmem:[%s3948 + $0x40] sm:$0xf]
        %v3966 = vld [vmem:[%s3948 + $0x44] sm:$0xf]
        %v3967 = vld [vmem:[%s3948 + $0x48] sm:$0xf]
        %v3968 = vld [vmem:[%s3948 + $0x4c] sm:$0xf]
        %v3969 = vld [vmem:[%s3948 + $0x50] sm:$0xf]
        %v3970 = vld [vmem:[%s3948 + $0x54] sm:$0xf]
        %v3971 = vld [vmem:[%s3948 + $0x58] sm:$0xf]
        %v3972 = vld [vmem:[%s3948 + $0x5c] sm:$0xf]
        %v3973 = vld [vmem:[%s3948 + $0x60] sm:$0xf]
        %v3974 = vld [vmem:[%s3948 + $0x64] sm:$0xf]
        %v3975 = vld [vmem:[%s3948 + $0x68] sm:$0xf]
        %v3976 = vld [vmem:[%s3948 + $0x6c] sm:$0xf]
        %v3977 = vld [vmem:[%s3948 + $0x70] sm:$0xf]
        %v3978 = vld [vmem:[%s3948 + $0x74] sm:$0xf]
        %v3979 = vld [vmem:[%s3948 + $0x78] sm:$0xf]
        %v3980 = vld [vmem:[%s3948 + $0x7c] sm:$0xf]
        %v4013 = vunpack.c.l.b16 %v3949
        %v4014 = vunpack.c.l.b16 %v3950
        %v4015 = vunpack.c.l.b16 %v3951
        %v4016 = vunpack.c.l.b16 %v3952
        %v4017 = vunpack.c.l.b16 %v3953
        %v4018 = vunpack.c.l.b16 %v3954
        %v4019 = vunpack.c.l.b16 %v3955
        %v4020 = vunpack.c.l.b16 %v3956
        %v4021 = vunpack.c.l.b16 %v3957
        %v4022 = vunpack.c.l.b16 %v3958
        %v4023 = vunpack.c.l.b16 %v3959
        %v4024 = vunpack.c.l.b16 %v3960
        %v4025 = vunpack.c.l.b16 %v3961
        %v4026 = vunpack.c.l.b16 %v3962
        %v4027 = vunpack.c.l.b16 %v3963
        %v4028 = vunpack.c.l.b16 %v3964
        %v4029 = vunpack.c.l.b16 %v3965
        %v4030 = vunpack.c.l.b16 %v3966
        %v4031 = vunpack.c.l.b16 %v3967
        %v4032 = vunpack.c.l.b16 %v3968
        %v4033 = vunpack.c.l.b16 %v3969
        %v4034 = vunpack.c.l.b16 %v3970
        %v4035 = vunpack.c.l.b16 %v3971
        %v4036 = vunpack.c.l.b16 %v3972
        %v4037 = vunpack.c.l.b16 %v3973
        %v4038 = vunpack.c.l.b16 %v3974
        %v4039 = vunpack.c.l.b16 %v3975
        %v4040 = vunpack.c.l.b16 %v3976
        %v4041 = vunpack.c.l.b16 %v3977
        %v4042 = vunpack.c.l.b16 %v3978
        %v4043 = vunpack.c.l.b16 %v3979
        %v4044 = vunpack.c.l.b16 %v3980
        %v4045 = vpack.c.b16 %v4014, %v4013
        %v4046 = vpack.c.b16 %v4016, %v4015
        %v4047 = vpack.c.b16 %v4018, %v4017
        %v4048 = vpack.c.b16 %v4020, %v4019
        %v4049 = vpack.c.b16 %v4022, %v4021
        %v4050 = vpack.c.b16 %v4024, %v4023
        %v4051 = vpack.c.b16 %v4026, %v4025
        %v4052 = vpack.c.b16 %v4028, %v4027
        %v4053 = vpack.c.b16 %v4030, %v4029
        %v4054 = vpack.c.b16 %v4032, %v4031
        %v4055 = vpack.c.b16 %v4034, %v4033
        %v4056 = vpack.c.b16 %v4036, %v4035
        %v4057 = vpack.c.b16 %v4038, %v4037
        %v4058 = vpack.c.b16 %v4040, %v4039
        %v4059 = vpack.c.b16 %v4042, %v4041
        %v4060 = vpack.c.b16 %v4044, %v4043
        %4077 = vmatprep.subr.bf16.mxu0 0
        %4078 = vmatpush1.bf16.msra.mxu0 %v4045
        %4079 = vmatprep.subr.bf16.mxu0 0
        %4080 = vmatpush1.bf16.msra.mxu0 %v4046
        %4081 = vmatprep.subr.bf16.mxu0 0
        %4082 = vmatpush1.bf16.msra.mxu0 %v4047
        %4083 = vmatprep.subr.bf16.mxu0 0
        %4084 = vmatpush1.bf16.msra.mxu0 %v4048
        %4085 = vmatprep.subr.bf16.mxu0 0
        %4086 = vmatpush1.bf16.msra.mxu0 %v4049
        %4087 = vmatprep.subr.bf16.mxu0 0
        %4088 = vmatpush1.bf16.msra.mxu0 %v4050
        %4089 = vmatprep.subr.bf16.mxu0 0
        %4090 = vmatpush1.bf16.msra.mxu0 %v4051
        %4091 = vmatprep.subr.bf16.mxu0 0
        %4092 = vmatpush1.bf16.msra.mxu0 %v4052
        %4093 = vmatprep.subr.bf16.mxu0 0
        %4094 = vmatpush1.bf16.msra.mxu0 %v4053
        %4095 = vmatprep.subr.bf16.mxu0 0
        %4096 = vmatpush1.bf16.msra.mxu0 %v4054
        %4097 = vmatprep.subr.bf16.mxu0 0
        %4098 = vmatpush1.bf16.msra.mxu0 %v4055
        %4099 = vmatprep.subr.bf16.mxu0 0
        %4100 = vmatpush1.bf16.msra.mxu0 %v4056
        %4101 = vmatprep.subr.bf16.mxu0 0
        %4102 = vmatpush1.bf16.msra.mxu0 %v4057
        %4103 = vmatprep.subr.bf16.mxu0 0
        %4104 = vmatpush1.bf16.msra.mxu0 %v4058
        %4105 = vmatprep.subr.bf16.mxu0 0
        %4106 = vmatpush1.bf16.msra.mxu0 %v4059
        %4107 = vmatprep.subr.bf16.mxu0 0
        %4108 = vmatpush1.bf16.msra.mxu0 %v4060
        %4109 = vmatprep.mubr.bf16.mxu0 %v3947
        %4110 = vmatmul.mubr.bf16.gmra.mrb[0].mxu0 %v3946
        %v4111 = vpop.f32.mrb[0].mxu0
        %v4112 = vadd.f32 0.0, %v4111
        %v4113 = vpop.f32.mrb[0].mxu0
        %v4114 = vpop.f32.mrb[0].mxu0
        %v4115 = vadd.f32 0.0, %v4114
        %v4116 = vpop.f32.mrb[0].mxu0
        %4117 = vdwg.mxu0
        %v4118 = vadd.f32 %v3598, %v4112
        %v4119 = vadd.f32 %v3599, %v4115
        %v4120 = vld [vmem:[%s4] sm:$0x3]
        %4121 = vadd.xlane.f32.xlu0 %v4118
        %v4122 = vpop.xlane.xlu0 %4121
        %4123 = vadd.xlane.f32.xlu0 %v4119
        %v4124 = vpop.xlane.xlu0 %4123
        %v4125 = vmul.f32 %v4122, %v376
        %v4126 = vmul.f32 %v4124, %v376
        %v4127 = vsub.f32 %v4118, %v4125
        %v4128 = vsub.f32 %v4119, %v4126
        %v4129 = vmul.f32 %v4127, %v4127
        %v4130 = vmul.f32 %v4128, %v4128
        %4131 = vadd.xlane.f32.xlu0 %v4129
        %v4132 = vpop.xlane.xlu0 %4131
        %4133 = vadd.xlane.f32.xlu0 %v4130
        %v4134 = vpop.xlane.xlu0 %4133
        %v4135 = vmul.f32 %v4132, %v376
        %v4136 = vmul.f32 %v4134, %v376
        %v4137 = vadd.f32 %v4135, 1e-05
        %v4138 = vadd.f32 %v4136, 1e-05
        %v4139 = vrsqrt.pop %v4137
        %v4140 = vrsqrt.pop %v4138
        %v4141 = vmul.f32 %v4127, %v4139
        %v4142 = vmul.f32 %v4128, %v4140
        %v4143 = vlaneseq
        %v4144 = vshrl.u32 %v4143, 7
        %v4145 = vsub.s32 0, %v4144
        %v4146 = vrot.slane %v4120, %v4145
        %v4147 = vmul.f32 %v4141, %v4146
        %v4148 = vmul.f32 %v4142, %v4146
        %v4149 = vlaneseq
        %v4150 = vshrl.u32 %v4149, 7
        %v4151 = vsub.s32 1, %v4150
        %v4152 = vrot.slane %v4120, %v4151
        %v4153 = vadd.f32 %v4147, %v4152
        %v4154 = vadd.f32 %v4148, %v4152
        %v4155 = vpack.c.bf16 %v4154, %v4153
        %v4156 = vld [vmem:[%s9] sm:$0xf]
        %v4157 = vld [vmem:[%s9 + $0x4] sm:$0xf]
        %v4158 = vld [vmem:[%s9 + $0x8] sm:$0xf]
        %v4159 = vld [vmem:[%s9 + $0xc] sm:$0xf]
        %v4160 = vld [vmem:[%s9 + $0x10] sm:$0xf]
        %v4161 = vld [vmem:[%s9 + $0x14] sm:$0xf]
        %v4162 = vld [vmem:[%s9 + $0x18] sm:$0xf]
        %v4163 = vld [vmem:[%s9 + $0x1c] sm:$0xf]
        %v4164 = vld [vmem:[%s9 + $0x20] sm:$0xf]
        %v4165 = vld [vmem:[%s9 + $0x24] sm:$0xf]
        %v4166 = vld [vmem:[%s9 + $0x28] sm:$0xf]
        %v4167 = vld [vmem:[%s9 + $0x2c] sm:$0xf]
        %v4168 = vld [vmem:[%s9 + $0x30] sm:$0xf]
        %v4169 = vld [vmem:[%s9 + $0x34] sm:$0xf]
        %v4170 = vld [vmem:[%s9 + $0x38] sm:$0xf]
        %v4171 = vld [vmem:[%s9 + $0x3c] sm:$0xf]
        %v4188 = vunpack.c.l.b16 %v4156
        %v4189 = vunpack.c.l.b16 %v4157
        %v4190 = vunpack.c.l.b16 %v4158
        %v4191 = vunpack.c.l.b16 %v4159
        %v4192 = vunpack.c.l.b16 %v4160
        %v4193 = vunpack.c.l.b16 %v4161
        %v4194 = vunpack.c.l.b16 %v4162
        %v4195 = vunpack.c.l.b16 %v4163
        %v4196 = vunpack.c.l.b16 %v4164
        %v4197 = vunpack.c.l.b16 %v4165
        %v4198 = vunpack.c.l.b16 %v4166
        %v4199 = vunpack.c.l.b16 %v4167
        %v4200 = vunpack.c.l.b16 %v4168
        %v4201 = vunpack.c.l.b16 %v4169
        %v4202 = vunpack.c.l.b16 %v4170
        %v4203 = vunpack.c.l.b16 %v4171
        %v4204 = vpack.c.b16 %v4189, %v4188
        %v4205 = vpack.c.b16 %v4191, %v4190
        %v4206 = vpack.c.b16 %v4193, %v4192
        %v4207 = vpack.c.b16 %v4195, %v4194
        %v4208 = vpack.c.b16 %v4197, %v4196
        %v4209 = vpack.c.b16 %v4199, %v4198
        %v4210 = vpack.c.b16 %v4201, %v4200
        %v4211 = vpack.c.b16 %v4203, %v4202
        %4220 = vmatprep.subr.bf16.mxu0 0
        %4221 = vmatpush1.bf16.msra.mxu0 %v4204
        %4222 = vmatprep.subr.bf16.mxu0 0
        %4223 = vmatpush1.bf16.msra.mxu0 %v4205
        %4224 = vmatprep.subr.bf16.mxu0 0
        %4225 = vmatpush1.bf16.msra.mxu0 %v4206
        %4226 = vmatprep.subr.bf16.mxu0 0
        %4227 = vmatpush1.bf16.msra.mxu0 %v4207
        %4228 = vmatprep.subr.bf16.mxu0 0
        %4229 = vmatpush1.bf16.msra.mxu0 %v4208
        %4230 = vmatprep.subr.bf16.mxu0 0
        %4231 = vmatpush1.bf16.msra.mxu0 %v4209
        %4232 = vmatprep.subr.bf16.mxu0 0
        %4233 = vmatpush1.bf16.msra.mxu0 %v4210
        %4234 = vmatprep.subr.bf16.mxu0 0
        %4235 = vmatpush1.bf16.msra.mxu0 %v4211
        %4236 = vmatprep.subr.bf16.mxu0 0
        %4237 = vmatpush1.bf16.msra.mxu0 0
        %4238 = vmatprep.subr.bf16.mxu0 0
        %4239 = vmatpush1.bf16.msra.mxu0 0
        %4240 = vmatprep.subr.bf16.mxu0 0
        %4241 = vmatpush1.bf16.msra.mxu0 0
        %4242 = vmatprep.subr.bf16.mxu0 0
        %4243 = vmatpush1.bf16.msra.mxu0 0
        %4244 = vmatprep.subr.bf16.mxu0 0
        %4245 = vmatpush1.bf16.msra.mxu0 0
        %4246 = vmatprep.subr.bf16.mxu0 0
        %4247 = vmatpush1.bf16.msra.mxu0 0
        %4248 = vmatprep.subr.bf16.mxu0 0
        %4249 = vmatpush1.bf16.msra.mxu0 0
        %4250 = vmatprep.subr.bf16.mxu0 0
        %4251 = vmatpush1.bf16.msra.mxu0 0
        %4252 = vmatprep.mubr.bf16.mxu0 0
        %4253 = vmatmul.mubr.bf16.gmra.mrb[0].mxu0 %v4155
        %v4254 = vpop.f32.mrb[0].mxu0
        %v4255 = vadd.f32 0.0, %v4254
        %v4256 = vpop.f32.mrb[0].mxu0
        %v4257 = vpop.f32.mrb[0].mxu0
        %v4258 = vadd.f32 0.0, %v4257
        %v4259 = vpop.f32.mrb[0].mxu0
        %4260 = vdwg.mxu0
        %4261 = vst [vmem:[%s353] sm:$0xff] %v4255
        %4262 = vst [vmem:[%s353 + $0x8] sm:$0xff] %v4258
        %s4263 = sand.u32 %s247, 1
        %s4264 = scalar_lea.sflag [#allocation4], %s4263
        %s4265 = sand.u32 %s247, 1
        %s4266 = smul.addr %s4265, 16
        %s4267 = scalar_lea.vmem [#allocation3], %s4266
        // Predicated region
        $region61: #{_forward.1} parent=59 // pred_check
          %p4268 = pneg %p257
        $region62: #{_forward.1} parent=59 // pred_check_branch
          %4270 = sbr.rel (%p4268) target = $region64
        $region63: #{_forward.1} parent=59 // pred_region
          %s4271 = smul.u32 2, %s24
          %s4273 = ssub.s32 256, 256
          %4274 = vsyncadd %s4264, %s4273
          %s4275 = smul.addr %s4271, 128
          %s4276 = scalar_lea.hbm %s10, %s4275
          %s4277 = sshll.u32 %s4267, 4
          %s4278 = int_to_ptr.vmem [resolvable:$true] %s4277
          %4283 = dma.vmem_to_hbm [thread:$0]  %s4278, 256, %s4276, %s4264, 128, 128, 8
        $region64: #{_forward.1} parent=59 // pred_fallthru
          _
      $region60: #{_forward.1} parent=5 // pred_fallthru
        _
      %p4284 = scmp.le.s32.totalorder 2, %s19
      // Predicated region
      $region65: #{_forward.1} parent=5 // pred_check
        %p4285 = pneg %p4284
      $region66: #{_forward.1} parent=5 // pred_check_branch
        %4287 = sbr.rel (%p4285) target = $region68
      $region67: #{_forward.1} parent=5 // pred_region
        %s4288 = ssub.s32 %s19, 2
        // Predicated region
        $region69: #{_forward.1} parent=67 // pred_check
          %p4289 = pneg %p263
        $region70: #{_forward.1} parent=67 // pred_check_branch
          %4291 = sbr.rel (%p4289) target = $region72
        $region71: #{_forward.1} parent=67 // pred_region
          %s4292 = sand.u32 %s248, 1
          %s4293 = scalar_lea.sflag [#allocation4], %s4292
          %s4294 = sand.u32 %s248, 1
          %s4295 = smul.addr %s4294, 16
          %s4296 = scalar_lea.vmem [#allocation3], %s4295
          %4297 = dma.done %s4293, 256
        $region72: #{_forward.1} parent=67 // pred_fallthru
          _
      $region68: #{_forward.1} parent=5 // pred_fallthru
        _
    $region6: #{_forward.1} parent=1 // loop_footer
      %s23 = sadd.s32 1, %s19
    $region7: #{_forward.1} parent=1 // loop_footer_branch
      %18 = sbr.rel target = $region3
    $region8: #{_forward.1} parent=1 // loop_exit
      _
    %4298 = vsyncpa [#allocation4], 1
    %s4299 = scalar_lea.sflag [#allocation4], 1
    %4300 = vsyncpa %s4299, 1

</llo_original>
